<compile_context>
chip_gen: v7x
topology: tpu7x:2x2x1
jax: 0.10.0
libtpu: 0.0.40
codegen_flags: <defaults>
</compile_context>

<pallas_src>
from functools import partial

import jax
import jax.numpy as jnp
from jax import lax
from jax.experimental import pallas as pl
from jax.experimental.pallas import tpu as pltpu

THRESHOLD = 0.5
NEG_POS_RATIO = 3
ALPHA = 1.0


# --------------------------------------------------------------------------- #
# Fused kernel: per-image matching, target encoding, per-prior CE and
# positive-masked L1 terms.  All per-prior tensors are (P, k): priors on the
# sublane axis, matching the natural layout of pred_scores / pred_locs.
# --------------------------------------------------------------------------- #
def _multibox_kernel(boxes_t_ref,   # (1, 4, NOBJ) f32   xy corners, coord-major
                     boxes_ref,     # (1, NOBJ, 4) f32   xy corners, natural
                     labels_ref,    # (1, 1, NOBJ) int32
                     pxy_ref,       # (P, 4) f32         priors, xy corners
                     pcxcy_ref,     # (P, 4) f32         priors, cxcywh
                     scores_ref,    # (1, P, C) f32      natural layout
                     locs_ref,      # (1, P, 4) f32      natural layout
                     tcls_ref,      # out (1, P, 1) int32  matched class
                     ce_ref,        # out (1, P, 1) f32    per-prior CE loss
                     locabs_ref,    # out (1, P, 1) f32    pos-masked sum |diff|
                     *, n_objects, n_priors, threshold):
    P = n_priors
    NO = n_objects

    # ---- IoU(priors, objects): (P, NOBJ) ---------------------------------- #
    bt = boxes_t_ref[0]                         # (4, NOBJ)
    bxmin = bt[0:1, :]
    bymin = bt[1:2, :]
    bxmax = bt[2:3, :]
    bymax = bt[3:4, :]

    pxmin = pxy_ref[:, 0:1]
    pymin = pxy_ref[:, 1:2]
    pxmax = pxy_ref[:, 2:3]
    pymax = pxy_ref[:, 3:4]

    iw = jnp.maximum(jnp.minimum(pxmax, bxmax) - jnp.maximum(pxmin, bxmin), 0.0)
    ih = jnp.maximum(jnp.minimum(pymax, bymax) - jnp.maximum(pymin, bymin), 0.0)
    inter = iw * ih
    area_b = (bxmax - bxmin) * (bymax - bymin)  # (1, NOBJ)
    area_p = (pxmax - pxmin) * (pymax - pymin)  # (P, 1)
    # exact divide (threshold-sensitive); zero-area boxes are an input-contract
    # violation (would give NaN here).
    overlap = inter / (area_b + area_p - inter)

    obj_iota = lax.broadcasted_iota(jnp.int32, (P, NO), 1)
    prior_iota = lax.broadcasted_iota(jnp.int32, (P, NO), 0)

    # ---- best object per prior (first-occurrence argmax over objects) ----- #
    ovl_for_prior = jnp.max(overlap, axis=1, keepdims=True)                # (P,1)
    obj_for_prior = jnp.min(
        jnp.where(overlap >= ovl_for_prior, obj_iota, NO),
        axis=1, keepdims=True)                                             # (P,1)

    # ---- best prior per object, then force-assign (last object wins) ------ #
    best_ovl_per_obj = jnp.max(overlap, axis=0, keepdims=True)             # (1,NO)
    best_prior_per_obj = jnp.min(
        jnp.where(overlap >= best_ovl_per_obj, prior_iota, P),
        axis=0, keepdims=True)                                             # (1,NO)
    forced_sel = prior_iota == best_prior_per_obj                          # (P,NO)
    forced_obj = jnp.max(jnp.where(forced_sel, obj_iota, -1),
                         axis=1, keepdims=True)                            # (P,1)
    has_force = forced_obj >= 0
    obj_for_prior = jnp.where(has_force, forced_obj, obj_for_prior)
    ovl_for_prior = jnp.where(has_force, 1.0, ovl_for_prior)

    onehot = obj_iota == obj_for_prior                                     # (P,NO)

    # ---- label gather (exact integer one-hot max) + threshold mask -------- #
    lab = jnp.max(jnp.where(onehot, labels_ref[0], 0),
                  axis=1, keepdims=True)                                   # (P,1)
    cls = jnp.where(ovl_for_prior < threshold, 0, lab)                     # (P,1)
    tcls_ref[0] = cls

    # ---- box gather via one-hot matmul on the MXU ------------------------- #
    b = boxes_ref[0]                                                       # (NO,4)
    obj_cxcywh = jnp.concatenate(
        [(b[:, 0:2] + b[:, 2:4]) * 0.5, b[:, 2:4] - b[:, 0:2]], axis=1)    # (NO,4)
    matched = jnp.dot(onehot.astype(jnp.float32), obj_cxcywh,
                      preferred_element_type=jnp.float32)                  # (P,4)

    # ---- encode gcxgcy targets against the priors -------------------------- #
    p_xy = pcxcy_ref[:, 0:2]                                               # (P,2)
    p_wh = pcxcy_ref[:, 2:4]                                               # (P,2)
    g_xy = (matched[:, 0:2] - p_xy) * (10.0 / p_wh)                        # (P,2)
    g_wh = jnp.log(matched[:, 2:4] / p_wh) * 5.0                           # (P,2)

    # ---- positive-masked L1 localization term per prior -------------------- #
    pred = locs_ref[0]                                                     # (P,4)
    l1 = (jnp.sum(jnp.abs(pred[:, 0:2] - g_xy), axis=1, keepdims=True) +
          jnp.sum(jnp.abs(pred[:, 2:4] - g_wh), axis=1, keepdims=True))    # (P,1)
    pos = cls != 0
    locabs_ref[0] = jnp.where(pos, l1, 0.0)

    # ---- per-prior cross-entropy in the natural (P, C) layout -------------- #
    s = scores_ref[0]                                                      # (P,C)
    m = jnp.max(s, axis=1, keepdims=True)
    lse = m + jnp.log(jnp.sum(jnp.exp(s - m), axis=1, keepdims=True))      # (P,1)
    c_iota = lax.broadcasted_iota(jnp.int32, s.shape, 1)
    tgt = jnp.sum(jnp.where(c_iota == cls, s, 0.0), axis=1, keepdims=True) # (P,1)
    ce_ref[0] = lse - tgt


# --------------------------------------------------------------------------- #
# Wrapper
# --------------------------------------------------------------------------- #
def multibox_loss(pred_locs, pred_scores, boxes, labels, priors_cxcy,
                  threshold=THRESHOLD, neg_pos_ratio=NEG_POS_RATIO, alpha=ALPHA):
    B, P, _ = pred_locs.shape
    C = pred_scores.shape[2]
    NOBJ = boxes.shape[1]
    assert priors_cxcy.shape[0] == P

    priors_xy = jnp.concatenate(
        [priors_cxcy[:, :2] - priors_cxcy[:, 2:] / 2.0,
         priors_cxcy[:, :2] + priors_cxcy[:, 2:] / 2.0], axis=1)           # (P,4)

    # Only the tiny per-object tensors are re-laid-out host-side; the large
    # pred_scores / pred_locs go in untouched (no extra HBM pass).
    boxes_t = jnp.transpose(boxes, (0, 2, 1))                              # (B,4,NOBJ)
    labels3 = labels[:, None, :].astype(jnp.int32)                         # (B,1,NOBJ)

    kernel = partial(_multibox_kernel, n_objects=NOBJ, n_priors=P,
                     threshold=threshold)

    grid_spec = pltpu.PrefetchScalarGridSpec(
        num_scalar_prefetch=0,
        grid=(B,),
        in_specs=[
            pl.BlockSpec((1, 4, NOBJ), lambda b: (b, 0, 0)),   # boxes_t
            pl.BlockSpec((1, NOBJ, 4), lambda b: (b, 0, 0)),   # boxes (natural)
            pl.BlockSpec((1, 1, NOBJ), lambda b: (b, 0, 0)),   # labels
            pl.BlockSpec((P, 4), lambda b: (0, 0)),            # priors xy
            pl.BlockSpec((P, 4), lambda b: (0, 0)),            # priors cxcy
            pl.BlockSpec((1, P, C), lambda b: (b, 0, 0)),      # scores (natural)
            pl.BlockSpec((1, P, 4), lambda b: (b, 0, 0)),      # locs (natural)
        ],
        out_specs=[
            pl.BlockSpec((1, P, 1), lambda b: (b, 0, 0)),      # true class
            pl.BlockSpec((1, P, 1), lambda b: (b, 0, 0)),      # per-prior CE
            pl.BlockSpec((1, P, 1), lambda b: (b, 0, 0)),      # pos-masked L1
        ])

    tcls3, ce3, labs3 = pl.pallas_call(
        kernel,
        out_shape=(jax.ShapeDtypeStruct((B, P, 1), jnp.int32),
                   jax.ShapeDtypeStruct((B, P, 1), jnp.float32),
                   jax.ShapeDtypeStruct((B, P, 1), jnp.float32)),
        grid_spec=grid_spec,
        compiler_params=pltpu.CompilerParams(
            dimension_semantics=("parallel",)),   # v7x: shard batch across 2 TCs
    )(boxes_t, boxes, labels3, priors_xy, priors_cxcy, pred_scores, pred_locs)

    true_cls = tcls3[..., 0]                                               # (B,P)
    ce_all = ce3[..., 0]
    loc_abs = labs3[..., 0]

    pos = true_cls != 0
    n_pos = jnp.sum(pos, axis=1)
    n_pos_total = jnp.sum(n_pos).astype(jnp.float32)

    # nn.L1Loss() mean over (n_pos_total, 4) elements.
    loc_loss = jnp.sum(loc_abs) / (n_pos_total * 4.0)

    conf_pos_sum = jnp.sum(jnp.where(pos, ce_all, 0.0))
    # Hard-negative mining: per-row descending sort + rank threshold (XLA glue).
    conf_neg = jnp.where(pos, 0.0, ce_all)
    conf_neg_sorted = -jnp.sort(-conf_neg, axis=1)
    ranks = jnp.arange(P, dtype=jnp.int32)[None, :]
    hard = ranks < (neg_pos_ratio * n_pos)[:, None]
    conf_hard_sum = jnp.sum(jnp.where(hard, conf_neg_sorted, 0.0))

    conf_loss = (conf_hard_sum + conf_pos_sum) / n_pos_total
    return conf_loss + alpha * loc_loss


# --------------------------------------------------------------------------- #
# Pure-JAX reference (mirrors the PyTorch forward exactly)
# --------------------------------------------------------------------------- #
def ref_multibox_loss(pred_locs, pred_scores, boxes, labels, priors_cxcy,
                      threshold=THRESHOLD, neg_pos_ratio=NEG_POS_RATIO,
                      alpha=ALPHA):
    B, P, _ = pred_locs.shape
    priors_xy = jnp.concatenate(
        [priors_cxcy[:, :2] - priors_cxcy[:, 2:] / 2.0,
         priors_cxcy[:, :2] + priors_cxcy[:, 2:] / 2.0], axis=1)
    true_locs, true_cls = [], []
    for i in range(B):
        bx = boxes[i]
        n_obj = bx.shape[0]
        lb = jnp.maximum(bx[:, None, :2], priors_xy[None, :, :2])
        ub = jnp.minimum(bx[:, None, 2:], priors_xy[None, :, 2:])
        wh = jnp.maximum(ub - lb, 0.0)
        inter = wh[..., 0] * wh[..., 1]
        area_b = (bx[:, 2] - bx[:, 0]) * (bx[:, 3] - bx[:, 1])
        area_p = (priors_xy[:, 2] - priors_xy[:, 0]) * (priors_xy[:, 3] - priors_xy[:, 1])
        overlap = inter / (area_b[:, None] + area_p[None, :] - inter)
        ovl_for_prior = overlap.max(axis=0)
        obj_for_prior = overlap.argmax(axis=0)
        prior_for_obj = overlap.argmax(axis=1)
        for j in range(n_obj):
            obj_for_prior = obj_for_prior.at[prior_for_obj[j]].set(j)
            ovl_for_prior = ovl_for_prior.at[prior_for_obj[j]].set(1.0)
        lab = labels[i][obj_for_prior]
        lab = jnp.where(ovl_for_prior < threshold, 0, lab)
        true_cls.append(lab)
        sel = bx[obj_for_prior]
        cxcy = jnp.concatenate([(sel[:, 2:] + sel[:, :2]) / 2.0,
                                sel[:, 2:] - sel[:, :2]], axis=1)
        g = jnp.concatenate(
            [(cxcy[:, :2] - priors_cxcy[:, :2]) / (priors_cxcy[:, 2:] / 10.0),
             jnp.log(cxcy[:, 2:] / priors_cxcy[:, 2:]) * 5.0], axis=1)
        true_locs.append(g)
    true_locs = jnp.stack(true_locs)
    true_cls = jnp.stack(true_cls)

    pos = true_cls != 0
    n_pos = pos.sum(axis=1)
    n_pos_total = n_pos.sum().astype(jnp.float32)

    loc_abs = jnp.abs(pred_locs - true_locs).sum(-1)
    loc_loss = jnp.sum(jnp.where(pos, loc_abs, 0.0)) / (n_pos_total * 4.0)

    lse = jax.nn.logsumexp(pred_scores, axis=-1)
    tgt = jnp.take_along_axis(pred_scores, true_cls[..., None], axis=-1)[..., 0]
    ce = lse - tgt
    conf_pos = jnp.sum(jnp.where(pos, ce, 0.0))
    neg = jnp.where(pos, 0.0, ce)
    neg_sorted = -jnp.sort(-neg, axis=1)
    hard = jnp.arange(P)[None, :] < (neg_pos_ratio * n_pos)[:, None]
    conf_hard = jnp.sum(jnp.where(hard, neg_sorted, 0.0))
    conf_loss = (conf_hard + conf_pos) / n_pos_total
    return conf_loss + alpha * loc_loss


# --------------------------------------------------------------------------- #
if __name__ == "__main__":
    B, P, C, NOBJ = 2, 256, 8, 8

    # deterministic priors: 16x16 grid of centers, fixed 0.15 x 0.15 size
    n_grid = 16
    cs = (jnp.arange(n_grid, dtype=jnp.float32) + 0.5) / n_grid
    cy, cx = jnp.meshgrid(cs, cs, indexing="ij")
    side = jnp.full((n_grid * n_grid,), 0.15, jnp.float32)
    priors_cxcy = jnp.stack([cx.reshape(-1), cy.reshape(-1), side, side], axis=1)

    key = jax.random.PRNGKey(0)
    k1, k2, k3, k4, k5 = jax.random.split(key, 5)
    ctr = jax.random.uniform(k1, (B, NOBJ, 2), minval=0.25, maxval=0.75)
    sz = jax.random.uniform(k2, (B, NOBJ, 2), minval=0.10, maxval=0.30)
    boxes = jnp.concatenate([ctr - sz / 2.0, ctr + sz / 2.0], axis=-1)  # (B,NOBJ,4) xy
    labels = jax.random.randint(k3, (B, NOBJ), 1, C, dtype=jnp.int32)   # non-background
    pred_locs = jax.random.normal(k4, (B, P, 4), jnp.float32)
    pred_scores = jax.random.normal(k5, (B, P, C), jnp.float32)

    loss = jax.jit(multibox_loss)(pred_locs, pred_scores, boxes, labels, priors_cxcy)
    loss = jax.block_until_ready(loss)

    ref = ref_multibox_loss(pred_locs, pred_scores, boxes, labels, priors_cxcy)
    assert jnp.isfinite(loss), "non-finite loss"
    assert jnp.allclose(loss, ref, rtol=1e-3, atol=1e-3), (loss, ref)

    print("KERNEL_OK")
</pallas_src>

<mosaic_0001>
module attributes {stable_mosaic.version = 11 : i64} {
  func.func @_multibox_kernel(%arg0: i32, %arg1: memref<1x4x8xf32, #tpu.memory_space<vmem>>, %arg2: memref<1x8x4xf32, #tpu.memory_space<vmem>>, %arg3: memref<1x1x8xi32, #tpu.memory_space<vmem>>, %arg4: memref<256x4xf32, #tpu.memory_space<vmem>>, %arg5: memref<256x4xf32, #tpu.memory_space<vmem>>, %arg6: memref<1x256x8xf32, #tpu.memory_space<vmem>>, %arg7: memref<1x256x4xf32, #tpu.memory_space<vmem>>, %arg8: memref<1x256x1xi32, #tpu.memory_space<vmem>>, %arg9: memref<1x256x1xf32, #tpu.memory_space<vmem>>, %arg10: memref<1x256x1xf32, #tpu.memory_space<vmem>>) attributes {dimension_semantics = [#tpu.dimension_semantics<parallel>], iteration_bounds = array<i64: 2>, scalar_prefetch = 0 : i64, scratch_operands = 0 : i64, tpu.core_type = #tpu.core_type<tc>, window_params = [{transform_indices = @transform_0, window_bounds = array<i64: 1, 4, 8>}, {transform_indices = @transform_1, window_bounds = array<i64: 1, 8, 4>}, {transform_indices = @transform_2, window_bounds = array<i64: 1, 1, 8>}, {pipeline_mode = #tpu.pipeline_mode<synchronous>, transform_indices = @transform_3, window_bounds = array<i64: 256, 4>}, {pipeline_mode = #tpu.pipeline_mode<synchronous>, transform_indices = @transform_4, window_bounds = array<i64: 256, 4>}, {transform_indices = @transform_5, window_bounds = array<i64: 1, 256, 8>}, {transform_indices = @transform_6, window_bounds = array<i64: 1, 256, 4>}, {transform_indices = @transform_7, window_bounds = array<i64: 1, 256, 1>}, {transform_indices = @transform_8, window_bounds = array<i64: 1, 256, 1>}, {transform_indices = @transform_9, window_bounds = array<i64: 1, 256, 1>}]} {
    %c0 = arith.constant 0 : index
    %c0_0 = arith.constant 0 : index
    %c0_1 = arith.constant 0 : index
    %0 = vector.load %arg1[%c0, %c0_0, %c0_1] : memref<1x4x8xf32, #tpu.memory_space<vmem>>, vector<1x4x8xf32>
    %1 = vector.shape_cast %0 : vector<1x4x8xf32> to vector<4x8xf32>
    %2 = vector.extract_strided_slice %1 {offsets = [0, 0], sizes = [1, 8], strides = [1, 1]} : vector<4x8xf32> to vector<1x8xf32>
    %3 = vector.extract_strided_slice %1 {offsets = [1, 0], sizes = [1, 8], strides = [1, 1]} : vector<4x8xf32> to vector<1x8xf32>
    %4 = vector.extract_strided_slice %1 {offsets = [2, 0], sizes = [1, 8], strides = [1, 1]} : vector<4x8xf32> to vector<1x8xf32>
    %5 = vector.extract_strided_slice %1 {offsets = [3, 0], sizes = [1, 8], strides = [1, 1]} : vector<4x8xf32> to vector<1x8xf32>
    %c0_2 = arith.constant 0 : index
    %c0_3 = arith.constant 0 : index
    %6 = vector.load %arg4[%c0_2, %c0_3] : memref<256x4xf32, #tpu.memory_space<vmem>>, vector<256x1xf32>
    %c0_4 = arith.constant 0 : index
    %c1 = arith.constant 1 : index
    %7 = vector.load %arg4[%c0_4, %c1] : memref<256x4xf32, #tpu.memory_space<vmem>>, vector<256x1xf32>
    %c0_5 = arith.constant 0 : index
    %c2 = arith.constant 2 : index
    %8 = vector.load %arg4[%c0_5, %c2] : memref<256x4xf32, #tpu.memory_space<vmem>>, vector<256x1xf32>
    %c0_6 = arith.constant 0 : index
    %c3 = arith.constant 3 : index
    %9 = vector.load %arg4[%c0_6, %c3] : memref<256x4xf32, #tpu.memory_space<vmem>>, vector<256x1xf32>
    %10 = vector.broadcast %8 : vector<256x1xf32> to vector<256x8xf32>
    %11 = vector.broadcast %4 : vector<1x8xf32> to vector<256x8xf32>
    %12 = arith.minimumf %10, %11 : vector<256x8xf32>
    %13 = vector.broadcast %6 : vector<256x1xf32> to vector<256x8xf32>
    %14 = vector.broadcast %2 : vector<1x8xf32> to vector<256x8xf32>
    %15 = arith.maximumf %13, %14 : vector<256x8xf32>
    %16 = arith.subf %12, %15 : vector<256x8xf32>
    %cst = arith.constant 0.000000e+00 : f32
    %17 = vector.broadcast %cst : f32 to vector<256x8xf32>
    %18 = arith.maximumf %16, %17 : vector<256x8xf32>
    %19 = vector.broadcast %9 : vector<256x1xf32> to vector<256x8xf32>
    %20 = vector.broadcast %5 : vector<1x8xf32> to vector<256x8xf32>
    %21 = arith.minimumf %19, %20 : vector<256x8xf32>
    %22 = vector.broadcast %7 : vector<256x1xf32> to vector<256x8xf32>
    %23 = vector.broadcast %3 : vector<1x8xf32> to vector<256x8xf32>
    %24 = arith.maximumf %22, %23 : vector<256x8xf32>
    %25 = arith.subf %21, %24 : vector<256x8xf32>
    %cst_7 = arith.constant 0.000000e+00 : f32
    %26 = vector.broadcast %cst_7 : f32 to vector<256x8xf32>
    %27 = arith.maximumf %25, %26 : vector<256x8xf32>
    %28 = arith.mulf %18, %27 : vector<256x8xf32>
    %29 = arith.subf %4, %2 : vector<1x8xf32>
    %30 = arith.subf %5, %3 : vector<1x8xf32>
    %31 = arith.mulf %29, %30 : vector<1x8xf32>
    %32 = arith.subf %8, %6 : vector<256x1xf32>
    %33 = arith.subf %9, %7 : vector<256x1xf32>
    %34 = arith.mulf %32, %33 : vector<256x1xf32>
    %35 = vector.broadcast %31 : vector<1x8xf32> to vector<256x8xf32>
    %36 = vector.broadcast %34 : vector<256x1xf32> to vector<256x8xf32>
    %37 = arith.addf %35, %36 : vector<256x8xf32>
    %38 = arith.subf %37, %28 : vector<256x8xf32>
    %39 = arith.divf %28, %38 : vector<256x8xf32>
    %40 = tpu.iota {dimensions = array<i32: 1>} : vector<256x8xi32>
    %41 = tpu.iota {dimensions = array<i32: 0>} : vector<256x8xi32>
    %cst_8 = arith.constant dense<0xFF800000> : vector<256xf32>
    %42 = vector.multi_reduction <maximumf>, %39, %cst_8 [1] : vector<256x8xf32> to vector<256xf32>
    %43 = vector.shape_cast %42 : vector<256xf32> to vector<256x1xf32>
    %44 = vector.broadcast %43 : vector<256x1xf32> to vector<256x8xf32>
    %45 = arith.cmpf oge, %39, %44 : vector<256x8xf32>
    %c8_i32 = arith.constant 8 : i32
    %46 = vector.broadcast %c8_i32 : i32 to vector<256x8xi32>
    %47 = arith.select %45, %40, %46 : vector<256x8xi1>, vector<256x8xi32>
    %cst_9 = arith.constant dense<2147483647> : vector<256xi32>
    %48 = vector.multi_reduction <minsi>, %47, %cst_9 [1] : vector<256x8xi32> to vector<256xi32>
    %49 = vector.shape_cast %48 : vector<256xi32> to vector<256x1xi32>
    %cst_10 = arith.constant dense<0xFF800000> : vector<8xf32>
    %50 = vector.multi_reduction <maximumf>, %39, %cst_10 [0] : vector<256x8xf32> to vector<8xf32>
    %51 = vector.shape_cast %50 : vector<8xf32> to vector<1x8xf32>
    %52 = vector.broadcast %51 : vector<1x8xf32> to vector<256x8xf32>
    %53 = arith.cmpf oge, %39, %52 : vector<256x8xf32>
    %c256_i32 = arith.constant 256 : i32
    %54 = vector.broadcast %c256_i32 : i32 to vector<256x8xi32>
    %55 = arith.select %53, %41, %54 : vector<256x8xi1>, vector<256x8xi32>
    %cst_11 = arith.constant dense<2147483647> : vector<8xi32>
    %56 = vector.multi_reduction <minsi>, %55, %cst_11 [0] : vector<256x8xi32> to vector<8xi32>
    %57 = vector.shape_cast %56 : vector<8xi32> to vector<1x8xi32>
    %58 = vector.broadcast %57 : vector<1x8xi32> to vector<256x8xi32>
    %59 = arith.cmpi eq, %41, %58 : vector<256x8xi32>
    %c-1_i32 = arith.constant -1 : i32
    %60 = vector.broadcast %c-1_i32 : i32 to vector<256x8xi32>
    %61 = arith.select %59, %40, %60 : vector<256x8xi1>, vector<256x8xi32>
    %cst_12 = arith.constant dense<-2147483648> : vector<256xi32>
    %62 = vector.multi_reduction <maxsi>, %61, %cst_12 [1] : vector<256x8xi32> to vector<256xi32>
    %63 = vector.shape_cast %62 : vector<256xi32> to vector<256x1xi32>
    %c0_i32 = arith.constant 0 : i32
    %64 = vector.broadcast %c0_i32 : i32 to vector<256x1xi32>
    %65 = arith.cmpi sge, %63, %64 : vector<256x1xi32>
    %66 = arith.select %65, %63, %49 : vector<256x1xi1>, vector<256x1xi32>
    %cst_13 = arith.constant 1.000000e+00 : f32
    %67 = vector.broadcast %cst_13 : f32 to vector<256x1xf32>
    %68 = arith.select %65, %67, %43 : vector<256x1xi1>, vector<256x1xf32>
    %69 = vector.broadcast %66 : vector<256x1xi32> to vector<256x8xi32>
    %70 = arith.cmpi eq, %40, %69 : vector<256x8xi32>
    %c0_14 = arith.constant 0 : index
    %c0_15 = arith.constant 0 : index
    %c0_16 = arith.constant 0 : index
    %71 = vector.load %arg3[%c0_14, %c0_15, %c0_16] : memref<1x1x8xi32, #tpu.memory_space<vmem>>, vector<1x1x8xi32>
    %72 = vector.shape_cast %71 : vector<1x1x8xi32> to vector<1x8xi32>
    %c0_i32_17 = arith.constant 0 : i32
    %73 = vector.shape_cast %72 : vector<1x8xi32> to vector<1x8xi32>
    %74 = vector.broadcast %73 : vector<1x8xi32> to vector<256x8xi32>
    %75 = vector.broadcast %c0_i32_17 : i32 to vector<256x8xi32>
    %76 = arith.select %70, %74, %75 : vector<256x8xi1>, vector<256x8xi32>
    %cst_18 = arith.constant dense<-2147483648> : vector<256xi32>
    %77 = vector.multi_reduction <maxsi>, %76, %cst_18 [1] : vector<256x8xi32> to vector<256xi32>
    %78 = vector.shape_cast %77 : vector<256xi32> to vector<256x1xi32>
    %cst_19 = arith.constant 5.000000e-01 : f32
    %79 = vector.broadcast %cst_19 : f32 to vector<256x1xf32>
    %80 = arith.cmpf olt, %68, %79 : vector<256x1xf32>
    %c0_i32_20 = arith.constant 0 : i32
    %81 = vector.broadcast %c0_i32_20 : i32 to vector<256x1xi32>
    %82 = arith.select %80, %81, %78 : vector<256x1xi1>, vector<256x1xi32>
    %c0_21 = arith.constant 0 : index
    %c0_22 = arith.constant 0 : index
    %c0_23 = arith.constant 0 : index
    %83 = vector.load %arg8[%c0_21, %c0_22, %c0_23] : memref<1x256x1xi32, #tpu.memory_space<vmem>>, vector<1x256x1xi32>
    %84 = vector.shape_cast %83 : vector<1x256x1xi32> to vector<256x1xi32>
    %85 = vector.shape_cast %82 : vector<256x1xi32> to vector<1x256x1xi32>
    tpu.vector_store %arg8[%c0_21, %c0_22, %c0_23], %85 {strides = array<i32>} : memref<1x256x1xi32, #tpu.memory_space<vmem>>, vector<1x256x1xi32>,
    %c0_24 = arith.constant 0 : index
    %c0_25 = arith.constant 0 : index
    %c0_26 = arith.constant 0 : index
    %86 = vector.load %arg2[%c0_24, %c0_25, %c0_26] : memref<1x8x4xf32, #tpu.memory_space<vmem>>, vector<1x8x4xf32>
    %87 = vector.shape_cast %86 : vector<1x8x4xf32> to vector<8x4xf32>
    %88 = vector.extract_strided_slice %87 {offsets = [0, 0], sizes = [8, 2], strides = [1, 1]} : vector<8x4xf32> to vector<8x2xf32>
    %89 = vector.extract_strided_slice %87 {offsets = [0, 2], sizes = [8, 2], strides = [1, 1]} : vector<8x4xf32> to vector<8x2xf32>
    %90 = arith.addf %88, %89 : vector<8x2xf32>
    %cst_27 = arith.constant 5.000000e-01 : f32
    %91 = vector.broadcast %cst_27 : f32 to vector<8x2xf32>
    %92 = arith.mulf %90, %91 : vector<8x2xf32>
    %93 = vector.extract_strided_slice %87 {offsets = [0, 2], sizes = [8, 2], strides = [1, 1]} : vector<8x4xf32> to vector<8x2xf32>
    %94 = vector.extract_strided_slice %87 {offsets = [0, 0], sizes = [8, 2], strides = [1, 1]} : vector<8x4xf32> to vector<8x2xf32>
    %95 = arith.subf %93, %94 : vector<8x2xf32>
    %96 = tpu.concatenate %92, %95 in 1 : vector<8x2xf32>, vector<8x2xf32> -> vector<8x4xf32>
    %97 = arith.extui %70 : vector<256x8xi1> to vector<256x8xi32>
    %98 = arith.sitofp %97 : vector<256x8xi32> to vector<256x8xf32>
    %cst_28 = arith.constant dense<0.000000e+00> : vector<256x4xf32>
    %99 = tpu.matmul %98, %96, %cst_28 {dimension_numbers = #tpu.dot_dimension_numbers<[1], [0], [0], [1], [0, 0, 1, 1], [], []>} : vector<256x8xf32>, vector<8x4xf32>, vector<256x4xf32> -> vector<256x4xf32>
    %c0_29 = arith.constant 0 : index
    %c0_30 = arith.constant 0 : index
    %100 = vector.load %arg5[%c0_29, %c0_30] : memref<256x4xf32, #tpu.memory_space<vmem>>, vector<256x2xf32>
    %c0_31 = arith.constant 0 : index
    %c2_32 = arith.constant 2 : index
    %101 = vector.load %arg5[%c0_31, %c2_32] : memref<256x4xf32, #tpu.memory_space<vmem>>, vector<256x2xf32>
    %102 = vector.extract_strided_slice %99 {offsets = [0, 0], sizes = [256, 2], strides = [1, 1]} : vector<256x4xf32> to vector<256x2xf32>
    %103 = arith.subf %102, %100 : vector<256x2xf32>
    %cst_33 = arith.constant 1.000000e+01 : f32
    %104 = vector.broadcast %cst_33 : f32 to vector<256x2xf32>
    %105 = arith.divf %104, %101 : vector<256x2xf32>
    %106 = arith.mulf %103, %105 : vector<256x2xf32>
    %107 = vector.extract_strided_slice %99 {offsets = [0, 2], sizes = [256, 2], strides = [1, 1]} : vector<256x4xf32> to vector<256x2xf32>
    %108 = arith.divf %107, %101 : vector<256x2xf32>
    %109 = math.log %108 : vector<256x2xf32>
    %cst_34 = arith.constant 5.000000e+00 : f32
    %110 = vector.broadcast %cst_34 : f32 to vector<256x2xf32>
    %111 = arith.mulf %109, %110 : vector<256x2xf32>
    %c0_35 = arith.constant 0 : index
    %c0_36 = arith.constant 0 : index
    %c0_37 = arith.constant 0 : index
    %112 = vector.load %arg7[%c0_35, %c0_36, %c0_37] : memref<1x256x4xf32, #tpu.memory_space<vmem>>, vector<1x256x4xf32>
    %113 = vector.shape_cast %112 : vector<1x256x4xf32> to vector<256x4xf32>
    %114 = vector.extract_strided_slice %113 {offsets = [0, 0], sizes = [256, 2], strides = [1, 1]} : vector<256x4xf32> to vector<256x2xf32>
    %115 = arith.subf %114, %106 : vector<256x2xf32>
    %116 = math.absf %115 : vector<256x2xf32>
    %cst_38 = arith.constant dense<0.000000e+00> : vector<256xf32>
    %117 = vector.multi_reduction <add>, %116, %cst_38 [1] : vector<256x2xf32> to vector<256xf32>
    %118 = vector.shape_cast %117 : vector<256xf32> to vector<256x1xf32>
    %119 = vector.extract_strided_slice %113 {offsets = [0, 2], sizes = [256, 2], strides = [1, 1]} : vector<256x4xf32> to vector<256x2xf32>
    %120 = arith.subf %119, %111 : vector<256x2xf32>
    %121 = math.absf %120 : vector<256x2xf32>
    %cst_39 = arith.constant dense<0.000000e+00> : vector<256xf32>
    %122 = vector.multi_reduction <add>, %121, %cst_39 [1] : vector<256x2xf32> to vector<256xf32>
    %123 = vector.shape_cast %122 : vector<256xf32> to vector<256x1xf32>
    %124 = arith.addf %118, %123 : vector<256x1xf32>
    %c0_i32_40 = arith.constant 0 : i32
    %125 = vector.broadcast %c0_i32_40 : i32 to vector<256x1xi32>
    %126 = arith.cmpi ne, %82, %125 : vector<256x1xi32>
    %cst_41 = arith.constant 0.000000e+00 : f32
    %127 = vector.broadcast %cst_41 : f32 to vector<256x1xf32>
    %128 = arith.select %126, %124, %127 : vector<256x1xi1>, vector<256x1xf32>
    %c0_42 = arith.constant 0 : index
    %c0_43 = arith.constant 0 : index
    %c0_44 = arith.constant 0 : index
    %129 = vector.load %arg10[%c0_42, %c0_43, %c0_44] : memref<1x256x1xf32, #tpu.memory_space<vmem>>, vector<1x256x1xf32>
    %130 = vector.shape_cast %129 : vector<1x256x1xf32> to vector<256x1xf32>
    %131 = vector.shape_cast %128 : vector<256x1xf32> to vector<1x256x1xf32>
    tpu.vector_store %arg10[%c0_42, %c0_43, %c0_44], %131 {strides = array<i32>} : memref<1x256x1xf32, #tpu.memory_space<vmem>>, vector<1x256x1xf32>,
    %c0_45 = arith.constant 0 : index
    %c0_46 = arith.constant 0 : index
    %c0_47 = arith.constant 0 : index
    %132 = vector.load %arg6[%c0_45, %c0_46, %c0_47] : memref<1x256x8xf32, #tpu.memory_space<vmem>>, vector<1x256x8xf32>
    %133 = vector.shape_cast %132 : vector<1x256x8xf32> to vector<256x8xf32>
    %cst_48 = arith.constant dense<0xFF800000> : vector<256xf32>
    %134 = vector.multi_reduction <maximumf>, %133, %cst_48 [1] : vector<256x8xf32> to vector<256xf32>
    %135 = vector.shape_cast %134 : vector<256xf32> to vector<256x1xf32>
    %136 = vector.broadcast %135 : vector<256x1xf32> to vector<256x8xf32>
    %137 = arith.subf %133, %136 : vector<256x8xf32>
    %138 = math.exp %137 : vector<256x8xf32>
    %cst_49 = arith.constant dense<0.000000e+00> : vector<256xf32>
    %139 = vector.multi_reduction <add>, %138, %cst_49 [1] : vector<256x8xf32> to vector<256xf32>
    %140 = vector.shape_cast %139 : vector<256xf32> to vector<256x1xf32>
    %141 = math.log %140 : vector<256x1xf32>
    %142 = arith.addf %135, %141 : vector<256x1xf32>
    %143 = tpu.iota {dimensions = array<i32: 1>} : vector<256x8xi32>
    %144 = vector.broadcast %82 : vector<256x1xi32> to vector<256x8xi32>
    %145 = arith.cmpi eq, %143, %144 : vector<256x8xi32>
    %cst_50 = arith.constant 0.000000e+00 : f32
    %146 = vector.broadcast %cst_50 : f32 to vector<256x8xf32>
    %147 = arith.select %145, %133, %146 : vector<256x8xi1>, vector<256x8xf32>
    %cst_51 = arith.constant dense<0.000000e+00> : vector<256xf32>
    %148 = vector.multi_reduction <add>, %147, %cst_51 [1] : vector<256x8xf32> to vector<256xf32>
    %149 = vector.shape_cast %148 : vector<256xf32> to vector<256x1xf32>
    %150 = arith.subf %142, %149 : vector<256x1xf32>
    %c0_52 = arith.constant 0 : index
    %c0_53 = arith.constant 0 : index
    %c0_54 = arith.constant 0 : index
    %151 = vector.load %arg9[%c0_52, %c0_53, %c0_54] : memref<1x256x1xf32, #tpu.memory_space<vmem>>, vector<1x256x1xf32>
    %152 = vector.shape_cast %151 : vector<1x256x1xf32> to vector<256x1xf32>
    %153 = vector.shape_cast %150 : vector<256x1xf32> to vector<1x256x1xf32>
    tpu.vector_store %arg9[%c0_52, %c0_53, %c0_54], %153 {strides = array<i32>} : memref<1x256x1xf32, #tpu.memory_space<vmem>>, vector<1x256x1xf32>,
    return
  }
  func.func @transform_0(%arg0: i32) -> (i32, i32, i32) {
    %c0_i32 = arith.constant 0 : i32
    %c0_i32_0 = arith.constant 0 : i32
    %c0_i32_1 = arith.constant 0 : i32
    return %arg0, %c0_i32, %c0_i32_0 : i32, i32, i32
  }
  func.func @transform_1(%arg0: i32) -> (i32, i32, i32) {
    %c0_i32 = arith.constant 0 : i32
    %c0_i32_0 = arith.constant 0 : i32
    %c0_i32_1 = arith.constant 0 : i32
    return %arg0, %c0_i32, %c0_i32_0 : i32, i32, i32
  }
  func.func @transform_2(%arg0: i32) -> (i32, i32, i32) {
    %c0_i32 = arith.constant 0 : i32
    %c0_i32_0 = arith.constant 0 : i32
    %c0_i32_1 = arith.constant 0 : i32
    return %arg0, %c0_i32, %c0_i32_0 : i32, i32, i32
  }
  func.func @transform_3(%arg0: i32) -> (i32, i32) {
    %c0_i32 = arith.constant 0 : i32
    %c0_i32_0 = arith.constant 0 : i32
    %c0_i32_1 = arith.constant 0 : i32
    return %c0_i32, %c0_i32_0 : i32, i32
  }
  func.func @transform_4(%arg0: i32) -> (i32, i32) {
    %c0_i32 = arith.constant 0 : i32
    %c0_i32_0 = arith.constant 0 : i32
    %c0_i32_1 = arith.constant 0 : i32
    return %c0_i32, %c0_i32_0 : i32, i32
  }
  func.func @transform_5(%arg0: i32) -> (i32, i32, i32) {
    %c0_i32 = arith.constant 0 : i32
    %c0_i32_0 = arith.constant 0 : i32
    %c0_i32_1 = arith.constant 0 : i32
    return %arg0, %c0_i32, %c0_i32_0 : i32, i32, i32
  }
  func.func @transform_6(%arg0: i32) -> (i32, i32, i32) {
    %c0_i32 = arith.constant 0 : i32
    %c0_i32_0 = arith.constant 0 : i32
    %c0_i32_1 = arith.constant 0 : i32
    return %arg0, %c0_i32, %c0_i32_0 : i32, i32, i32
  }
  func.func @transform_7(%arg0: i32) -> (i32, i32, i32) {
    %c0_i32 = arith.constant 0 : i32
    %c0_i32_0 = arith.constant 0 : i32
    %c0_i32_1 = arith.constant 0 : i32
    return %arg0, %c0_i32, %c0_i32_0 : i32, i32, i32
  }
  func.func @transform_8(%arg0: i32) -> (i32, i32, i32) {
    %c0_i32 = arith.constant 0 : i32
    %c0_i32_0 = arith.constant 0 : i32
    %c0_i32_1 = arith.constant 0 : i32
    return %arg0, %c0_i32, %c0_i32_0 : i32, i32, i32
  }
  func.func @transform_9(%arg0: i32) -> (i32, i32, i32) {
    %c0_i32 = arith.constant 0 : i32
    %c0_i32_0 = arith.constant 0 : i32
    %c0_i32_1 = arith.constant 0 : i32
    return %arg0, %c0_i32, %c0_i32_0 : i32, i32, i32
  }
}

</mosaic_0001>

<llo_original>
// kernel: multibox_loss.1
$region0: #{multibox_loss.1}
  #allocation0 [shape = 'u32[]', space=smem, size = 0x4, offset = 0x4, fixed_abs, tag = 'smem constant byte address 0x4 - core index']
  #allocation1 [shape = 'u32[144,128]{1,0:T(1,128)}', space=vmem, size = 0x12000, scoped, tag = 'internal scratch']
  %s0 = inlined_call_operand.vmem [shape: f32[2,4,8], index: 0, kind: input, shape index: {}]
  %s1 = inlined_call_operand.vmem [shape: f32[2,8,4], index: 1, kind: input, shape index: {}]
  %s2 = inlined_call_operand.vmem [shape: s32[2,1,8], index: 2, kind: input, shape index: {}]
  %s3 = inlined_call_operand.vmem [shape: f32[256,4], index: 3, kind: input, shape index: {}]
  %s4 = inlined_call_operand.vmem [shape: f32[256,4], index: 4, kind: input, shape index: {}]
  %s5 = inlined_call_operand.vmem [shape: f32[2,256,8], index: 5, kind: input, shape index: {}]
  %s6 = inlined_call_operand.vmem [shape: f32[2,256,4], index: 6, kind: input, shape index: {}]
  %s7 = inlined_call_operand.vmem [shape: s32[2,256,1], index: 7, kind: output, shape index: {0}]
  %s8 = inlined_call_operand.vmem [shape: f32[2,256,1], index: 8, kind: output, shape index: {1}]
  %s9 = inlined_call_operand.vmem [shape: f32[2,256,1], index: 9, kind: output, shape index: {2}]
  %10 = xla_tuple %s7, %s8, %s9
  %s11 = sld [smem:[#allocation0]]
  $region77: #{multibox_loss.1} parent=0
    _
  %s13 = ssub.s32 1, %s11
  %s14 = scalar_select 0, %s13, %s11
  loop: start=0, step=1, limit=4
  $region2: #{multibox_loss.1} parent=0 // loop_pre_header
    _
  $region3: #{multibox_loss.1} parent=0 // loop_header
    %s16 = sphi 0, %s20
    %p17 = scmp.ge.s32.totalorder %s16, 4
    %s26 = sphi 0, %s28
    %s29 = sphi 0, %s26
    %s30 = sphi 0, %s29
    %s46 = sphi 0, %s30
    %s52 = sphi 0, %s54
    %s55 = sphi 0, %s52
    %s56 = sphi 0, %s55
    %s72 = sphi 0, %s56
    %s78 = sphi 0, %s80
    %s81 = sphi 0, %s78
    %s82 = sphi 0, %s81
    %s98 = sphi 0, %s82
    %s102 = sphi 0, %s102
    %s104 = sphi 0, %s102
    %s105 = sphi 0, %s104
    %s119 = sphi 0, %s105
    %s123 = sphi 0, %s123
    %s125 = sphi 0, %s123
    %s126 = sphi 0, %s125
    %s140 = sphi 0, %s126
    %s146 = sphi 0, %s148
    %s149 = sphi 0, %s146
    %s150 = sphi 0, %s149
    %s166 = sphi 0, %s150
    %s172 = sphi 0, %s174
    %s175 = sphi 0, %s172
    %s176 = sphi 0, %s175
    %s192 = sphi 0, %s176
    %s198 = sphi 0, %s200
    %s201 = sphi 0, %s198
    %s202 = sphi 0, %s201
    %s218 = sphi 0, %s202
    %s224 = sphi 0, %s226
    %s227 = sphi 0, %s224
    %s228 = sphi 0, %s227
    %s244 = sphi 0, %s228
    %s250 = sphi 0, %s252
    %s253 = sphi 0, %s250
    %s254 = sphi 0, %s253
    %s270 = sphi 0, %s254
  $region4: #{multibox_loss.1} parent=0 // loop_header_branch
    %19 = sbr.rel (%p17) target = $region8
  $region5: #{multibox_loss.1} parent=0 // loop_body
    %s21 = ssub.s32 %s16, 1
    %s22 = ssub.s32 %s16, 2
    %s23 = sadd.s32 %s16, 1
    %s24 = ssub.s32 %s16, %s23
    %p25 = scmp.eq.s32.totalorder %s24, 0
    %s27 = sadd.s32 %s26, 1
    %s28 = scalar_select %p25, %s26, %s27
    %p31 = pneg %p25
    %p32 = scmp.eq.s32.totalorder %s16, 1
    %p33 = por %p31, %p32
    %p34 = scmp.ne.s32.totalorder %s26, %s29
    %p35 = scmp.eq.s32.totalorder %s16, 0
    %p36 = por %p34, %p35
    %p37 = scmp.ne.s32.totalorder %s26, %s29
    %p38 = scmp.eq.s32.totalorder %s21, 1
    %p39 = por %p37, %p38
    %p40 = scmp.ne.s32.totalorder %s29, %s30
    %p41 = scmp.eq.s32.totalorder %s21, 0
    %p42 = por %p40, %p41
    %p43 = scmp.ne.s32.totalorder %s29, %s30
    %p44 = scmp.eq.s32.totalorder %s22, 1
    %p45 = por %p43, %p44
    %p47 = scmp.ne.s32.totalorder %s30, %s46
    %p48 = scmp.eq.s32.totalorder %s22, 0
    %p49 = por %p47, %p48
    %s50 = ssub.s32 %s16, %s23
    %p51 = scmp.eq.s32.totalorder %s50, 0
    %s53 = sadd.s32 %s52, 1
    %s54 = scalar_select %p51, %s52, %s53
    %p57 = pneg %p51
    %p58 = scmp.eq.s32.totalorder %s16, 1
    %p59 = por %p57, %p58
    %p60 = scmp.ne.s32.totalorder %s52, %s55
    %p61 = scmp.eq.s32.totalorder %s16, 0
    %p62 = por %p60, %p61
    %p63 = scmp.ne.s32.totalorder %s52, %s55
    %p64 = scmp.eq.s32.totalorder %s21, 1
    %p65 = por %p63, %p64
    %p66 = scmp.ne.s32.totalorder %s55, %s56
    %p67 = scmp.eq.s32.totalorder %s21, 0
    %p68 = por %p66, %p67
    %p69 = scmp.ne.s32.totalorder %s55, %s56
    %p70 = scmp.eq.s32.totalorder %s22, 1
    %p71 = por %p69, %p70
    %p73 = scmp.ne.s32.totalorder %s56, %s72
    %p74 = scmp.eq.s32.totalorder %s22, 0
    %p75 = por %p73, %p74
    %s76 = ssub.s32 %s16, %s23
    %p77 = scmp.eq.s32.totalorder %s76, 0
    %s79 = sadd.s32 %s78, 1
    %s80 = scalar_select %p77, %s78, %s79
    %p83 = pneg %p77
    %p84 = scmp.eq.s32.totalorder %s16, 1
    %p85 = por %p83, %p84
    %p86 = scmp.ne.s32.totalorder %s78, %s81
    %p87 = scmp.eq.s32.totalorder %s16, 0
    %p88 = por %p86, %p87
    %p89 = scmp.ne.s32.totalorder %s78, %s81
    %p90 = scmp.eq.s32.totalorder %s21, 1
    %p91 = por %p89, %p90
    %p92 = scmp.ne.s32.totalorder %s81, %s82
    %p93 = scmp.eq.s32.totalorder %s21, 0
    %p94 = por %p92, %p93
    %p95 = scmp.ne.s32.totalorder %s81, %s82
    %p96 = scmp.eq.s32.totalorder %s22, 1
    %p97 = por %p95, %p96
    %p99 = scmp.ne.s32.totalorder %s82, %s98
    %p100 = scmp.eq.s32.totalorder %s22, 0
    %p101 = por %p99, %p100
    %s103 = sadd.s32 %s102, 1
    %p106 = scmp.eq.s32.totalorder %s16, 1
    %p107 = scmp.ne.s32.totalorder %s102, %s104
    %p108 = scmp.eq.s32.totalorder %s16, 0
    %p109 = por %p107, %p108
    %p110 = scmp.ne.s32.totalorder %s102, %s104
    %p111 = scmp.eq.s32.totalorder %s21, 1
    %p112 = por %p110, %p111
    %p113 = scmp.ne.s32.totalorder %s104, %s105
    %p114 = scmp.eq.s32.totalorder %s21, 0
    %p115 = por %p113, %p114
    %p116 = scmp.ne.s32.totalorder %s104, %s105
    %p117 = scmp.eq.s32.totalorder %s22, 1
    %p118 = por %p116, %p117
    %p120 = scmp.ne.s32.totalorder %s105, %s119
    %p121 = scmp.eq.s32.totalorder %s22, 0
    %p122 = por %p120, %p121
    %s124 = sadd.s32 %s123, 1
    %p127 = scmp.eq.s32.totalorder %s16, 1
    %p128 = scmp.ne.s32.totalorder %s123, %s125
    %p129 = scmp.eq.s32.totalorder %s16, 0
    %p130 = por %p128, %p129
    %p131 = scmp.ne.s32.totalorder %s123, %s125
    %p132 = scmp.eq.s32.totalorder %s21, 1
    %p133 = por %p131, %p132
    %p134 = scmp.ne.s32.totalorder %s125, %s126
    %p135 = scmp.eq.s32.totalorder %s21, 0
    %p136 = por %p134, %p135
    %p137 = scmp.ne.s32.totalorder %s125, %s126
    %p138 = scmp.eq.s32.totalorder %s22, 1
    %p139 = por %p137, %p138
    %p141 = scmp.ne.s32.totalorder %s126, %s140
    %p142 = scmp.eq.s32.totalorder %s22, 0
    %p143 = por %p141, %p142
    %s144 = ssub.s32 %s16, %s23
    %p145 = scmp.eq.s32.totalorder %s144, 0
    %s147 = sadd.s32 %s146, 1
    %s148 = scalar_select %p145, %s146, %s147
    %p151 = pneg %p145
    %p152 = scmp.eq.s32.totalorder %s16, 1
    %p153 = por %p151, %p152
    %p154 = scmp.ne.s32.totalorder %s146, %s149
    %p155 = scmp.eq.s32.totalorder %s16, 0
    %p156 = por %p154, %p155
    %p157 = scmp.ne.s32.totalorder %s146, %s149
    %p158 = scmp.eq.s32.totalorder %s21, 1
    %p159 = por %p157, %p158
    %p160 = scmp.ne.s32.totalorder %s149, %s150
    %p161 = scmp.eq.s32.totalorder %s21, 0
    %p162 = por %p160, %p161
    %p163 = scmp.ne.s32.totalorder %s149, %s150
    %p164 = scmp.eq.s32.totalorder %s22, 1
    %p165 = por %p163, %p164
    %p167 = scmp.ne.s32.totalorder %s150, %s166
    %p168 = scmp.eq.s32.totalorder %s22, 0
    %p169 = por %p167, %p168
    %s170 = ssub.s32 %s16, %s23
    %p171 = scmp.eq.s32.totalorder %s170, 0
    %s173 = sadd.s32 %s172, 1
    %s174 = scalar_select %p171, %s172, %s173
    %p177 = pneg %p171
    %p178 = scmp.eq.s32.totalorder %s16, 1
    %p179 = por %p177, %p178
    %p180 = scmp.ne.s32.totalorder %s172, %s175
    %p181 = scmp.eq.s32.totalorder %s16, 0
    %p182 = por %p180, %p181
    %p183 = scmp.ne.s32.totalorder %s172, %s175
    %p184 = scmp.eq.s32.totalorder %s21, 1
    %p185 = por %p183, %p184
    %p186 = scmp.ne.s32.totalorder %s175, %s176
    %p187 = scmp.eq.s32.totalorder %s21, 0
    %p188 = por %p186, %p187
    %p189 = scmp.ne.s32.totalorder %s175, %s176
    %p190 = scmp.eq.s32.totalorder %s22, 1
    %p191 = por %p189, %p190
    %p193 = scmp.ne.s32.totalorder %s176, %s192
    %p194 = scmp.eq.s32.totalorder %s22, 0
    %p195 = por %p193, %p194
    %s196 = ssub.s32 %s16, %s23
    %p197 = scmp.eq.s32.totalorder %s196, 0
    %s199 = sadd.s32 %s198, 1
    %s200 = scalar_select %p197, %s198, %s199
    %p203 = pneg %p197
    %p204 = scmp.eq.s32.totalorder %s16, 1
    %p205 = por %p203, %p204
    %p206 = scmp.ne.s32.totalorder %s198, %s201
    %p207 = scmp.eq.s32.totalorder %s16, 0
    %p208 = por %p206, %p207
    %p209 = scmp.ne.s32.totalorder %s198, %s201
    %p210 = scmp.eq.s32.totalorder %s21, 1
    %p211 = por %p209, %p210
    %p212 = scmp.ne.s32.totalorder %s201, %s202
    %p213 = scmp.eq.s32.totalorder %s21, 0
    %p214 = por %p212, %p213
    %p215 = scmp.ne.s32.totalorder %s201, %s202
    %p216 = scmp.eq.s32.totalorder %s22, 1
    %p217 = por %p215, %p216
    %p219 = scmp.ne.s32.totalorder %s202, %s218
    %p220 = scmp.eq.s32.totalorder %s22, 0
    %p221 = por %p219, %p220
    %s222 = ssub.s32 %s16, %s23
    %p223 = scmp.eq.s32.totalorder %s222, 0
    %s225 = sadd.s32 %s224, 1
    %s226 = scalar_select %p223, %s224, %s225
    %p229 = pneg %p223
    %p230 = scmp.eq.s32.totalorder %s16, 1
    %p231 = por %p229, %p230
    %p232 = scmp.ne.s32.totalorder %s224, %s227
    %p233 = scmp.eq.s32.totalorder %s16, 0
    %p234 = por %p232, %p233
    %p235 = scmp.ne.s32.totalorder %s224, %s227
    %p236 = scmp.eq.s32.totalorder %s21, 1
    %p237 = por %p235, %p236
    %p238 = scmp.ne.s32.totalorder %s227, %s228
    %p239 = scmp.eq.s32.totalorder %s21, 0
    %p240 = por %p238, %p239
    %p241 = scmp.ne.s32.totalorder %s227, %s228
    %p242 = scmp.eq.s32.totalorder %s22, 1
    %p243 = por %p241, %p242
    %p245 = scmp.ne.s32.totalorder %s228, %s244
    %p246 = scmp.eq.s32.totalorder %s22, 0
    %p247 = por %p245, %p246
    %s248 = ssub.s32 %s16, %s23
    %p249 = scmp.eq.s32.totalorder %s248, 0
    %s251 = sadd.s32 %s250, 1
    %s252 = scalar_select %p249, %s250, %s251
    %p255 = pneg %p249
    %p256 = scmp.eq.s32.totalorder %s16, 1
    %p257 = por %p255, %p256
    %p258 = scmp.ne.s32.totalorder %s250, %s253
    %p259 = scmp.eq.s32.totalorder %s16, 0
    %p260 = por %p258, %p259
    %p261 = scmp.ne.s32.totalorder %s250, %s253
    %p262 = scmp.eq.s32.totalorder %s21, 1
    %p263 = por %p261, %p262
    %p264 = scmp.ne.s32.totalorder %s253, %s254
    %p265 = scmp.eq.s32.totalorder %s21, 0
    %p266 = por %p264, %p265
    %p267 = scmp.ne.s32.totalorder %s253, %s254
    %p268 = scmp.eq.s32.totalorder %s22, 1
    %p269 = por %p267, %p268
    %p271 = scmp.ne.s32.totalorder %s254, %s270
    %p272 = scmp.eq.s32.totalorder %s22, 0
    %p273 = por %p271, %p272
    %p274 = scmp.le.s32.totalorder 1, %s16
    %p275 = scmp.lt.s32.totalorder %s16, 3
    %p276 = pnand %p274, %p275
    %p277 = pneg %p276
    // Predicated region
    $region9: #{multibox_loss.1} parent=5 // pred_check
      _
    $region10: #{multibox_loss.1} parent=5 // pred_check_branch
      %279 = sbr.rel (%p276) target = $region12
    $region11: #{multibox_loss.1} parent=5 // pred_region
      %s280 = ssub.s32 %s16, 1
      // Predicated region
      $region13: #{multibox_loss.1} parent=11 // pred_check
        %p281 = pneg %p115
      $region14: #{multibox_loss.1} parent=11 // pred_check_branch
        %283 = sbr.rel (%p281) target = $region16
      $region15: #{multibox_loss.1} parent=11 // pred_region
        _
      $region16: #{multibox_loss.1} parent=11 // pred_fallthru
        _
      // Predicated region
      $region17: #{multibox_loss.1} parent=11 // pred_check
        %p284 = pneg %p136
      $region18: #{multibox_loss.1} parent=11 // pred_check_branch
        %286 = sbr.rel (%p284) target = $region20
      $region19: #{multibox_loss.1} parent=11 // pred_region
        _
      $region20: #{multibox_loss.1} parent=11 // pred_fallthru
        _
    $region12: #{multibox_loss.1} parent=5 // pred_fallthru
      _
    %p287 = scmp.lt.s32.totalorder %s16, 2
    // Predicated region
    $region21: #{multibox_loss.1} parent=5 // pred_check
      %p288 = pneg %p287
    $region22: #{multibox_loss.1} parent=5 // pred_check_branch
      %290 = sbr.rel (%p288) target = $region24
    $region23: #{multibox_loss.1} parent=5 // pred_region
      // Predicated region
      $region25: #{multibox_loss.1} parent=23 // pred_check
        %p291 = pneg %p36
      $region26: #{multibox_loss.1} parent=23 // pred_check_branch
        %293 = sbr.rel (%p291) target = $region28
      $region27: #{multibox_loss.1} parent=23 // pred_region
        %p294 = scmp.lt.s32.totalorder %s16, 1
        %s295 = scalar_select %p294, %s16, 1
        %s296 = smul.addr %s295, 4
        %s297 = scalar_lea.vmem %s0, %s296
      $region28: #{multibox_loss.1} parent=23 // pred_fallthru
        _
      // Predicated region
      $region29: #{multibox_loss.1} parent=23 // pred_check
        %p298 = pneg %p62
      $region30: #{multibox_loss.1} parent=23 // pred_check_branch
        %300 = sbr.rel (%p298) target = $region32
      $region31: #{multibox_loss.1} parent=23 // pred_region
        %p301 = scmp.lt.s32.totalorder %s16, 1
        %s302 = scalar_select %p301, %s16, 1
        %s303 = smul.addr %s302, 8
        %s304 = scalar_lea.vmem %s1, %s303
      $region32: #{multibox_loss.1} parent=23 // pred_fallthru
        _
      // Predicated region
      $region33: #{multibox_loss.1} parent=23 // pred_check
        %p305 = pneg %p88
      $region34: #{multibox_loss.1} parent=23 // pred_check_branch
        %307 = sbr.rel (%p305) target = $region36
      $region35: #{multibox_loss.1} parent=23 // pred_region
        %p308 = scmp.lt.s32.totalorder %s16, 1
        %s309 = scalar_select %p308, %s16, 1
        %s310 = scalar_lea.vmem %s2, %s309
      $region36: #{multibox_loss.1} parent=23 // pred_fallthru
        _
      // Predicated region
      $region37: #{multibox_loss.1} parent=23 // pred_check
        %p311 = pneg %p156
      $region38: #{multibox_loss.1} parent=23 // pred_check_branch
        %313 = sbr.rel (%p311) target = $region40
      $region39: #{multibox_loss.1} parent=23 // pred_region
        %p314 = scmp.lt.s32.totalorder %s16, 1
        %s315 = scalar_select %p314, %s16, 1
        %s316 = smul.addr %s315, 32
        %s317 = smul.addr %s316, 8
        %s318 = scalar_lea.vmem %s5, %s317
      $region40: #{multibox_loss.1} parent=23 // pred_fallthru
        _
      // Predicated region
      $region41: #{multibox_loss.1} parent=23 // pred_check
        %p319 = pneg %p182
      $region42: #{multibox_loss.1} parent=23 // pred_check_branch
        %321 = sbr.rel (%p319) target = $region44
      $region43: #{multibox_loss.1} parent=23 // pred_region
        %p322 = scmp.lt.s32.totalorder %s16, 1
        %s323 = scalar_select %p322, %s16, 1
        %s324 = smul.addr %s323, 32
        %s325 = smul.addr %s324, 8
        %s326 = scalar_lea.vmem %s6, %s325
      $region44: #{multibox_loss.1} parent=23 // pred_fallthru
        _
    $region24: #{multibox_loss.1} parent=5 // pred_fallthru
      _
    %p327 = scmp.le.s32.totalorder 1, %s16
    %p328 = scmp.lt.s32.totalorder %s16, 3
    %p329 = pnand %p327, %p328
    %p330 = pneg %p329
    // Predicated region
    $region45: #{multibox_loss.1} parent=5 // pred_check
      _
    $region46: #{multibox_loss.1} parent=5 // pred_check_branch
      %332 = sbr.rel (%p329) target = $region48
    $region47: #{multibox_loss.1} parent=5 // pred_region
      %s333 = ssub.s32 %s16, 1
      %p334 = scmp.lt.s32.totalorder %s21, 1
      %s335 = scalar_select %p334, %s21, 1
      %s336 = smul.addr %s335, 4
      %s337 = scalar_lea.vmem %s0, %s336
      %p338 = pneg %p42
      %p339 = pneg %p39
      %p340 = scmp.lt.s32.totalorder %s21, 1
      %s341 = scalar_select %p340, %s21, 1
      %s342 = smul.addr %s341, 8
      %s343 = scalar_lea.vmem %s1, %s342
      %p344 = pneg %p68
      %p345 = pneg %p65
      %p346 = scmp.lt.s32.totalorder %s21, 1
      %s347 = scalar_select %p346, %s21, 1
      %s348 = scalar_lea.vmem %s2, %s347
      %p349 = pneg %p94
      %p350 = pneg %p91
      %p351 = pneg %p115
      %p352 = pneg %p112
      %p353 = pneg %p136
      %p354 = pneg %p133
      %p355 = scmp.lt.s32.totalorder %s21, 1
      %s356 = scalar_select %p355, %s21, 1
      %s357 = smul.addr %s356, 32
      %s358 = smul.addr %s357, 8
      %s359 = scalar_lea.vmem %s5, %s358
      %p360 = pneg %p162
      %p361 = pneg %p159
      %p362 = scmp.lt.s32.totalorder %s21, 1
      %s363 = scalar_select %p362, %s21, 1
      %s364 = smul.addr %s363, 32
      %s365 = smul.addr %s364, 8
      %s366 = scalar_lea.vmem %s6, %s365
      %p367 = pneg %p188
      %p368 = pneg %p185
      %p369 = pneg %p214
      %p370 = pneg %p211
      %p371 = scmp.lt.s32.totalorder %s21, 1
      %s372 = scalar_select %p371, %s21, 1
      %s373 = smul.addr %s372, 32
      %s374 = smul.addr %s373, 8
      %s375 = scalar_lea.vmem %s7, %s374
      %p376 = pneg %p240
      %p377 = pneg %p237
      %p378 = scmp.lt.s32.totalorder %s21, 1
      %s379 = scalar_select %p378, %s21, 1
      %s380 = smul.addr %s379, 32
      %s381 = smul.addr %s380, 8
      %s382 = scalar_lea.vmem %s8, %s381
      %p383 = pneg %p266
      %p384 = pneg %p263
      %p385 = scmp.lt.s32.totalorder %s21, 1
      %s386 = scalar_select %p385, %s21, 1
      %s387 = smul.addr %s386, 32
      %s388 = smul.addr %s387, 8
      %s389 = scalar_lea.vmem %s9, %s388
      %p390 = scmp.lt.s32.totalorder %s21, 1
      %s391 = scalar_select %p390, %s21, 1
      %s392 = smul.addr %s391, 4
      %s393 = scalar_lea.vmem %s0, %s392
      %p394 = scmp.lt.s32.totalorder %s21, 1
      %s395 = scalar_select %p394, %s21, 1
      %s396 = smul.addr %s395, 8
      %s397 = scalar_lea.vmem %s1, %s396
      %p398 = scmp.lt.s32.totalorder %s21, 1
      %s399 = scalar_select %p398, %s21, 1
      %s400 = scalar_lea.vmem %s2, %s399
      %p401 = scmp.lt.s32.totalorder %s21, 1
      %s402 = scalar_select %p401, %s21, 1
      %s403 = smul.addr %s402, 32
      %s404 = smul.addr %s403, 8
      %s405 = scalar_lea.vmem %s5, %s404
      %p406 = scmp.lt.s32.totalorder %s21, 1
      %s407 = scalar_select %p406, %s21, 1
      %s408 = smul.addr %s407, 32
      %s409 = smul.addr %s408, 8
      %s410 = scalar_lea.vmem %s6, %s409
      %p411 = scmp.lt.s32.totalorder %s21, 1
      %s412 = scalar_select %p411, %s21, 1
      %s413 = smul.addr %s412, 32
      %s414 = smul.addr %s413, 8
      %s415 = scalar_lea.vmem %s7, %s414
      %p416 = scmp.lt.s32.totalorder %s21, 1
      %s417 = scalar_select %p416, %s21, 1
      %s418 = smul.addr %s417, 32
      %s419 = smul.addr %s418, 8
      %s420 = scalar_lea.vmem %s8, %s419
      %p421 = scmp.lt.s32.totalorder %s21, 1
      %s422 = scalar_select %p421, %s21, 1
      %s423 = smul.addr %s422, 32
      %s424 = smul.addr %s423, 8
      %s425 = scalar_lea.vmem %s9, %s424
      %v426 = vld [vmem:[%s393] sm:$0xf]
      %v427 = vld [vmem:[%s3] sm:$0xff]
      %v428 = vld [vmem:[%s3 + $0x8] sm:$0xff]
      %v429 = vld [vmem:[%s3 + $0x10] sm:$0xff]
      %v430 = vld [vmem:[%s3 + $0x18] sm:$0xff]
      %v431 = vld [vmem:[%s3 + $0x20] sm:$0xff]
      %v432 = vld [vmem:[%s3 + $0x28] sm:$0xff]
      %v433 = vld [vmem:[%s3 + $0x30] sm:$0xff]
      %v434 = vld [vmem:[%s3 + $0x38] sm:$0xff]
      %v435 = vld [vmem:[%s3 + $0x40] sm:$0xff]
      %v436 = vld [vmem:[%s3 + $0x48] sm:$0xff]
      %v437 = vld [vmem:[%s3 + $0x50] sm:$0xff]
      %v438 = vld [vmem:[%s3 + $0x58] sm:$0xff]
      %v439 = vld [vmem:[%s3 + $0x60] sm:$0xff]
      %v440 = vld [vmem:[%s3 + $0x68] sm:$0xff]
      %v441 = vld [vmem:[%s3 + $0x70] sm:$0xff]
      %v442 = vld [vmem:[%s3 + $0x78] sm:$0xff]
      %v443 = vld [vmem:[%s3 + $0x80] sm:$0xff]
      %v444 = vld [vmem:[%s3 + $0x88] sm:$0xff]
      %v445 = vld [vmem:[%s3 + $0x90] sm:$0xff]
      %v446 = vld [vmem:[%s3 + $0x98] sm:$0xff]
      %v447 = vld [vmem:[%s3 + $0xa0] sm:$0xff]
      %v448 = vld [vmem:[%s3 + $0xa8] sm:$0xff]
      %v449 = vld [vmem:[%s3 + $0xb0] sm:$0xff]
      %v450 = vld [vmem:[%s3 + $0xb8] sm:$0xff]
      %v451 = vld [vmem:[%s3 + $0xc0] sm:$0xff]
      %v452 = vld [vmem:[%s3 + $0xc8] sm:$0xff]
      %v453 = vld [vmem:[%s3 + $0xd0] sm:$0xff]
      %v454 = vld [vmem:[%s3 + $0xd8] sm:$0xff]
      %v455 = vld [vmem:[%s3 + $0xe0] sm:$0xff]
      %v456 = vld [vmem:[%s3 + $0xe8] sm:$0xff]
      %v457 = vld [vmem:[%s3 + $0xf0] sm:$0xff]
      %v458 = vld [vmem:[%s3 + $0xf8] sm:$0xff]
      %460 = vset.pattern.permute.xlu0 2
      %461 = vperm.xlu0 %460, %v427
      %v462 = vpop.permute.xlu0 %461
      %465 = vset.pattern.permute.xlu0 2
      %466 = vperm.xlu0 %465, %v428
      %v467 = vpop.permute.xlu0 %466
      %470 = vset.pattern.permute.xlu0 2
      %471 = vperm.xlu0 %470, %v429
      %v472 = vpop.permute.xlu0 %471
      %475 = vset.pattern.permute.xlu0 2
      %476 = vperm.xlu0 %475, %v430
      %v477 = vpop.permute.xlu0 %476
      %480 = vset.pattern.permute.xlu0 2
      %481 = vperm.xlu0 %480, %v431
      %v482 = vpop.permute.xlu0 %481
      %485 = vset.pattern.permute.xlu0 2
      %486 = vperm.xlu0 %485, %v432
      %v487 = vpop.permute.xlu0 %486
      %490 = vset.pattern.permute.xlu0 2
      %491 = vperm.xlu0 %490, %v433
      %v492 = vpop.permute.xlu0 %491
      %495 = vset.pattern.permute.xlu0 2
      %496 = vperm.xlu0 %495, %v434
      %v497 = vpop.permute.xlu0 %496
      %500 = vset.pattern.permute.xlu0 2
      %501 = vperm.xlu0 %500, %v435
      %v502 = vpop.permute.xlu0 %501
      %505 = vset.pattern.permute.xlu0 2
      %506 = vperm.xlu0 %505, %v436
      %v507 = vpop.permute.xlu0 %506
      %510 = vset.pattern.permute.xlu0 2
      %511 = vperm.xlu0 %510, %v437
      %v512 = vpop.permute.xlu0 %511
      %515 = vset.pattern.permute.xlu0 2
      %516 = vperm.xlu0 %515, %v438
      %v517 = vpop.permute.xlu0 %516
      %520 = vset.pattern.permute.xlu0 2
      %521 = vperm.xlu0 %520, %v439
      %v522 = vpop.permute.xlu0 %521
      %525 = vset.pattern.permute.xlu0 2
      %526 = vperm.xlu0 %525, %v440
      %v527 = vpop.permute.xlu0 %526
      %530 = vset.pattern.permute.xlu0 2
      %531 = vperm.xlu0 %530, %v441
      %v532 = vpop.permute.xlu0 %531
      %535 = vset.pattern.permute.xlu0 2
      %536 = vperm.xlu0 %535, %v442
      %v537 = vpop.permute.xlu0 %536
      %540 = vset.pattern.permute.xlu0 2
      %541 = vperm.xlu0 %540, %v443
      %v542 = vpop.permute.xlu0 %541
      %545 = vset.pattern.permute.xlu0 2
      %546 = vperm.xlu0 %545, %v444
      %v547 = vpop.permute.xlu0 %546
      %550 = vset.pattern.permute.xlu0 2
      %551 = vperm.xlu0 %550, %v445
      %v552 = vpop.permute.xlu0 %551
      %555 = vset.pattern.permute.xlu0 2
      %556 = vperm.xlu0 %555, %v446
      %v557 = vpop.permute.xlu0 %556
      %560 = vset.pattern.permute.xlu0 2
      %561 = vperm.xlu0 %560, %v447
      %v562 = vpop.permute.xlu0 %561
      %565 = vset.pattern.permute.xlu0 2
      %566 = vperm.xlu0 %565, %v448
      %v567 = vpop.permute.xlu0 %566
      %570 = vset.pattern.permute.xlu0 2
      %571 = vperm.xlu0 %570, %v449
      %v572 = vpop.permute.xlu0 %571
      %575 = vset.pattern.permute.xlu0 2
      %576 = vperm.xlu0 %575, %v450
      %v577 = vpop.permute.xlu0 %576
      %580 = vset.pattern.permute.xlu0 2
      %581 = vperm.xlu0 %580, %v451
      %v582 = vpop.permute.xlu0 %581
      %585 = vset.pattern.permute.xlu0 2
      %586 = vperm.xlu0 %585, %v452
      %v587 = vpop.permute.xlu0 %586
      %590 = vset.pattern.permute.xlu0 2
      %591 = vperm.xlu0 %590, %v453
      %v592 = vpop.permute.xlu0 %591
      %595 = vset.pattern.permute.xlu0 2
      %596 = vperm.xlu0 %595, %v454
      %v597 = vpop.permute.xlu0 %596
      %600 = vset.pattern.permute.xlu0 2
      %601 = vperm.xlu0 %600, %v455
      %v602 = vpop.permute.xlu0 %601
      %605 = vset.pattern.permute.xlu0 2
      %606 = vperm.xlu0 %605, %v456
      %v607 = vpop.permute.xlu0 %606
      %610 = vset.pattern.permute.xlu0 2
      %611 = vperm.xlu0 %610, %v457
      %v612 = vpop.permute.xlu0 %611
      %615 = vset.pattern.permute.xlu0 2
      %616 = vperm.xlu0 %615, %v458
      %v617 = vpop.permute.xlu0 %616
      %v619 = vlaneseq
      %v620 = vshrl.u32 %v619, 7
      %v621 = vsub.s32 2, %v620
      %v622 = vrot.slane %v426, %v621
      %v623 = vmin.f32 %v462, %v622
      %v624 = vmin.f32 %v467, %v622
      %v625 = vmin.f32 %v472, %v622
      %v626 = vmin.f32 %v477, %v622
      %v627 = vmin.f32 %v482, %v622
      %v628 = vmin.f32 %v487, %v622
      %v629 = vmin.f32 %v492, %v622
      %v630 = vmin.f32 %v497, %v622
      %v631 = vmin.f32 %v502, %v622
      %v632 = vmin.f32 %v507, %v622
      %v633 = vmin.f32 %v512, %v622
      %v634 = vmin.f32 %v517, %v622
      %v635 = vmin.f32 %v522, %v622
      %v636 = vmin.f32 %v527, %v622
      %v637 = vmin.f32 %v532, %v622
      %v638 = vmin.f32 %v537, %v622
      %v639 = vmin.f32 %v542, %v622
      %v640 = vmin.f32 %v547, %v622
      %v641 = vmin.f32 %v552, %v622
      %v642 = vmin.f32 %v557, %v622
      %v643 = vmin.f32 %v562, %v622
      %v644 = vmin.f32 %v567, %v622
      %v645 = vmin.f32 %v572, %v622
      %v646 = vmin.f32 %v577, %v622
      %v647 = vmin.f32 %v582, %v622
      %v648 = vmin.f32 %v587, %v622
      %v649 = vmin.f32 %v592, %v622
      %v650 = vmin.f32 %v597, %v622
      %v651 = vmin.f32 %v602, %v622
      %v652 = vmin.f32 %v607, %v622
      %v653 = vmin.f32 %v612, %v622
      %v654 = vmin.f32 %v617, %v622
      %655 = vset.pattern.permute.xlu0 0
      %656 = vperm.xlu0 %655, %v427
      %v657 = vpop.permute.xlu0 %656
      %659 = vset.pattern.permute.xlu0 0
      %660 = vperm.xlu0 %659, %v428
      %v661 = vpop.permute.xlu0 %660
      %663 = vset.pattern.permute.xlu0 0
      %664 = vperm.xlu0 %663, %v429
      %v665 = vpop.permute.xlu0 %664
      %667 = vset.pattern.permute.xlu0 0
      %668 = vperm.xlu0 %667, %v430
      %v669 = vpop.permute.xlu0 %668
      %671 = vset.pattern.permute.xlu0 0
      %672 = vperm.xlu0 %671, %v431
      %v673 = vpop.permute.xlu0 %672
      %675 = vset.pattern.permute.xlu0 0
      %676 = vperm.xlu0 %675, %v432
      %v677 = vpop.permute.xlu0 %676
      %679 = vset.pattern.permute.xlu0 0
      %680 = vperm.xlu0 %679, %v433
      %v681 = vpop.permute.xlu0 %680
      %683 = vset.pattern.permute.xlu0 0
      %684 = vperm.xlu0 %683, %v434
      %v685 = vpop.permute.xlu0 %684
      %687 = vset.pattern.permute.xlu0 0
      %688 = vperm.xlu0 %687, %v435
      %v689 = vpop.permute.xlu0 %688
      %691 = vset.pattern.permute.xlu0 0
      %692 = vperm.xlu0 %691, %v436
      %v693 = vpop.permute.xlu0 %692
      %695 = vset.pattern.permute.xlu0 0
      %696 = vperm.xlu0 %695, %v437
      %v697 = vpop.permute.xlu0 %696
      %699 = vset.pattern.permute.xlu0 0
      %700 = vperm.xlu0 %699, %v438
      %v701 = vpop.permute.xlu0 %700
      %703 = vset.pattern.permute.xlu0 0
      %704 = vperm.xlu0 %703, %v439
      %v705 = vpop.permute.xlu0 %704
      %707 = vset.pattern.permute.xlu0 0
      %708 = vperm.xlu0 %707, %v440
      %v709 = vpop.permute.xlu0 %708
      %711 = vset.pattern.permute.xlu0 0
      %712 = vperm.xlu0 %711, %v441
      %v713 = vpop.permute.xlu0 %712
      %715 = vset.pattern.permute.xlu0 0
      %716 = vperm.xlu0 %715, %v442
      %v717 = vpop.permute.xlu0 %716
      %719 = vset.pattern.permute.xlu0 0
      %720 = vperm.xlu0 %719, %v443
      %v721 = vpop.permute.xlu0 %720
      %723 = vset.pattern.permute.xlu0 0
      %724 = vperm.xlu0 %723, %v444
      %v725 = vpop.permute.xlu0 %724
      %727 = vset.pattern.permute.xlu0 0
      %728 = vperm.xlu0 %727, %v445
      %v729 = vpop.permute.xlu0 %728
      %731 = vset.pattern.permute.xlu0 0
      %732 = vperm.xlu0 %731, %v446
      %v733 = vpop.permute.xlu0 %732
      %735 = vset.pattern.permute.xlu0 0
      %736 = vperm.xlu0 %735, %v447
      %v737 = vpop.permute.xlu0 %736
      %739 = vset.pattern.permute.xlu0 0
      %740 = vperm.xlu0 %739, %v448
      %v741 = vpop.permute.xlu0 %740
      %743 = vset.pattern.permute.xlu0 0
      %744 = vperm.xlu0 %743, %v449
      %v745 = vpop.permute.xlu0 %744
      %747 = vset.pattern.permute.xlu0 0
      %748 = vperm.xlu0 %747, %v450
      %v749 = vpop.permute.xlu0 %748
      %751 = vset.pattern.permute.xlu0 0
      %752 = vperm.xlu0 %751, %v451
      %v753 = vpop.permute.xlu0 %752
      %755 = vset.pattern.permute.xlu0 0
      %756 = vperm.xlu0 %755, %v452
      %v757 = vpop.permute.xlu0 %756
      %759 = vset.pattern.permute.xlu0 0
      %760 = vperm.xlu0 %759, %v453
      %v761 = vpop.permute.xlu0 %760
      %763 = vset.pattern.permute.xlu0 0
      %764 = vperm.xlu0 %763, %v454
      %v765 = vpop.permute.xlu0 %764
      %767 = vset.pattern.permute.xlu0 0
      %768 = vperm.xlu0 %767, %v455
      %v769 = vpop.permute.xlu0 %768
      %771 = vset.pattern.permute.xlu0 0
      %772 = vperm.xlu0 %771, %v456
      %v773 = vpop.permute.xlu0 %772
      %775 = vset.pattern.permute.xlu0 0
      %776 = vperm.xlu0 %775, %v457
      %v777 = vpop.permute.xlu0 %776
      %779 = vset.pattern.permute.xlu0 0
      %780 = vperm.xlu0 %779, %v458
      %v781 = vpop.permute.xlu0 %780
      %v783 = vlaneseq
      %v784 = vshrl.u32 %v783, 7
      %v785 = vsub.s32 0, %v784
      %v786 = vrot.slane %v426, %v785
      %v787 = vmax.f32 %v657, %v786
      %v788 = vmax.f32 %v661, %v786
      %v789 = vmax.f32 %v665, %v786
      %v790 = vmax.f32 %v669, %v786
      %v791 = vmax.f32 %v673, %v786
      %v792 = vmax.f32 %v677, %v786
      %v793 = vmax.f32 %v681, %v786
      %v794 = vmax.f32 %v685, %v786
      %v795 = vmax.f32 %v689, %v786
      %v796 = vmax.f32 %v693, %v786
      %v797 = vmax.f32 %v697, %v786
      %v798 = vmax.f32 %v701, %v786
      %v799 = vmax.f32 %v705, %v786
      %v800 = vmax.f32 %v709, %v786
      %v801 = vmax.f32 %v713, %v786
      %v802 = vmax.f32 %v717, %v786
      %v803 = vmax.f32 %v721, %v786
      %v804 = vmax.f32 %v725, %v786
      %v805 = vmax.f32 %v729, %v786
      %v806 = vmax.f32 %v733, %v786
      %v807 = vmax.f32 %v737, %v786
      %v808 = vmax.f32 %v741, %v786
      %v809 = vmax.f32 %v745, %v786
      %v810 = vmax.f32 %v749, %v786
      %v811 = vmax.f32 %v753, %v786
      %v812 = vmax.f32 %v757, %v786
      %v813 = vmax.f32 %v761, %v786
      %v814 = vmax.f32 %v765, %v786
      %v815 = vmax.f32 %v769, %v786
      %v816 = vmax.f32 %v773, %v786
      %v817 = vmax.f32 %v777, %v786
      %v818 = vmax.f32 %v781, %v786
      %v819 = vsub.f32 %v623, %v787
      %v820 = vsub.f32 %v624, %v788
      %v821 = vsub.f32 %v625, %v789
      %v822 = vsub.f32 %v626, %v790
      %v823 = vsub.f32 %v627, %v791
      %v824 = vsub.f32 %v628, %v792
      %v825 = vsub.f32 %v629, %v793
      %v826 = vsub.f32 %v630, %v794
      %v827 = vsub.f32 %v631, %v795
      %v828 = vsub.f32 %v632, %v796
      %v829 = vsub.f32 %v633, %v797
      %v830 = vsub.f32 %v634, %v798
      %v831 = vsub.f32 %v635, %v799
      %v832 = vsub.f32 %v636, %v800
      %v833 = vsub.f32 %v637, %v801
      %v834 = vsub.f32 %v638, %v802
      %v835 = vsub.f32 %v639, %v803
      %v836 = vsub.f32 %v640, %v804
      %v837 = vsub.f32 %v641, %v805
      %v838 = vsub.f32 %v642, %v806
      %v839 = vsub.f32 %v643, %v807
      %v840 = vsub.f32 %v644, %v808
      %v841 = vsub.f32 %v645, %v809
      %v842 = vsub.f32 %v646, %v810
      %v843 = vsub.f32 %v647, %v811
      %v844 = vsub.f32 %v648, %v812
      %v845 = vsub.f32 %v649, %v813
      %v846 = vsub.f32 %v650, %v814
      %v847 = vsub.f32 %v651, %v815
      %v848 = vsub.f32 %v652, %v816
      %v849 = vsub.f32 %v653, %v817
      %v850 = vsub.f32 %v654, %v818
      %v851 = vmax.f32 %v819, 0.0
      %v852 = vmax.f32 %v820, 0.0
      %v853 = vmax.f32 %v821, 0.0
      %v854 = vmax.f32 %v822, 0.0
      %v855 = vmax.f32 %v823, 0.0
      %v856 = vmax.f32 %v824, 0.0
      %v857 = vmax.f32 %v825, 0.0
      %v858 = vmax.f32 %v826, 0.0
      %v859 = vmax.f32 %v827, 0.0
      %v860 = vmax.f32 %v828, 0.0
      %v861 = vmax.f32 %v829, 0.0
      %v862 = vmax.f32 %v830, 0.0
      %v863 = vmax.f32 %v831, 0.0
      %v864 = vmax.f32 %v832, 0.0
      %v865 = vmax.f32 %v833, 0.0
      %v866 = vmax.f32 %v834, 0.0
      %v867 = vmax.f32 %v835, 0.0
      %v868 = vmax.f32 %v836, 0.0
      %v869 = vmax.f32 %v837, 0.0
      %v870 = vmax.f32 %v838, 0.0
      %v871 = vmax.f32 %v839, 0.0
      %v872 = vmax.f32 %v840, 0.0
      %v873 = vmax.f32 %v841, 0.0
      %v874 = vmax.f32 %v842, 0.0
      %v875 = vmax.f32 %v843, 0.0
      %v876 = vmax.f32 %v844, 0.0
      %v877 = vmax.f32 %v845, 0.0
      %v878 = vmax.f32 %v846, 0.0
      %v879 = vmax.f32 %v847, 0.0
      %v880 = vmax.f32 %v848, 0.0
      %v881 = vmax.f32 %v849, 0.0
      %v882 = vmax.f32 %v850, 0.0
      %883 = vset.pattern.permute.xlu0 3
      %884 = vperm.xlu0 %883, %v427
      %v885 = vpop.permute.xlu0 %884
      %887 = vset.pattern.permute.xlu0 3
      %888 = vperm.xlu0 %887, %v428
      %v889 = vpop.permute.xlu0 %888
      %891 = vset.pattern.permute.xlu0 3
      %892 = vperm.xlu0 %891, %v429
      %v893 = vpop.permute.xlu0 %892
      %895 = vset.pattern.permute.xlu0 3
      %896 = vperm.xlu0 %895, %v430
      %v897 = vpop.permute.xlu0 %896
      %899 = vset.pattern.permute.xlu0 3
      %900 = vperm.xlu0 %899, %v431
      %v901 = vpop.permute.xlu0 %900
      %903 = vset.pattern.permute.xlu0 3
      %904 = vperm.xlu0 %903, %v432
      %v905 = vpop.permute.xlu0 %904
      %907 = vset.pattern.permute.xlu0 3
      %908 = vperm.xlu0 %907, %v433
      %v909 = vpop.permute.xlu0 %908
      %911 = vset.pattern.permute.xlu0 3
      %912 = vperm.xlu0 %911, %v434
      %v913 = vpop.permute.xlu0 %912
      %915 = vset.pattern.permute.xlu0 3
      %916 = vperm.xlu0 %915, %v435
      %v917 = vpop.permute.xlu0 %916
      %919 = vset.pattern.permute.xlu0 3
      %920 = vperm.xlu0 %919, %v436
      %v921 = vpop.permute.xlu0 %920
      %923 = vset.pattern.permute.xlu0 3
      %924 = vperm.xlu0 %923, %v437
      %v925 = vpop.permute.xlu0 %924
      %927 = vset.pattern.permute.xlu0 3
      %928 = vperm.xlu0 %927, %v438
      %v929 = vpop.permute.xlu0 %928
      %931 = vset.pattern.permute.xlu0 3
      %932 = vperm.xlu0 %931, %v439
      %v933 = vpop.permute.xlu0 %932
      %935 = vset.pattern.permute.xlu0 3
      %936 = vperm.xlu0 %935, %v440
      %v937 = vpop.permute.xlu0 %936
      %939 = vset.pattern.permute.xlu0 3
      %940 = vperm.xlu0 %939, %v441
      %v941 = vpop.permute.xlu0 %940
      %943 = vset.pattern.permute.xlu0 3
      %944 = vperm.xlu0 %943, %v442
      %v945 = vpop.permute.xlu0 %944
      %947 = vset.pattern.permute.xlu0 3
      %948 = vperm.xlu0 %947, %v443
      %v949 = vpop.permute.xlu0 %948
      %951 = vset.pattern.permute.xlu0 3
      %952 = vperm.xlu0 %951, %v444
      %v953 = vpop.permute.xlu0 %952
      %955 = vset.pattern.permute.xlu0 3
      %956 = vperm.xlu0 %955, %v445
      %v957 = vpop.permute.xlu0 %956
      %959 = vset.pattern.permute.xlu0 3
      %960 = vperm.xlu0 %959, %v446
      %v961 = vpop.permute.xlu0 %960
      %963 = vset.pattern.permute.xlu0 3
      %964 = vperm.xlu0 %963, %v447
      %v965 = vpop.permute.xlu0 %964
      %967 = vset.pattern.permute.xlu0 3
      %968 = vperm.xlu0 %967, %v448
      %v969 = vpop.permute.xlu0 %968
      %971 = vset.pattern.permute.xlu0 3
      %972 = vperm.xlu0 %971, %v449
      %v973 = vpop.permute.xlu0 %972
      %975 = vset.pattern.permute.xlu0 3
      %976 = vperm.xlu0 %975, %v450
      %v977 = vpop.permute.xlu0 %976
      %979 = vset.pattern.permute.xlu0 3
      %980 = vperm.xlu0 %979, %v451
      %v981 = vpop.permute.xlu0 %980
      %983 = vset.pattern.permute.xlu0 3
      %984 = vperm.xlu0 %983, %v452
      %v985 = vpop.permute.xlu0 %984
      %987 = vset.pattern.permute.xlu0 3
      %988 = vperm.xlu0 %987, %v453
      %v989 = vpop.permute.xlu0 %988
      %991 = vset.pattern.permute.xlu0 3
      %992 = vperm.xlu0 %991, %v454
      %v993 = vpop.permute.xlu0 %992
      %995 = vset.pattern.permute.xlu0 3
      %996 = vperm.xlu0 %995, %v455
      %v997 = vpop.permute.xlu0 %996
      %999 = vset.pattern.permute.xlu0 3
      %1000 = vperm.xlu0 %999, %v456
      %v1001 = vpop.permute.xlu0 %1000
      %1003 = vset.pattern.permute.xlu0 3
      %1004 = vperm.xlu0 %1003, %v457
      %v1005 = vpop.permute.xlu0 %1004
      %1007 = vset.pattern.permute.xlu0 3
      %1008 = vperm.xlu0 %1007, %v458
      %v1009 = vpop.permute.xlu0 %1008
      %v1011 = vlaneseq
      %v1012 = vshrl.u32 %v1011, 7
      %v1013 = vsub.s32 3, %v1012
      %v1014 = vrot.slane %v426, %v1013
      %v1015 = vmin.f32 %v885, %v1014
      %v1016 = vmin.f32 %v889, %v1014
      %v1017 = vmin.f32 %v893, %v1014
      %v1018 = vmin.f32 %v897, %v1014
      %v1019 = vmin.f32 %v901, %v1014
      %v1020 = vmin.f32 %v905, %v1014
      %v1021 = vmin.f32 %v909, %v1014
      %v1022 = vmin.f32 %v913, %v1014
      %v1023 = vmin.f32 %v917, %v1014
      %v1024 = vmin.f32 %v921, %v1014
      %v1025 = vmin.f32 %v925, %v1014
      %v1026 = vmin.f32 %v929, %v1014
      %v1027 = vmin.f32 %v933, %v1014
      %v1028 = vmin.f32 %v937, %v1014
      %v1029 = vmin.f32 %v941, %v1014
      %v1030 = vmin.f32 %v945, %v1014
      %v1031 = vmin.f32 %v949, %v1014
      %v1032 = vmin.f32 %v953, %v1014
      %v1033 = vmin.f32 %v957, %v1014
      %v1034 = vmin.f32 %v961, %v1014
      %v1035 = vmin.f32 %v965, %v1014
      %v1036 = vmin.f32 %v969, %v1014
      %v1037 = vmin.f32 %v973, %v1014
      %v1038 = vmin.f32 %v977, %v1014
      %v1039 = vmin.f32 %v981, %v1014
      %v1040 = vmin.f32 %v985, %v1014
      %v1041 = vmin.f32 %v989, %v1014
      %v1042 = vmin.f32 %v993, %v1014
      %v1043 = vmin.f32 %v997, %v1014
      %v1044 = vmin.f32 %v1001, %v1014
      %v1045 = vmin.f32 %v1005, %v1014
      %v1046 = vmin.f32 %v1009, %v1014
      %1047 = vset.pattern.permute.xlu0 1
      %1048 = vperm.xlu0 %1047, %v427
      %v1049 = vpop.permute.xlu0 %1048
      %1051 = vset.pattern.permute.xlu0 1
      %1052 = vperm.xlu0 %1051, %v428
      %v1053 = vpop.permute.xlu0 %1052
      %1055 = vset.pattern.permute.xlu0 1
      %1056 = vperm.xlu0 %1055, %v429
      %v1057 = vpop.permute.xlu0 %1056
      %1059 = vset.pattern.permute.xlu0 1
      %1060 = vperm.xlu0 %1059, %v430
      %v1061 = vpop.permute.xlu0 %1060
      %1063 = vset.pattern.permute.xlu0 1
      %1064 = vperm.xlu0 %1063, %v431
      %v1065 = vpop.permute.xlu0 %1064
      %1067 = vset.pattern.permute.xlu0 1
      %1068 = vperm.xlu0 %1067, %v432
      %v1069 = vpop.permute.xlu0 %1068
      %1071 = vset.pattern.permute.xlu0 1
      %1072 = vperm.xlu0 %1071, %v433
      %v1073 = vpop.permute.xlu0 %1072
      %1075 = vset.pattern.permute.xlu0 1
      %1076 = vperm.xlu0 %1075, %v434
      %v1077 = vpop.permute.xlu0 %1076
      %1079 = vset.pattern.permute.xlu0 1
      %1080 = vperm.xlu0 %1079, %v435
      %v1081 = vpop.permute.xlu0 %1080
      %1083 = vset.pattern.permute.xlu0 1
      %1084 = vperm.xlu0 %1083, %v436
      %v1085 = vpop.permute.xlu0 %1084
      %1087 = vset.pattern.permute.xlu0 1
      %1088 = vperm.xlu0 %1087, %v437
      %v1089 = vpop.permute.xlu0 %1088
      %1091 = vset.pattern.permute.xlu0 1
      %1092 = vperm.xlu0 %1091, %v438
      %v1093 = vpop.permute.xlu0 %1092
      %1095 = vset.pattern.permute.xlu0 1
      %1096 = vperm.xlu0 %1095, %v439
      %v1097 = vpop.permute.xlu0 %1096
      %1099 = vset.pattern.permute.xlu0 1
      %1100 = vperm.xlu0 %1099, %v440
      %v1101 = vpop.permute.xlu0 %1100
      %1103 = vset.pattern.permute.xlu0 1
      %1104 = vperm.xlu0 %1103, %v441
      %v1105 = vpop.permute.xlu0 %1104
      %1107 = vset.pattern.permute.xlu0 1
      %1108 = vperm.xlu0 %1107, %v442
      %v1109 = vpop.permute.xlu0 %1108
      %1111 = vset.pattern.permute.xlu0 1
      %1112 = vperm.xlu0 %1111, %v443
      %v1113 = vpop.permute.xlu0 %1112
      %1115 = vset.pattern.permute.xlu0 1
      %1116 = vperm.xlu0 %1115, %v444
      %v1117 = vpop.permute.xlu0 %1116
      %1119 = vset.pattern.permute.xlu0 1
      %1120 = vperm.xlu0 %1119, %v445
      %v1121 = vpop.permute.xlu0 %1120
      %1123 = vset.pattern.permute.xlu0 1
      %1124 = vperm.xlu0 %1123, %v446
      %v1125 = vpop.permute.xlu0 %1124
      %1127 = vset.pattern.permute.xlu0 1
      %1128 = vperm.xlu0 %1127, %v447
      %v1129 = vpop.permute.xlu0 %1128
      %1131 = vset.pattern.permute.xlu0 1
      %1132 = vperm.xlu0 %1131, %v448
      %v1133 = vpop.permute.xlu0 %1132
      %1135 = vset.pattern.permute.xlu0 1
      %1136 = vperm.xlu0 %1135, %v449
      %v1137 = vpop.permute.xlu0 %1136
      %1139 = vset.pattern.permute.xlu0 1
      %1140 = vperm.xlu0 %1139, %v450
      %v1141 = vpop.permute.xlu0 %1140
      %1143 = vset.pattern.permute.xlu0 1
      %1144 = vperm.xlu0 %1143, %v451
      %v1145 = vpop.permute.xlu0 %1144
      %1147 = vset.pattern.permute.xlu0 1
      %1148 = vperm.xlu0 %1147, %v452
      %v1149 = vpop.permute.xlu0 %1148
      %1151 = vset.pattern.permute.xlu0 1
      %1152 = vperm.xlu0 %1151, %v453
      %v1153 = vpop.permute.xlu0 %1152
      %1155 = vset.pattern.permute.xlu0 1
      %1156 = vperm.xlu0 %1155, %v454
      %v1157 = vpop.permute.xlu0 %1156
      %1159 = vset.pattern.permute.xlu0 1
      %1160 = vperm.xlu0 %1159, %v455
      %v1161 = vpop.permute.xlu0 %1160
      %1163 = vset.pattern.permute.xlu0 1
      %1164 = vperm.xlu0 %1163, %v456
      %v1165 = vpop.permute.xlu0 %1164
      %1167 = vset.pattern.permute.xlu0 1
      %1168 = vperm.xlu0 %1167, %v457
      %v1169 = vpop.permute.xlu0 %1168
      %1171 = vset.pattern.permute.xlu0 1
      %1172 = vperm.xlu0 %1171, %v458
      %v1173 = vpop.permute.xlu0 %1172
      %v1175 = vlaneseq
      %v1176 = vshrl.u32 %v1175, 7
      %v1177 = vsub.s32 1, %v1176
      %v1178 = vrot.slane %v426, %v1177
      %v1179 = vmax.f32 %v1049, %v1178
      %v1180 = vmax.f32 %v1053, %v1178
      %v1181 = vmax.f32 %v1057, %v1178
      %v1182 = vmax.f32 %v1061, %v1178
      %v1183 = vmax.f32 %v1065, %v1178
      %v1184 = vmax.f32 %v1069, %v1178
      %v1185 = vmax.f32 %v1073, %v1178
      %v1186 = vmax.f32 %v1077, %v1178
      %v1187 = vmax.f32 %v1081, %v1178
      %v1188 = vmax.f32 %v1085, %v1178
      %v1189 = vmax.f32 %v1089, %v1178
      %v1190 = vmax.f32 %v1093, %v1178
      %v1191 = vmax.f32 %v1097, %v1178
      %v1192 = vmax.f32 %v1101, %v1178
      %v1193 = vmax.f32 %v1105, %v1178
      %v1194 = vmax.f32 %v1109, %v1178
      %v1195 = vmax.f32 %v1113, %v1178
      %v1196 = vmax.f32 %v1117, %v1178
      %v1197 = vmax.f32 %v1121, %v1178
      %v1198 = vmax.f32 %v1125, %v1178
      %v1199 = vmax.f32 %v1129, %v1178
      %v1200 = vmax.f32 %v1133, %v1178
      %v1201 = vmax.f32 %v1137, %v1178
      %v1202 = vmax.f32 %v1141, %v1178
      %v1203 = vmax.f32 %v1145, %v1178
      %v1204 = vmax.f32 %v1149, %v1178
      %v1205 = vmax.f32 %v1153, %v1178
      %v1206 = vmax.f32 %v1157, %v1178
      %v1207 = vmax.f32 %v1161, %v1178
      %v1208 = vmax.f32 %v1165, %v1178
      %v1209 = vmax.f32 %v1169, %v1178
      %v1210 = vmax.f32 %v1173, %v1178
      %v1211 = vsub.f32 %v1015, %v1179
      %v1212 = vsub.f32 %v1016, %v1180
      %v1213 = vsub.f32 %v1017, %v1181
      %v1214 = vsub.f32 %v1018, %v1182
      %v1215 = vsub.f32 %v1019, %v1183
      %v1216 = vsub.f32 %v1020, %v1184
      %v1217 = vsub.f32 %v1021, %v1185
      %v1218 = vsub.f32 %v1022, %v1186
      %v1219 = vsub.f32 %v1023, %v1187
      %v1220 = vsub.f32 %v1024, %v1188
      %v1221 = vsub.f32 %v1025, %v1189
      %v1222 = vsub.f32 %v1026, %v1190
      %v1223 = vsub.f32 %v1027, %v1191
      %v1224 = vsub.f32 %v1028, %v1192
      %v1225 = vsub.f32 %v1029, %v1193
      %v1226 = vsub.f32 %v1030, %v1194
      %v1227 = vsub.f32 %v1031, %v1195
      %v1228 = vsub.f32 %v1032, %v1196
      %v1229 = vsub.f32 %v1033, %v1197
      %v1230 = vsub.f32 %v1034, %v1198
      %v1231 = vsub.f32 %v1035, %v1199
      %v1232 = vsub.f32 %v1036, %v1200
      %v1233 = vsub.f32 %v1037, %v1201
      %v1234 = vsub.f32 %v1038, %v1202
      %v1235 = vsub.f32 %v1039, %v1203
      %v1236 = vsub.f32 %v1040, %v1204
      %v1237 = vsub.f32 %v1041, %v1205
      %v1238 = vsub.f32 %v1042, %v1206
      %v1239 = vsub.f32 %v1043, %v1207
      %v1240 = vsub.f32 %v1044, %v1208
      %v1241 = vsub.f32 %v1045, %v1209
      %v1242 = vsub.f32 %v1046, %v1210
      %v1243 = vmax.f32 %v1211, 0.0
      %v1244 = vmax.f32 %v1212, 0.0
      %v1245 = vmax.f32 %v1213, 0.0
      %v1246 = vmax.f32 %v1214, 0.0
      %v1247 = vmax.f32 %v1215, 0.0
      %v1248 = vmax.f32 %v1216, 0.0
      %v1249 = vmax.f32 %v1217, 0.0
      %v1250 = vmax.f32 %v1218, 0.0
      %v1251 = vmax.f32 %v1219, 0.0
      %v1252 = vmax.f32 %v1220, 0.0
      %v1253 = vmax.f32 %v1221, 0.0
      %v1254 = vmax.f32 %v1222, 0.0
      %v1255 = vmax.f32 %v1223, 0.0
      %v1256 = vmax.f32 %v1224, 0.0
      %v1257 = vmax.f32 %v1225, 0.0
      %v1258 = vmax.f32 %v1226, 0.0
      %v1259 = vmax.f32 %v1227, 0.0
      %v1260 = vmax.f32 %v1228, 0.0
      %v1261 = vmax.f32 %v1229, 0.0
      %v1262 = vmax.f32 %v1230, 0.0
      %v1263 = vmax.f32 %v1231, 0.0
      %v1264 = vmax.f32 %v1232, 0.0
      %v1265 = vmax.f32 %v1233, 0.0
      %v1266 = vmax.f32 %v1234, 0.0
      %v1267 = vmax.f32 %v1235, 0.0
      %v1268 = vmax.f32 %v1236, 0.0
      %v1269 = vmax.f32 %v1237, 0.0
      %v1270 = vmax.f32 %v1238, 0.0
      %v1271 = vmax.f32 %v1239, 0.0
      %v1272 = vmax.f32 %v1240, 0.0
      %v1273 = vmax.f32 %v1241, 0.0
      %v1274 = vmax.f32 %v1242, 0.0
      %v1275 = vmul.f32 %v851, %v1243
      %v1276 = vmul.f32 %v852, %v1244
      %v1277 = vmul.f32 %v853, %v1245
      %v1278 = vmul.f32 %v854, %v1246
      %v1279 = vmul.f32 %v855, %v1247
      %v1280 = vmul.f32 %v856, %v1248
      %v1281 = vmul.f32 %v857, %v1249
      %v1282 = vmul.f32 %v858, %v1250
      %v1283 = vmul.f32 %v859, %v1251
      %v1284 = vmul.f32 %v860, %v1252
      %v1285 = vmul.f32 %v861, %v1253
      %v1286 = vmul.f32 %v862, %v1254
      %v1287 = vmul.f32 %v863, %v1255
      %v1288 = vmul.f32 %v864, %v1256
      %v1289 = vmul.f32 %v865, %v1257
      %v1290 = vmul.f32 %v866, %v1258
      %v1291 = vmul.f32 %v867, %v1259
      %v1292 = vmul.f32 %v868, %v1260
      %v1293 = vmul.f32 %v869, %v1261
      %v1294 = vmul.f32 %v870, %v1262
      %v1295 = vmul.f32 %v871, %v1263
      %v1296 = vmul.f32 %v872, %v1264
      %v1297 = vmul.f32 %v873, %v1265
      %v1298 = vmul.f32 %v874, %v1266
      %v1299 = vmul.f32 %v875, %v1267
      %v1300 = vmul.f32 %v876, %v1268
      %v1301 = vmul.f32 %v877, %v1269
      %v1302 = vmul.f32 %v878, %v1270
      %v1303 = vmul.f32 %v879, %v1271
      %v1304 = vmul.f32 %v880, %v1272
      %v1305 = vmul.f32 %v881, %v1273
      %v1306 = vmul.f32 %v882, %v1274
      %v1308 = vrot.slane %v426, 6
      %v1310 = vsub.f32 %v426, %v1308
      %v1312 = vrot.slane %v1310, 1
      %v1314 = vmul.f32 %v1310, %v1312
      %1315 = vrot.lane.b32.xlu0 %v427, 2
      %v1316 = vpop.permute.xlu0 %1315
      %1317 = vrot.lane.b32.xlu0 %v428, 2
      %v1318 = vpop.permute.xlu0 %1317
      %1319 = vrot.lane.b32.xlu0 %v429, 2
      %v1320 = vpop.permute.xlu0 %1319
      %1321 = vrot.lane.b32.xlu0 %v430, 2
      %v1322 = vpop.permute.xlu0 %1321
      %1323 = vrot.lane.b32.xlu0 %v431, 2
      %v1324 = vpop.permute.xlu0 %1323
      %1325 = vrot.lane.b32.xlu0 %v432, 2
      %v1326 = vpop.permute.xlu0 %1325
      %1327 = vrot.lane.b32.xlu0 %v433, 2
      %v1328 = vpop.permute.xlu0 %1327
      %1329 = vrot.lane.b32.xlu0 %v434, 2
      %v1330 = vpop.permute.xlu0 %1329
      %1331 = vrot.lane.b32.xlu0 %v435, 2
      %v1332 = vpop.permute.xlu0 %1331
      %1333 = vrot.lane.b32.xlu0 %v436, 2
      %v1334 = vpop.permute.xlu0 %1333
      %1335 = vrot.lane.b32.xlu0 %v437, 2
      %v1336 = vpop.permute.xlu0 %1335
      %1337 = vrot.lane.b32.xlu0 %v438, 2
      %v1338 = vpop.permute.xlu0 %1337
      %1339 = vrot.lane.b32.xlu0 %v439, 2
      %v1340 = vpop.permute.xlu0 %1339
      %1341 = vrot.lane.b32.xlu0 %v440, 2
      %v1342 = vpop.permute.xlu0 %1341
      %1343 = vrot.lane.b32.xlu0 %v441, 2
      %v1344 = vpop.permute.xlu0 %1343
      %1345 = vrot.lane.b32.xlu0 %v442, 2
      %v1346 = vpop.permute.xlu0 %1345
      %1347 = vrot.lane.b32.xlu0 %v443, 2
      %v1348 = vpop.permute.xlu0 %1347
      %1349 = vrot.lane.b32.xlu0 %v444, 2
      %v1350 = vpop.permute.xlu0 %1349
      %1351 = vrot.lane.b32.xlu0 %v445, 2
      %v1352 = vpop.permute.xlu0 %1351
      %1353 = vrot.lane.b32.xlu0 %v446, 2
      %v1354 = vpop.permute.xlu0 %1353
      %1355 = vrot.lane.b32.xlu0 %v447, 2
      %v1356 = vpop.permute.xlu0 %1355
      %1357 = vrot.lane.b32.xlu0 %v448, 2
      %v1358 = vpop.permute.xlu0 %1357
      %1359 = vrot.lane.b32.xlu0 %v449, 2
      %v1360 = vpop.permute.xlu0 %1359
      %1361 = vrot.lane.b32.xlu0 %v450, 2
      %v1362 = vpop.permute.xlu0 %1361
      %1363 = vrot.lane.b32.xlu0 %v451, 2
      %v1364 = vpop.permute.xlu0 %1363
      %1365 = vrot.lane.b32.xlu0 %v452, 2
      %v1366 = vpop.permute.xlu0 %1365
      %1367 = vrot.lane.b32.xlu0 %v453, 2
      %v1368 = vpop.permute.xlu0 %1367
      %1369 = vrot.lane.b32.xlu0 %v454, 2
      %v1370 = vpop.permute.xlu0 %1369
      %1371 = vrot.lane.b32.xlu0 %v455, 2
      %v1372 = vpop.permute.xlu0 %1371
      %1373 = vrot.lane.b32.xlu0 %v456, 2
      %v1374 = vpop.permute.xlu0 %1373
      %1375 = vrot.lane.b32.xlu0 %v457, 2
      %v1376 = vpop.permute.xlu0 %1375
      %1377 = vrot.lane.b32.xlu0 %v458, 2
      %v1378 = vpop.permute.xlu0 %1377
      %v1411 = vsub.f32 %v427, %v1316
      %v1412 = vsub.f32 %v428, %v1318
      %v1413 = vsub.f32 %v429, %v1320
      %v1414 = vsub.f32 %v430, %v1322
      %v1415 = vsub.f32 %v431, %v1324
      %v1416 = vsub.f32 %v432, %v1326
      %v1417 = vsub.f32 %v433, %v1328
      %v1418 = vsub.f32 %v434, %v1330
      %v1419 = vsub.f32 %v435, %v1332
      %v1420 = vsub.f32 %v436, %v1334
      %v1421 = vsub.f32 %v437, %v1336
      %v1422 = vsub.f32 %v438, %v1338
      %v1423 = vsub.f32 %v439, %v1340
      %v1424 = vsub.f32 %v440, %v1342
      %v1425 = vsub.f32 %v441, %v1344
      %v1426 = vsub.f32 %v442, %v1346
      %v1427 = vsub.f32 %v443, %v1348
      %v1428 = vsub.f32 %v444, %v1350
      %v1429 = vsub.f32 %v445, %v1352
      %v1430 = vsub.f32 %v446, %v1354
      %v1431 = vsub.f32 %v447, %v1356
      %v1432 = vsub.f32 %v448, %v1358
      %v1433 = vsub.f32 %v449, %v1360
      %v1434 = vsub.f32 %v450, %v1362
      %v1435 = vsub.f32 %v451, %v1364
      %v1436 = vsub.f32 %v452, %v1366
      %v1437 = vsub.f32 %v453, %v1368
      %v1438 = vsub.f32 %v454, %v1370
      %v1439 = vsub.f32 %v455, %v1372
      %v1440 = vsub.f32 %v456, %v1374
      %v1441 = vsub.f32 %v457, %v1376
      %v1442 = vsub.f32 %v458, %v1378
      %1475 = vrot.lane.b32.xlu0 %v1411, 127
      %v1476 = vpop.permute.xlu0 %1475
      %1477 = vrot.lane.b32.xlu0 %v1412, 127
      %v1478 = vpop.permute.xlu0 %1477
      %1479 = vrot.lane.b32.xlu0 %v1413, 127
      %v1480 = vpop.permute.xlu0 %1479
      %1481 = vrot.lane.b32.xlu0 %v1414, 127
      %v1482 = vpop.permute.xlu0 %1481
      %1483 = vrot.lane.b32.xlu0 %v1415, 127
      %v1484 = vpop.permute.xlu0 %1483
      %1485 = vrot.lane.b32.xlu0 %v1416, 127
      %v1486 = vpop.permute.xlu0 %1485
      %1487 = vrot.lane.b32.xlu0 %v1417, 127
      %v1488 = vpop.permute.xlu0 %1487
      %1489 = vrot.lane.b32.xlu0 %v1418, 127
      %v1490 = vpop.permute.xlu0 %1489
      %1491 = vrot.lane.b32.xlu0 %v1419, 127
      %v1492 = vpop.permute.xlu0 %1491
      %1493 = vrot.lane.b32.xlu0 %v1420, 127
      %v1494 = vpop.permute.xlu0 %1493
      %1495 = vrot.lane.b32.xlu0 %v1421, 127
      %v1496 = vpop.permute.xlu0 %1495
      %1497 = vrot.lane.b32.xlu0 %v1422, 127
      %v1498 = vpop.permute.xlu0 %1497
      %1499 = vrot.lane.b32.xlu0 %v1423, 127
      %v1500 = vpop.permute.xlu0 %1499
      %1501 = vrot.lane.b32.xlu0 %v1424, 127
      %v1502 = vpop.permute.xlu0 %1501
      %1503 = vrot.lane.b32.xlu0 %v1425, 127
      %v1504 = vpop.permute.xlu0 %1503
      %1505 = vrot.lane.b32.xlu0 %v1426, 127
      %v1506 = vpop.permute.xlu0 %1505
      %1507 = vrot.lane.b32.xlu0 %v1427, 127
      %v1508 = vpop.permute.xlu0 %1507
      %1509 = vrot.lane.b32.xlu0 %v1428, 127
      %v1510 = vpop.permute.xlu0 %1509
      %1511 = vrot.lane.b32.xlu0 %v1429, 127
      %v1512 = vpop.permute.xlu0 %1511
      %1513 = vrot.lane.b32.xlu0 %v1430, 127
      %v1514 = vpop.permute.xlu0 %1513
      %1515 = vrot.lane.b32.xlu0 %v1431, 127
      %v1516 = vpop.permute.xlu0 %1515
      %1517 = vrot.lane.b32.xlu0 %v1432, 127
      %v1518 = vpop.permute.xlu0 %1517
      %1519 = vrot.lane.b32.xlu0 %v1433, 127
      %v1520 = vpop.permute.xlu0 %1519
      %1521 = vrot.lane.b32.xlu0 %v1434, 127
      %v1522 = vpop.permute.xlu0 %1521
      %1523 = vrot.lane.b32.xlu0 %v1435, 127
      %v1524 = vpop.permute.xlu0 %1523
      %1525 = vrot.lane.b32.xlu0 %v1436, 127
      %v1526 = vpop.permute.xlu0 %1525
      %1527 = vrot.lane.b32.xlu0 %v1437, 127
      %v1528 = vpop.permute.xlu0 %1527
      %1529 = vrot.lane.b32.xlu0 %v1438, 127
      %v1530 = vpop.permute.xlu0 %1529
      %1531 = vrot.lane.b32.xlu0 %v1439, 127
      %v1532 = vpop.permute.xlu0 %1531
      %1533 = vrot.lane.b32.xlu0 %v1440, 127
      %v1534 = vpop.permute.xlu0 %1533
      %1535 = vrot.lane.b32.xlu0 %v1441, 127
      %v1536 = vpop.permute.xlu0 %1535
      %1537 = vrot.lane.b32.xlu0 %v1442, 127
      %v1538 = vpop.permute.xlu0 %1537
      %v1571 = vmul.f32 %v1411, %v1476
      %v1572 = vmul.f32 %v1412, %v1478
      %v1573 = vmul.f32 %v1413, %v1480
      %v1574 = vmul.f32 %v1414, %v1482
      %v1575 = vmul.f32 %v1415, %v1484
      %v1576 = vmul.f32 %v1416, %v1486
      %v1577 = vmul.f32 %v1417, %v1488
      %v1578 = vmul.f32 %v1418, %v1490
      %v1579 = vmul.f32 %v1419, %v1492
      %v1580 = vmul.f32 %v1420, %v1494
      %v1581 = vmul.f32 %v1421, %v1496
      %v1582 = vmul.f32 %v1422, %v1498
      %v1583 = vmul.f32 %v1423, %v1500
      %v1584 = vmul.f32 %v1424, %v1502
      %v1585 = vmul.f32 %v1425, %v1504
      %v1586 = vmul.f32 %v1426, %v1506
      %v1587 = vmul.f32 %v1427, %v1508
      %v1588 = vmul.f32 %v1428, %v1510
      %v1589 = vmul.f32 %v1429, %v1512
      %v1590 = vmul.f32 %v1430, %v1514
      %v1591 = vmul.f32 %v1431, %v1516
      %v1592 = vmul.f32 %v1432, %v1518
      %v1593 = vmul.f32 %v1433, %v1520
      %v1594 = vmul.f32 %v1434, %v1522
      %v1595 = vmul.f32 %v1435, %v1524
      %v1596 = vmul.f32 %v1436, %v1526
      %v1597 = vmul.f32 %v1437, %v1528
      %v1598 = vmul.f32 %v1438, %v1530
      %v1599 = vmul.f32 %v1439, %v1532
      %v1600 = vmul.f32 %v1440, %v1534
      %v1601 = vmul.f32 %v1441, %v1536
      %v1602 = vmul.f32 %v1442, %v1538
      %v1603 = vlaneseq
      %v1604 = vshrl.u32 %v1603, 7
      %v1605 = vsub.s32 2, %v1604
      %v1606 = vrot.slane %v1314, %v1605
      %1608 = vset.pattern.permute.xlu0 2
      %1609 = vperm.xlu0 %1608, %v1571
      %v1610 = vpop.permute.xlu0 %1609
      %1613 = vset.pattern.permute.xlu0 2
      %1614 = vperm.xlu0 %1613, %v1572
      %v1615 = vpop.permute.xlu0 %1614
      %1618 = vset.pattern.permute.xlu0 2
      %1619 = vperm.xlu0 %1618, %v1573
      %v1620 = vpop.permute.xlu0 %1619
      %1623 = vset.pattern.permute.xlu0 2
      %1624 = vperm.xlu0 %1623, %v1574
      %v1625 = vpop.permute.xlu0 %1624
      %1628 = vset.pattern.permute.xlu0 2
      %1629 = vperm.xlu0 %1628, %v1575
      %v1630 = vpop.permute.xlu0 %1629
      %1633 = vset.pattern.permute.xlu0 2
      %1634 = vperm.xlu0 %1633, %v1576
      %v1635 = vpop.permute.xlu0 %1634
      %1638 = vset.pattern.permute.xlu0 2
      %1639 = vperm.xlu0 %1638, %v1577
      %v1640 = vpop.permute.xlu0 %1639
      %1643 = vset.pattern.permute.xlu0 2
      %1644 = vperm.xlu0 %1643, %v1578
      %v1645 = vpop.permute.xlu0 %1644
      %1648 = vset.pattern.permute.xlu0 2
      %1649 = vperm.xlu0 %1648, %v1579
      %v1650 = vpop.permute.xlu0 %1649
      %1653 = vset.pattern.permute.xlu0 2
      %1654 = vperm.xlu0 %1653, %v1580
      %v1655 = vpop.permute.xlu0 %1654
      %1658 = vset.pattern.permute.xlu0 2
      %1659 = vperm.xlu0 %1658, %v1581
      %v1660 = vpop.permute.xlu0 %1659
      %1663 = vset.pattern.permute.xlu0 2
      %1664 = vperm.xlu0 %1663, %v1582
      %v1665 = vpop.permute.xlu0 %1664
      %1668 = vset.pattern.permute.xlu0 2
      %1669 = vperm.xlu0 %1668, %v1583
      %v1670 = vpop.permute.xlu0 %1669
      %1673 = vset.pattern.permute.xlu0 2
      %1674 = vperm.xlu0 %1673, %v1584
      %v1675 = vpop.permute.xlu0 %1674
      %1678 = vset.pattern.permute.xlu0 2
      %1679 = vperm.xlu0 %1678, %v1585
      %v1680 = vpop.permute.xlu0 %1679
      %1683 = vset.pattern.permute.xlu0 2
      %1684 = vperm.xlu0 %1683, %v1586
      %v1685 = vpop.permute.xlu0 %1684
      %1688 = vset.pattern.permute.xlu0 2
      %1689 = vperm.xlu0 %1688, %v1587
      %v1690 = vpop.permute.xlu0 %1689
      %1693 = vset.pattern.permute.xlu0 2
      %1694 = vperm.xlu0 %1693, %v1588
      %v1695 = vpop.permute.xlu0 %1694
      %1698 = vset.pattern.permute.xlu0 2
      %1699 = vperm.xlu0 %1698, %v1589
      %v1700 = vpop.permute.xlu0 %1699
      %1703 = vset.pattern.permute.xlu0 2
      %1704 = vperm.xlu0 %1703, %v1590
      %v1705 = vpop.permute.xlu0 %1704
      %1708 = vset.pattern.permute.xlu0 2
      %1709 = vperm.xlu0 %1708, %v1591
      %v1710 = vpop.permute.xlu0 %1709
      %1713 = vset.pattern.permute.xlu0 2
      %1714 = vperm.xlu0 %1713, %v1592
      %v1715 = vpop.permute.xlu0 %1714
      %1718 = vset.pattern.permute.xlu0 2
      %1719 = vperm.xlu0 %1718, %v1593
      %v1720 = vpop.permute.xlu0 %1719
      %1723 = vset.pattern.permute.xlu0 2
      %1724 = vperm.xlu0 %1723, %v1594
      %v1725 = vpop.permute.xlu0 %1724
      %1728 = vset.pattern.permute.xlu0 2
      %1729 = vperm.xlu0 %1728, %v1595
      %v1730 = vpop.permute.xlu0 %1729
      %1733 = vset.pattern.permute.xlu0 2
      %1734 = vperm.xlu0 %1733, %v1596
      %v1735 = vpop.permute.xlu0 %1734
      %1738 = vset.pattern.permute.xlu0 2
      %1739 = vperm.xlu0 %1738, %v1597
      %v1740 = vpop.permute.xlu0 %1739
      %1743 = vset.pattern.permute.xlu0 2
      %1744 = vperm.xlu0 %1743, %v1598
      %v1745 = vpop.permute.xlu0 %1744
      %1748 = vset.pattern.permute.xlu0 2
      %1749 = vperm.xlu0 %1748, %v1599
      %v1750 = vpop.permute.xlu0 %1749
      %1753 = vset.pattern.permute.xlu0 2
      %1754 = vperm.xlu0 %1753, %v1600
      %v1755 = vpop.permute.xlu0 %1754
      %1758 = vset.pattern.permute.xlu0 2
      %1759 = vperm.xlu0 %1758, %v1601
      %v1760 = vpop.permute.xlu0 %1759
      %1763 = vset.pattern.permute.xlu0 2
      %1764 = vperm.xlu0 %1763, %v1602
      %v1765 = vpop.permute.xlu0 %1764
      %v1767 = vadd.f32 %v1606, %v1610
      %v1768 = vadd.f32 %v1606, %v1615
      %v1769 = vadd.f32 %v1606, %v1620
      %v1770 = vadd.f32 %v1606, %v1625
      %v1771 = vadd.f32 %v1606, %v1630
      %v1772 = vadd.f32 %v1606, %v1635
      %v1773 = vadd.f32 %v1606, %v1640
      %v1774 = vadd.f32 %v1606, %v1645
      %v1775 = vadd.f32 %v1606, %v1650
      %v1776 = vadd.f32 %v1606, %v1655
      %v1777 = vadd.f32 %v1606, %v1660
      %v1778 = vadd.f32 %v1606, %v1665
      %v1779 = vadd.f32 %v1606, %v1670
      %v1780 = vadd.f32 %v1606, %v1675
      %v1781 = vadd.f32 %v1606, %v1680
      %v1782 = vadd.f32 %v1606, %v1685
      %v1783 = vadd.f32 %v1606, %v1690
      %v1784 = vadd.f32 %v1606, %v1695
      %v1785 = vadd.f32 %v1606, %v1700
      %v1786 = vadd.f32 %v1606, %v1705
      %v1787 = vadd.f32 %v1606, %v1710
      %v1788 = vadd.f32 %v1606, %v1715
      %v1789 = vadd.f32 %v1606, %v1720
      %v1790 = vadd.f32 %v1606, %v1725
      %v1791 = vadd.f32 %v1606, %v1730
      %v1792 = vadd.f32 %v1606, %v1735
      %v1793 = vadd.f32 %v1606, %v1740
      %v1794 = vadd.f32 %v1606, %v1745
      %v1795 = vadd.f32 %v1606, %v1750
      %v1796 = vadd.f32 %v1606, %v1755
      %v1797 = vadd.f32 %v1606, %v1760
      %v1798 = vadd.f32 %v1606, %v1765
      %v1799 = vsub.f32 %v1767, %v1275
      %v1800 = vsub.f32 %v1768, %v1276
      %v1801 = vsub.f32 %v1769, %v1277
      %v1802 = vsub.f32 %v1770, %v1278
      %v1803 = vsub.f32 %v1771, %v1279
      %v1804 = vsub.f32 %v1772, %v1280
      %v1805 = vsub.f32 %v1773, %v1281
      %v1806 = vsub.f32 %v1774, %v1282
      %v1807 = vsub.f32 %v1775, %v1283
      %v1808 = vsub.f32 %v1776, %v1284
      %v1809 = vsub.f32 %v1777, %v1285
      %v1810 = vsub.f32 %v1778, %v1286
      %v1811 = vsub.f32 %v1779, %v1287
      %v1812 = vsub.f32 %v1780, %v1288
      %v1813 = vsub.f32 %v1781, %v1289
      %v1814 = vsub.f32 %v1782, %v1290
      %v1815 = vsub.f32 %v1783, %v1291
      %v1816 = vsub.f32 %v1784, %v1292
      %v1817 = vsub.f32 %v1785, %v1293
      %v1818 = vsub.f32 %v1786, %v1294
      %v1819 = vsub.f32 %v1787, %v1295
      %v1820 = vsub.f32 %v1788, %v1296
      %v1821 = vsub.f32 %v1789, %v1297
      %v1822 = vsub.f32 %v1790, %v1298
      %v1823 = vsub.f32 %v1791, %v1299
      %v1824 = vsub.f32 %v1792, %v1300
      %v1825 = vsub.f32 %v1793, %v1301
      %v1826 = vsub.f32 %v1794, %v1302
      %v1827 = vsub.f32 %v1795, %v1303
      %v1828 = vsub.f32 %v1796, %v1304
      %v1829 = vsub.f32 %v1797, %v1305
      %v1830 = vsub.f32 %v1798, %v1306
      %v1831 = vrcp.pop %v1799
      %v1832 = vmul.f32 %v1275, %v1831
      %v1833 = vrcp.pop %v1800
      %v1834 = vmul.f32 %v1276, %v1833
      %v1835 = vrcp.pop %v1801
      %v1836 = vmul.f32 %v1277, %v1835
      %v1837 = vrcp.pop %v1802
      %v1838 = vmul.f32 %v1278, %v1837
      %v1839 = vrcp.pop %v1803
      %v1840 = vmul.f32 %v1279, %v1839
      %v1841 = vrcp.pop %v1804
      %v1842 = vmul.f32 %v1280, %v1841
      %v1843 = vrcp.pop %v1805
      %v1844 = vmul.f32 %v1281, %v1843
      %v1845 = vrcp.pop %v1806
      %v1846 = vmul.f32 %v1282, %v1845
      %v1847 = vrcp.pop %v1807
      %v1848 = vmul.f32 %v1283, %v1847
      %v1849 = vrcp.pop %v1808
      %v1850 = vmul.f32 %v1284, %v1849
      %v1851 = vrcp.pop %v1809
      %v1852 = vmul.f32 %v1285, %v1851
      %v1853 = vrcp.pop %v1810
      %v1854 = vmul.f32 %v1286, %v1853
      %v1855 = vrcp.pop %v1811
      %v1856 = vmul.f32 %v1287, %v1855
      %v1857 = vrcp.pop %v1812
      %v1858 = vmul.f32 %v1288, %v1857
      %v1859 = vrcp.pop %v1813
      %v1860 = vmul.f32 %v1289, %v1859
      %v1861 = vrcp.pop %v1814
      %v1862 = vmul.f32 %v1290, %v1861
      %v1863 = vrcp.pop %v1815
      %v1864 = vmul.f32 %v1291, %v1863
      %v1865 = vrcp.pop %v1816
      %v1866 = vmul.f32 %v1292, %v1865
      %v1867 = vrcp.pop %v1817
      %v1868 = vmul.f32 %v1293, %v1867
      %v1869 = vrcp.pop %v1818
      %v1870 = vmul.f32 %v1294, %v1869
      %v1871 = vrcp.pop %v1819
      %v1872 = vmul.f32 %v1295, %v1871
      %v1873 = vrcp.pop %v1820
      %v1874 = vmul.f32 %v1296, %v1873
      %v1875 = vrcp.pop %v1821
      %v1876 = vmul.f32 %v1297, %v1875
      %v1877 = vrcp.pop %v1822
      %v1878 = vmul.f32 %v1298, %v1877
      %v1879 = vrcp.pop %v1823
      %v1880 = vmul.f32 %v1299, %v1879
      %v1881 = vrcp.pop %v1824
      %v1882 = vmul.f32 %v1300, %v1881
      %v1883 = vrcp.pop %v1825
      %v1884 = vmul.f32 %v1301, %v1883
      %v1885 = vrcp.pop %v1826
      %v1886 = vmul.f32 %v1302, %v1885
      %v1887 = vrcp.pop %v1827
      %v1888 = vmul.f32 %v1303, %v1887
      %v1889 = vrcp.pop %v1828
      %v1890 = vmul.f32 %v1304, %v1889
      %v1891 = vrcp.pop %v1829
      %v1892 = vmul.f32 %v1305, %v1891
      %v1893 = vrcp.pop %v1830
      %v1894 = vmul.f32 %v1306, %v1893
      %v1895 = vlaneseq
      %v1896 = vand.u32 %v1895, 127
      %v1897 = vlaneseq
      %v1898 = vshrl.u32 %v1897, 7
      %v1899 = vadd.s32 %v1898, 8
      %v1900 = vadd.s32 %v1898, 16
      %v1901 = vadd.s32 %v1898, 24
      %v1902 = vadd.s32 %v1898, 32
      %v1903 = vadd.s32 %v1898, 40
      %v1904 = vadd.s32 %v1898, 48
      %v1905 = vadd.s32 %v1898, 56
      %v1906 = vadd.s32 %v1898, 64
      %v1907 = vadd.s32 %v1898, 72
      %v1908 = vadd.s32 %v1898, 80
      %v1909 = vadd.s32 %v1898, 88
      %v1910 = vadd.s32 %v1898, 96
      %v1911 = vadd.s32 %v1898, 104
      %v1912 = vadd.s32 %v1898, 112
      %v1913 = vadd.s32 %v1898, 120
      %v1914 = vadd.s32 %v1898, 128
      %v1915 = vadd.s32 %v1898, 136
      %v1916 = vadd.s32 %v1898, 144
      %v1917 = vadd.s32 %v1898, 152
      %v1918 = vadd.s32 %v1898, 160
      %v1919 = vadd.s32 %v1898, 168
      %v1920 = vadd.s32 %v1898, 176
      %v1921 = vadd.s32 %v1898, 184
      %v1922 = vadd.s32 %v1898, 192
      %v1923 = vadd.s32 %v1898, 200
      %v1924 = vadd.s32 %v1898, 208
      %v1925 = vadd.s32 %v1898, 216
      %v1926 = vadd.s32 %v1898, 224
      %v1927 = vadd.s32 %v1898, 232
      %v1928 = vadd.s32 %v1898, 240
      %v1929 = vadd.s32 %v1898, 248
      %vm1930 = vcmask 64512
      %v1931 = vsel %vm1930, %v1832, -inf
      %1932 = vmax.xlane.f32.xlu0 %v1931
      %v1933 = vpop.xlane.xlu0 %1932
      %v1934 = vsel %vm1930, %v1834, -inf
      %1935 = vmax.xlane.f32.xlu0 %v1934
      %v1936 = vpop.xlane.xlu0 %1935
      %v1937 = vsel %vm1930, %v1836, -inf
      %1938 = vmax.xlane.f32.xlu0 %v1937
      %v1939 = vpop.xlane.xlu0 %1938
      %v1940 = vsel %vm1930, %v1838, -inf
      %1941 = vmax.xlane.f32.xlu0 %v1940
      %v1942 = vpop.xlane.xlu0 %1941
      %v1943 = vsel %vm1930, %v1840, -inf
      %1944 = vmax.xlane.f32.xlu0 %v1943
      %v1945 = vpop.xlane.xlu0 %1944
      %v1946 = vsel %vm1930, %v1842, -inf
      %1947 = vmax.xlane.f32.xlu0 %v1946
      %v1948 = vpop.xlane.xlu0 %1947
      %v1949 = vsel %vm1930, %v1844, -inf
      %1950 = vmax.xlane.f32.xlu0 %v1949
      %v1951 = vpop.xlane.xlu0 %1950
      %v1952 = vsel %vm1930, %v1846, -inf
      %1953 = vmax.xlane.f32.xlu0 %v1952
      %v1954 = vpop.xlane.xlu0 %1953
      %v1955 = vsel %vm1930, %v1848, -inf
      %1956 = vmax.xlane.f32.xlu0 %v1955
      %v1957 = vpop.xlane.xlu0 %1956
      %v1958 = vsel %vm1930, %v1850, -inf
      %1959 = vmax.xlane.f32.xlu0 %v1958
      %v1960 = vpop.xlane.xlu0 %1959
      %v1961 = vsel %vm1930, %v1852, -inf
      %1962 = vmax.xlane.f32.xlu0 %v1961
      %v1963 = vpop.xlane.xlu0 %1962
      %v1964 = vsel %vm1930, %v1854, -inf
      %1965 = vmax.xlane.f32.xlu0 %v1964
      %v1966 = vpop.xlane.xlu0 %1965
      %v1967 = vsel %vm1930, %v1856, -inf
      %1968 = vmax.xlane.f32.xlu0 %v1967
      %v1969 = vpop.xlane.xlu0 %1968
      %v1970 = vsel %vm1930, %v1858, -inf
      %1971 = vmax.xlane.f32.xlu0 %v1970
      %v1972 = vpop.xlane.xlu0 %1971
      %v1973 = vsel %vm1930, %v1860, -inf
      %1974 = vmax.xlane.f32.xlu0 %v1973
      %v1975 = vpop.xlane.xlu0 %1974
      %v1976 = vsel %vm1930, %v1862, -inf
      %1977 = vmax.xlane.f32.xlu0 %v1976
      %v1978 = vpop.xlane.xlu0 %1977
      %v1979 = vsel %vm1930, %v1864, -inf
      %1980 = vmax.xlane.f32.xlu0 %v1979
      %v1981 = vpop.xlane.xlu0 %1980
      %v1982 = vsel %vm1930, %v1866, -inf
      %1983 = vmax.xlane.f32.xlu0 %v1982
      %v1984 = vpop.xlane.xlu0 %1983
      %v1985 = vsel %vm1930, %v1868, -inf
      %1986 = vmax.xlane.f32.xlu0 %v1985
      %v1987 = vpop.xlane.xlu0 %1986
      %v1988 = vsel %vm1930, %v1870, -inf
      %1989 = vmax.xlane.f32.xlu0 %v1988
      %v1990 = vpop.xlane.xlu0 %1989
      %v1991 = vsel %vm1930, %v1872, -inf
      %1992 = vmax.xlane.f32.xlu0 %v1991
      %v1993 = vpop.xlane.xlu0 %1992
      %v1994 = vsel %vm1930, %v1874, -inf
      %1995 = vmax.xlane.f32.xlu0 %v1994
      %v1996 = vpop.xlane.xlu0 %1995
      %v1997 = vsel %vm1930, %v1876, -inf
      %1998 = vmax.xlane.f32.xlu0 %v1997
      %v1999 = vpop.xlane.xlu0 %1998
      %v2000 = vsel %vm1930, %v1878, -inf
      %2001 = vmax.xlane.f32.xlu0 %v2000
      %v2002 = vpop.xlane.xlu0 %2001
      %v2003 = vsel %vm1930, %v1880, -inf
      %2004 = vmax.xlane.f32.xlu0 %v2003
      %v2005 = vpop.xlane.xlu0 %2004
      %v2006 = vsel %vm1930, %v1882, -inf
      %2007 = vmax.xlane.f32.xlu0 %v2006
      %v2008 = vpop.xlane.xlu0 %2007
      %v2009 = vsel %vm1930, %v1884, -inf
      %2010 = vmax.xlane.f32.xlu0 %v2009
      %v2011 = vpop.xlane.xlu0 %2010
      %v2012 = vsel %vm1930, %v1886, -inf
      %2013 = vmax.xlane.f32.xlu0 %v2012
      %v2014 = vpop.xlane.xlu0 %2013
      %v2015 = vsel %vm1930, %v1888, -inf
      %2016 = vmax.xlane.f32.xlu0 %v2015
      %v2017 = vpop.xlane.xlu0 %2016
      %v2018 = vsel %vm1930, %v1890, -inf
      %2019 = vmax.xlane.f32.xlu0 %v2018
      %v2020 = vpop.xlane.xlu0 %2019
      %v2021 = vsel %vm1930, %v1892, -inf
      %2022 = vmax.xlane.f32.xlu0 %v2021
      %v2023 = vpop.xlane.xlu0 %2022
      %v2024 = vsel %vm1930, %v1894, -inf
      %2025 = vmax.xlane.f32.xlu0 %v2024
      %v2026 = vpop.xlane.xlu0 %2025
      %vm2027 = vcmp.ge.f32.partialorder %v1832, %v1933
      %vm2028 = vcmp.ge.f32.partialorder %v1834, %v1936
      %vm2029 = vcmp.ge.f32.partialorder %v1836, %v1939
      %vm2030 = vcmp.ge.f32.partialorder %v1838, %v1942
      %vm2031 = vcmp.ge.f32.partialorder %v1840, %v1945
      %vm2032 = vcmp.ge.f32.partialorder %v1842, %v1948
      %vm2033 = vcmp.ge.f32.partialorder %v1844, %v1951
      %vm2034 = vcmp.ge.f32.partialorder %v1846, %v1954
      %vm2035 = vcmp.ge.f32.partialorder %v1848, %v1957
      %vm2036 = vcmp.ge.f32.partialorder %v1850, %v1960
      %vm2037 = vcmp.ge.f32.partialorder %v1852, %v1963
      %vm2038 = vcmp.ge.f32.partialorder %v1854, %v1966
      %vm2039 = vcmp.ge.f32.partialorder %v1856, %v1969
      %vm2040 = vcmp.ge.f32.partialorder %v1858, %v1972
      %vm2041 = vcmp.ge.f32.partialorder %v1860, %v1975
      %vm2042 = vcmp.ge.f32.partialorder %v1862, %v1978
      %vm2043 = vcmp.ge.f32.partialorder %v1864, %v1981
      %vm2044 = vcmp.ge.f32.partialorder %v1866, %v1984
      %vm2045 = vcmp.ge.f32.partialorder %v1868, %v1987
      %vm2046 = vcmp.ge.f32.partialorder %v1870, %v1990
      %vm2047 = vcmp.ge.f32.partialorder %v1872, %v1993
      %vm2048 = vcmp.ge.f32.partialorder %v1874, %v1996
      %vm2049 = vcmp.ge.f32.partialorder %v1876, %v1999
      %vm2050 = vcmp.ge.f32.partialorder %v1878, %v2002
      %vm2051 = vcmp.ge.f32.partialorder %v1880, %v2005
      %vm2052 = vcmp.ge.f32.partialorder %v1882, %v2008
      %vm2053 = vcmp.ge.f32.partialorder %v1884, %v2011
      %vm2054 = vcmp.ge.f32.partialorder %v1886, %v2014
      %vm2055 = vcmp.ge.f32.partialorder %v1888, %v2017
      %vm2056 = vcmp.ge.f32.partialorder %v1890, %v2020
      %vm2057 = vcmp.ge.f32.partialorder %v1892, %v2023
      %vm2058 = vcmp.ge.f32.partialorder %v1894, %v2026
      %v2059 = vsel %vm2027, %v1896, 8
      %v2060 = vsel %vm2028, %v1896, 8
      %v2061 = vsel %vm2029, %v1896, 8
      %v2062 = vsel %vm2030, %v1896, 8
      %v2063 = vsel %vm2031, %v1896, 8
      %v2064 = vsel %vm2032, %v1896, 8
      %v2065 = vsel %vm2033, %v1896, 8
      %v2066 = vsel %vm2034, %v1896, 8
      %v2067 = vsel %vm2035, %v1896, 8
      %v2068 = vsel %vm2036, %v1896, 8
      %v2069 = vsel %vm2037, %v1896, 8
      %v2070 = vsel %vm2038, %v1896, 8
      %v2071 = vsel %vm2039, %v1896, 8
      %v2072 = vsel %vm2040, %v1896, 8
      %v2073 = vsel %vm2041, %v1896, 8
      %v2074 = vsel %vm2042, %v1896, 8
      %v2075 = vsel %vm2043, %v1896, 8
      %v2076 = vsel %vm2044, %v1896, 8
      %v2077 = vsel %vm2045, %v1896, 8
      %v2078 = vsel %vm2046, %v1896, 8
      %v2079 = vsel %vm2047, %v1896, 8
      %v2080 = vsel %vm2048, %v1896, 8
      %v2081 = vsel %vm2049, %v1896, 8
      %v2082 = vsel %vm2050, %v1896, 8
      %v2083 = vsel %vm2051, %v1896, 8
      %v2084 = vsel %vm2052, %v1896, 8
      %v2085 = vsel %vm2053, %v1896, 8
      %v2086 = vsel %vm2054, %v1896, 8
      %v2087 = vsel %vm2055, %v1896, 8
      %v2088 = vsel %vm2056, %v1896, 8
      %v2089 = vsel %vm2057, %v1896, 8
      %v2090 = vsel %vm2058, %v1896, 8
      %v2091 = vsel %vm1930, %v2059, 2147483647
      %v2092 = vand.u32 %v2091, 65535
      %v2093 = vshra.s32 %v2091, 16
      %v2094 = vcvt.s32.f32 %v2092
      %v2095 = vcvt.s32.f32 %v2093
      %2096 = vmin.xlane.f32.xlu0 %v2095
      %v2097 = vpop.xlane.xlu0 %2096
      %vm2098 = vcmp.eq.f32.partialorder %v2095, %v2097
      %v2099 = vsel %vm2098, %v2094, inf
      %2100 = vmin.xlane.f32.xlu0 %v2099
      %v2101 = vpop.xlane.xlu0 %2100
      %v2102 = vcvt.f32.s32 %v2101
      %v2103 = vcvt.f32.s32 %v2097
      %v2104 = vshll.u32 %v2103, 16
      %v2105 = vadd.s32 %v2104, %v2102
      %v2106 = vsel %vm1930, %v2060, 2147483647
      %v2107 = vand.u32 %v2106, 65535
      %v2108 = vshra.s32 %v2106, 16
      %v2109 = vcvt.s32.f32 %v2107
      %v2110 = vcvt.s32.f32 %v2108
      %2111 = vmin.xlane.f32.xlu0 %v2110
      %v2112 = vpop.xlane.xlu0 %2111
      %vm2113 = vcmp.eq.f32.partialorder %v2110, %v2112
      %v2114 = vsel %vm2113, %v2109, inf
      %2115 = vmin.xlane.f32.xlu0 %v2114
      %v2116 = vpop.xlane.xlu0 %2115
      %v2117 = vcvt.f32.s32 %v2116
      %v2118 = vcvt.f32.s32 %v2112
      %v2119 = vshll.u32 %v2118, 16
      %v2120 = vadd.s32 %v2119, %v2117
      %v2121 = vsel %vm1930, %v2061, 2147483647
      %v2122 = vand.u32 %v2121, 65535
      %v2123 = vshra.s32 %v2121, 16
      %v2124 = vcvt.s32.f32 %v2122
      %v2125 = vcvt.s32.f32 %v2123
      %2126 = vmin.xlane.f32.xlu0 %v2125
      %v2127 = vpop.xlane.xlu0 %2126
      %vm2128 = vcmp.eq.f32.partialorder %v2125, %v2127
      %v2129 = vsel %vm2128, %v2124, inf
      %2130 = vmin.xlane.f32.xlu0 %v2129
      %v2131 = vpop.xlane.xlu0 %2130
      %v2132 = vcvt.f32.s32 %v2131
      %v2133 = vcvt.f32.s32 %v2127
      %v2134 = vshll.u32 %v2133, 16
      %v2135 = vadd.s32 %v2134, %v2132
      %v2136 = vsel %vm1930, %v2062, 2147483647
      %v2137 = vand.u32 %v2136, 65535
      %v2138 = vshra.s32 %v2136, 16
      %v2139 = vcvt.s32.f32 %v2137
      %v2140 = vcvt.s32.f32 %v2138
      %2141 = vmin.xlane.f32.xlu0 %v2140
      %v2142 = vpop.xlane.xlu0 %2141
      %vm2143 = vcmp.eq.f32.partialorder %v2140, %v2142
      %v2144 = vsel %vm2143, %v2139, inf
      %2145 = vmin.xlane.f32.xlu0 %v2144
      %v2146 = vpop.xlane.xlu0 %2145
      %v2147 = vcvt.f32.s32 %v2146
      %v2148 = vcvt.f32.s32 %v2142
      %v2149 = vshll.u32 %v2148, 16
      %v2150 = vadd.s32 %v2149, %v2147
      %v2151 = vsel %vm1930, %v2063, 2147483647
      %v2152 = vand.u32 %v2151, 65535
      %v2153 = vshra.s32 %v2151, 16
      %v2154 = vcvt.s32.f32 %v2152
      %v2155 = vcvt.s32.f32 %v2153
      %2156 = vmin.xlane.f32.xlu0 %v2155
      %v2157 = vpop.xlane.xlu0 %2156
      %vm2158 = vcmp.eq.f32.partialorder %v2155, %v2157
      %v2159 = vsel %vm2158, %v2154, inf
      %2160 = vmin.xlane.f32.xlu0 %v2159
      %v2161 = vpop.xlane.xlu0 %2160
      %v2162 = vcvt.f32.s32 %v2161
      %v2163 = vcvt.f32.s32 %v2157
      %v2164 = vshll.u32 %v2163, 16
      %v2165 = vadd.s32 %v2164, %v2162
      %v2166 = vsel %vm1930, %v2064, 2147483647
      %v2167 = vand.u32 %v2166, 65535
      %v2168 = vshra.s32 %v2166, 16
      %v2169 = vcvt.s32.f32 %v2167
      %v2170 = vcvt.s32.f32 %v2168
      %2171 = vmin.xlane.f32.xlu0 %v2170
      %v2172 = vpop.xlane.xlu0 %2171
      %vm2173 = vcmp.eq.f32.partialorder %v2170, %v2172
      %v2174 = vsel %vm2173, %v2169, inf
      %2175 = vmin.xlane.f32.xlu0 %v2174
      %v2176 = vpop.xlane.xlu0 %2175
      %v2177 = vcvt.f32.s32 %v2176
      %v2178 = vcvt.f32.s32 %v2172
      %v2179 = vshll.u32 %v2178, 16
      %v2180 = vadd.s32 %v2179, %v2177
      %v2181 = vsel %vm1930, %v2065, 2147483647
      %v2182 = vand.u32 %v2181, 65535
      %v2183 = vshra.s32 %v2181, 16
      %v2184 = vcvt.s32.f32 %v2182
      %v2185 = vcvt.s32.f32 %v2183
      %2186 = vmin.xlane.f32.xlu0 %v2185
      %v2187 = vpop.xlane.xlu0 %2186
      %vm2188 = vcmp.eq.f32.partialorder %v2185, %v2187
      %v2189 = vsel %vm2188, %v2184, inf
      %2190 = vmin.xlane.f32.xlu0 %v2189
      %v2191 = vpop.xlane.xlu0 %2190
      %v2192 = vcvt.f32.s32 %v2191
      %v2193 = vcvt.f32.s32 %v2187
      %v2194 = vshll.u32 %v2193, 16
      %v2195 = vadd.s32 %v2194, %v2192
      %v2196 = vsel %vm1930, %v2066, 2147483647
      %v2197 = vand.u32 %v2196, 65535
      %v2198 = vshra.s32 %v2196, 16
      %v2199 = vcvt.s32.f32 %v2197
      %v2200 = vcvt.s32.f32 %v2198
      %2201 = vmin.xlane.f32.xlu0 %v2200
      %v2202 = vpop.xlane.xlu0 %2201
      %vm2203 = vcmp.eq.f32.partialorder %v2200, %v2202
      %v2204 = vsel %vm2203, %v2199, inf
      %2205 = vmin.xlane.f32.xlu0 %v2204
      %v2206 = vpop.xlane.xlu0 %2205
      %v2207 = vcvt.f32.s32 %v2206
      %v2208 = vcvt.f32.s32 %v2202
      %v2209 = vshll.u32 %v2208, 16
      %v2210 = vadd.s32 %v2209, %v2207
      %v2211 = vsel %vm1930, %v2067, 2147483647
      %v2212 = vand.u32 %v2211, 65535
      %v2213 = vshra.s32 %v2211, 16
      %v2214 = vcvt.s32.f32 %v2212
      %v2215 = vcvt.s32.f32 %v2213
      %2216 = vmin.xlane.f32.xlu0 %v2215
      %v2217 = vpop.xlane.xlu0 %2216
      %vm2218 = vcmp.eq.f32.partialorder %v2215, %v2217
      %v2219 = vsel %vm2218, %v2214, inf
      %2220 = vmin.xlane.f32.xlu0 %v2219
      %v2221 = vpop.xlane.xlu0 %2220
      %v2222 = vcvt.f32.s32 %v2221
      %v2223 = vcvt.f32.s32 %v2217
      %v2224 = vshll.u32 %v2223, 16
      %v2225 = vadd.s32 %v2224, %v2222
      %v2226 = vsel %vm1930, %v2068, 2147483647
      %v2227 = vand.u32 %v2226, 65535
      %v2228 = vshra.s32 %v2226, 16
      %v2229 = vcvt.s32.f32 %v2227
      %v2230 = vcvt.s32.f32 %v2228
      %2231 = vmin.xlane.f32.xlu0 %v2230
      %v2232 = vpop.xlane.xlu0 %2231
      %vm2233 = vcmp.eq.f32.partialorder %v2230, %v2232
      %v2234 = vsel %vm2233, %v2229, inf
      %2235 = vmin.xlane.f32.xlu0 %v2234
      %v2236 = vpop.xlane.xlu0 %2235
      %v2237 = vcvt.f32.s32 %v2236
      %v2238 = vcvt.f32.s32 %v2232
      %v2239 = vshll.u32 %v2238, 16
      %v2240 = vadd.s32 %v2239, %v2237
      %v2241 = vsel %vm1930, %v2069, 2147483647
      %v2242 = vand.u32 %v2241, 65535
      %v2243 = vshra.s32 %v2241, 16
      %v2244 = vcvt.s32.f32 %v2242
      %v2245 = vcvt.s32.f32 %v2243
      %2246 = vmin.xlane.f32.xlu0 %v2245
      %v2247 = vpop.xlane.xlu0 %2246
      %vm2248 = vcmp.eq.f32.partialorder %v2245, %v2247
      %v2249 = vsel %vm2248, %v2244, inf
      %2250 = vmin.xlane.f32.xlu0 %v2249
      %v2251 = vpop.xlane.xlu0 %2250
      %v2252 = vcvt.f32.s32 %v2251
      %v2253 = vcvt.f32.s32 %v2247
      %v2254 = vshll.u32 %v2253, 16
      %v2255 = vadd.s32 %v2254, %v2252
      %v2256 = vsel %vm1930, %v2070, 2147483647
      %v2257 = vand.u32 %v2256, 65535
      %v2258 = vshra.s32 %v2256, 16
      %v2259 = vcvt.s32.f32 %v2257
      %v2260 = vcvt.s32.f32 %v2258
      %2261 = vmin.xlane.f32.xlu0 %v2260
      %v2262 = vpop.xlane.xlu0 %2261
      %vm2263 = vcmp.eq.f32.partialorder %v2260, %v2262
      %v2264 = vsel %vm2263, %v2259, inf
      %2265 = vmin.xlane.f32.xlu0 %v2264
      %v2266 = vpop.xlane.xlu0 %2265
      %v2267 = vcvt.f32.s32 %v2266
      %v2268 = vcvt.f32.s32 %v2262
      %v2269 = vshll.u32 %v2268, 16
      %v2270 = vadd.s32 %v2269, %v2267
      %v2271 = vsel %vm1930, %v2071, 2147483647
      %v2272 = vand.u32 %v2271, 65535
      %v2273 = vshra.s32 %v2271, 16
      %v2274 = vcvt.s32.f32 %v2272
      %v2275 = vcvt.s32.f32 %v2273
      %2276 = vmin.xlane.f32.xlu0 %v2275
      %v2277 = vpop.xlane.xlu0 %2276
      %vm2278 = vcmp.eq.f32.partialorder %v2275, %v2277
      %v2279 = vsel %vm2278, %v2274, inf
      %2280 = vmin.xlane.f32.xlu0 %v2279
      %v2281 = vpop.xlane.xlu0 %2280
      %v2282 = vcvt.f32.s32 %v2281
      %v2283 = vcvt.f32.s32 %v2277
      %v2284 = vshll.u32 %v2283, 16
      %v2285 = vadd.s32 %v2284, %v2282
      %v2286 = vsel %vm1930, %v2072, 2147483647
      %v2287 = vand.u32 %v2286, 65535
      %v2288 = vshra.s32 %v2286, 16
      %v2289 = vcvt.s32.f32 %v2287
      %v2290 = vcvt.s32.f32 %v2288
      %2291 = vmin.xlane.f32.xlu0 %v2290
      %v2292 = vpop.xlane.xlu0 %2291
      %vm2293 = vcmp.eq.f32.partialorder %v2290, %v2292
      %v2294 = vsel %vm2293, %v2289, inf
      %2295 = vmin.xlane.f32.xlu0 %v2294
      %v2296 = vpop.xlane.xlu0 %2295
      %v2297 = vcvt.f32.s32 %v2296
      %v2298 = vcvt.f32.s32 %v2292
      %v2299 = vshll.u32 %v2298, 16
      %v2300 = vadd.s32 %v2299, %v2297
      %v2301 = vsel %vm1930, %v2073, 2147483647
      %v2302 = vand.u32 %v2301, 65535
      %v2303 = vshra.s32 %v2301, 16
      %v2304 = vcvt.s32.f32 %v2302
      %v2305 = vcvt.s32.f32 %v2303
      %2306 = vmin.xlane.f32.xlu0 %v2305
      %v2307 = vpop.xlane.xlu0 %2306
      %vm2308 = vcmp.eq.f32.partialorder %v2305, %v2307
      %v2309 = vsel %vm2308, %v2304, inf
      %2310 = vmin.xlane.f32.xlu0 %v2309
      %v2311 = vpop.xlane.xlu0 %2310
      %v2312 = vcvt.f32.s32 %v2311
      %v2313 = vcvt.f32.s32 %v2307
      %v2314 = vshll.u32 %v2313, 16
      %v2315 = vadd.s32 %v2314, %v2312
      %v2316 = vsel %vm1930, %v2074, 2147483647
      %v2317 = vand.u32 %v2316, 65535
      %v2318 = vshra.s32 %v2316, 16
      %v2319 = vcvt.s32.f32 %v2317
      %v2320 = vcvt.s32.f32 %v2318
      %2321 = vmin.xlane.f32.xlu0 %v2320
      %v2322 = vpop.xlane.xlu0 %2321
      %vm2323 = vcmp.eq.f32.partialorder %v2320, %v2322
      %v2324 = vsel %vm2323, %v2319, inf
      %2325 = vmin.xlane.f32.xlu0 %v2324
      %v2326 = vpop.xlane.xlu0 %2325
      %v2327 = vcvt.f32.s32 %v2326
      %v2328 = vcvt.f32.s32 %v2322
      %v2329 = vshll.u32 %v2328, 16
      %v2330 = vadd.s32 %v2329, %v2327
      %v2331 = vsel %vm1930, %v2075, 2147483647
      %v2332 = vand.u32 %v2331, 65535
      %v2333 = vshra.s32 %v2331, 16
      %v2334 = vcvt.s32.f32 %v2332
      %v2335 = vcvt.s32.f32 %v2333
      %2336 = vmin.xlane.f32.xlu0 %v2335
      %v2337 = vpop.xlane.xlu0 %2336
      %vm2338 = vcmp.eq.f32.partialorder %v2335, %v2337
      %v2339 = vsel %vm2338, %v2334, inf
      %2340 = vmin.xlane.f32.xlu0 %v2339
      %v2341 = vpop.xlane.xlu0 %2340
      %v2342 = vcvt.f32.s32 %v2341
      %v2343 = vcvt.f32.s32 %v2337
      %v2344 = vshll.u32 %v2343, 16
      %v2345 = vadd.s32 %v2344, %v2342
      %v2346 = vsel %vm1930, %v2076, 2147483647
      %v2347 = vand.u32 %v2346, 65535
      %v2348 = vshra.s32 %v2346, 16
      %v2349 = vcvt.s32.f32 %v2347
      %v2350 = vcvt.s32.f32 %v2348
      %2351 = vmin.xlane.f32.xlu0 %v2350
      %v2352 = vpop.xlane.xlu0 %2351
      %vm2353 = vcmp.eq.f32.partialorder %v2350, %v2352
      %v2354 = vsel %vm2353, %v2349, inf
      %2355 = vmin.xlane.f32.xlu0 %v2354
      %v2356 = vpop.xlane.xlu0 %2355
      %v2357 = vcvt.f32.s32 %v2356
      %v2358 = vcvt.f32.s32 %v2352
      %v2359 = vshll.u32 %v2358, 16
      %v2360 = vadd.s32 %v2359, %v2357
      %v2361 = vsel %vm1930, %v2077, 2147483647
      %v2362 = vand.u32 %v2361, 65535
      %v2363 = vshra.s32 %v2361, 16
      %v2364 = vcvt.s32.f32 %v2362
      %v2365 = vcvt.s32.f32 %v2363
      %2366 = vmin.xlane.f32.xlu0 %v2365
      %v2367 = vpop.xlane.xlu0 %2366
      %vm2368 = vcmp.eq.f32.partialorder %v2365, %v2367
      %v2369 = vsel %vm2368, %v2364, inf
      %2370 = vmin.xlane.f32.xlu0 %v2369
      %v2371 = vpop.xlane.xlu0 %2370
      %v2372 = vcvt.f32.s32 %v2371
      %v2373 = vcvt.f32.s32 %v2367
      %v2374 = vshll.u32 %v2373, 16
      %v2375 = vadd.s32 %v2374, %v2372
      %v2376 = vsel %vm1930, %v2078, 2147483647
      %v2377 = vand.u32 %v2376, 65535
      %v2378 = vshra.s32 %v2376, 16
      %v2379 = vcvt.s32.f32 %v2377
      %v2380 = vcvt.s32.f32 %v2378
      %2381 = vmin.xlane.f32.xlu0 %v2380
      %v2382 = vpop.xlane.xlu0 %2381
      %vm2383 = vcmp.eq.f32.partialorder %v2380, %v2382
      %v2384 = vsel %vm2383, %v2379, inf
      %2385 = vmin.xlane.f32.xlu0 %v2384
      %v2386 = vpop.xlane.xlu0 %2385
      %v2387 = vcvt.f32.s32 %v2386
      %v2388 = vcvt.f32.s32 %v2382
      %v2389 = vshll.u32 %v2388, 16
      %v2390 = vadd.s32 %v2389, %v2387
      %v2391 = vsel %vm1930, %v2079, 2147483647
      %v2392 = vand.u32 %v2391, 65535
      %v2393 = vshra.s32 %v2391, 16
      %v2394 = vcvt.s32.f32 %v2392
      %v2395 = vcvt.s32.f32 %v2393
      %2396 = vmin.xlane.f32.xlu0 %v2395
      %v2397 = vpop.xlane.xlu0 %2396
      %vm2398 = vcmp.eq.f32.partialorder %v2395, %v2397
      %v2399 = vsel %vm2398, %v2394, inf
      %2400 = vmin.xlane.f32.xlu0 %v2399
      %v2401 = vpop.xlane.xlu0 %2400
      %v2402 = vcvt.f32.s32 %v2401
      %v2403 = vcvt.f32.s32 %v2397
      %v2404 = vshll.u32 %v2403, 16
      %v2405 = vadd.s32 %v2404, %v2402
      %v2406 = vsel %vm1930, %v2080, 2147483647
      %v2407 = vand.u32 %v2406, 65535
      %v2408 = vshra.s32 %v2406, 16
      %v2409 = vcvt.s32.f32 %v2407
      %v2410 = vcvt.s32.f32 %v2408
      %2411 = vmin.xlane.f32.xlu0 %v2410
      %v2412 = vpop.xlane.xlu0 %2411
      %vm2413 = vcmp.eq.f32.partialorder %v2410, %v2412
      %v2414 = vsel %vm2413, %v2409, inf
      %2415 = vmin.xlane.f32.xlu0 %v2414
      %v2416 = vpop.xlane.xlu0 %2415
      %v2417 = vcvt.f32.s32 %v2416
      %v2418 = vcvt.f32.s32 %v2412
      %v2419 = vshll.u32 %v2418, 16
      %v2420 = vadd.s32 %v2419, %v2417
      %v2421 = vsel %vm1930, %v2081, 2147483647
      %v2422 = vand.u32 %v2421, 65535
      %v2423 = vshra.s32 %v2421, 16
      %v2424 = vcvt.s32.f32 %v2422
      %v2425 = vcvt.s32.f32 %v2423
      %2426 = vmin.xlane.f32.xlu0 %v2425
      %v2427 = vpop.xlane.xlu0 %2426
      %vm2428 = vcmp.eq.f32.partialorder %v2425, %v2427
      %v2429 = vsel %vm2428, %v2424, inf
      %2430 = vmin.xlane.f32.xlu0 %v2429
      %v2431 = vpop.xlane.xlu0 %2430
      %v2432 = vcvt.f32.s32 %v2431
      %v2433 = vcvt.f32.s32 %v2427
      %v2434 = vshll.u32 %v2433, 16
      %v2435 = vadd.s32 %v2434, %v2432
      %v2436 = vsel %vm1930, %v2082, 2147483647
      %v2437 = vand.u32 %v2436, 65535
      %v2438 = vshra.s32 %v2436, 16
      %v2439 = vcvt.s32.f32 %v2437
      %v2440 = vcvt.s32.f32 %v2438
      %2441 = vmin.xlane.f32.xlu0 %v2440
      %v2442 = vpop.xlane.xlu0 %2441
      %vm2443 = vcmp.eq.f32.partialorder %v2440, %v2442
      %v2444 = vsel %vm2443, %v2439, inf
      %2445 = vmin.xlane.f32.xlu0 %v2444
      %v2446 = vpop.xlane.xlu0 %2445
      %v2447 = vcvt.f32.s32 %v2446
      %v2448 = vcvt.f32.s32 %v2442
      %v2449 = vshll.u32 %v2448, 16
      %v2450 = vadd.s32 %v2449, %v2447
      %v2451 = vsel %vm1930, %v2083, 2147483647
      %v2452 = vand.u32 %v2451, 65535
      %v2453 = vshra.s32 %v2451, 16
      %v2454 = vcvt.s32.f32 %v2452
      %v2455 = vcvt.s32.f32 %v2453
      %2456 = vmin.xlane.f32.xlu0 %v2455
      %v2457 = vpop.xlane.xlu0 %2456
      %vm2458 = vcmp.eq.f32.partialorder %v2455, %v2457
      %v2459 = vsel %vm2458, %v2454, inf
      %2460 = vmin.xlane.f32.xlu0 %v2459
      %v2461 = vpop.xlane.xlu0 %2460
      %v2462 = vcvt.f32.s32 %v2461
      %v2463 = vcvt.f32.s32 %v2457
      %v2464 = vshll.u32 %v2463, 16
      %v2465 = vadd.s32 %v2464, %v2462
      %v2466 = vsel %vm1930, %v2084, 2147483647
      %v2467 = vand.u32 %v2466, 65535
      %v2468 = vshra.s32 %v2466, 16
      %v2469 = vcvt.s32.f32 %v2467
      %v2470 = vcvt.s32.f32 %v2468
      %2471 = vmin.xlane.f32.xlu0 %v2470
      %v2472 = vpop.xlane.xlu0 %2471
      %vm2473 = vcmp.eq.f32.partialorder %v2470, %v2472
      %v2474 = vsel %vm2473, %v2469, inf
      %2475 = vmin.xlane.f32.xlu0 %v2474
      %v2476 = vpop.xlane.xlu0 %2475
      %v2477 = vcvt.f32.s32 %v2476
      %v2478 = vcvt.f32.s32 %v2472
      %v2479 = vshll.u32 %v2478, 16
      %v2480 = vadd.s32 %v2479, %v2477
      %v2481 = vsel %vm1930, %v2085, 2147483647
      %v2482 = vand.u32 %v2481, 65535
      %v2483 = vshra.s32 %v2481, 16
      %v2484 = vcvt.s32.f32 %v2482
      %v2485 = vcvt.s32.f32 %v2483
      %2486 = vmin.xlane.f32.xlu0 %v2485
      %v2487 = vpop.xlane.xlu0 %2486
      %vm2488 = vcmp.eq.f32.partialorder %v2485, %v2487
      %v2489 = vsel %vm2488, %v2484, inf
      %2490 = vmin.xlane.f32.xlu0 %v2489
      %v2491 = vpop.xlane.xlu0 %2490
      %v2492 = vcvt.f32.s32 %v2491
      %v2493 = vcvt.f32.s32 %v2487
      %v2494 = vshll.u32 %v2493, 16
      %v2495 = vadd.s32 %v2494, %v2492
      %v2496 = vsel %vm1930, %v2086, 2147483647
      %v2497 = vand.u32 %v2496, 65535
      %v2498 = vshra.s32 %v2496, 16
      %v2499 = vcvt.s32.f32 %v2497
      %v2500 = vcvt.s32.f32 %v2498
      %2501 = vmin.xlane.f32.xlu0 %v2500
      %v2502 = vpop.xlane.xlu0 %2501
      %vm2503 = vcmp.eq.f32.partialorder %v2500, %v2502
      %v2504 = vsel %vm2503, %v2499, inf
      %2505 = vmin.xlane.f32.xlu0 %v2504
      %v2506 = vpop.xlane.xlu0 %2505
      %v2507 = vcvt.f32.s32 %v2506
      %v2508 = vcvt.f32.s32 %v2502
      %v2509 = vshll.u32 %v2508, 16
      %v2510 = vadd.s32 %v2509, %v2507
      %v2511 = vsel %vm1930, %v2087, 2147483647
      %v2512 = vand.u32 %v2511, 65535
      %v2513 = vshra.s32 %v2511, 16
      %v2514 = vcvt.s32.f32 %v2512
      %v2515 = vcvt.s32.f32 %v2513
      %2516 = vmin.xlane.f32.xlu0 %v2515
      %v2517 = vpop.xlane.xlu0 %2516
      %vm2518 = vcmp.eq.f32.partialorder %v2515, %v2517
      %v2519 = vsel %vm2518, %v2514, inf
      %2520 = vmin.xlane.f32.xlu0 %v2519
      %v2521 = vpop.xlane.xlu0 %2520
      %v2522 = vcvt.f32.s32 %v2521
      %v2523 = vcvt.f32.s32 %v2517
      %v2524 = vshll.u32 %v2523, 16
      %v2525 = vadd.s32 %v2524, %v2522
      %v2526 = vsel %vm1930, %v2088, 2147483647
      %v2527 = vand.u32 %v2526, 65535
      %v2528 = vshra.s32 %v2526, 16
      %v2529 = vcvt.s32.f32 %v2527
      %v2530 = vcvt.s32.f32 %v2528
      %2531 = vmin.xlane.f32.xlu0 %v2530
      %v2532 = vpop.xlane.xlu0 %2531
      %vm2533 = vcmp.eq.f32.partialorder %v2530, %v2532
      %v2534 = vsel %vm2533, %v2529, inf
      %2535 = vmin.xlane.f32.xlu0 %v2534
      %v2536 = vpop.xlane.xlu0 %2535
      %v2537 = vcvt.f32.s32 %v2536
      %v2538 = vcvt.f32.s32 %v2532
      %v2539 = vshll.u32 %v2538, 16
      %v2540 = vadd.s32 %v2539, %v2537
      %v2541 = vsel %vm1930, %v2089, 2147483647
      %v2542 = vand.u32 %v2541, 65535
      %v2543 = vshra.s32 %v2541, 16
      %v2544 = vcvt.s32.f32 %v2542
      %v2545 = vcvt.s32.f32 %v2543
      %2546 = vmin.xlane.f32.xlu0 %v2545
      %v2547 = vpop.xlane.xlu0 %2546
      %vm2548 = vcmp.eq.f32.partialorder %v2545, %v2547
      %v2549 = vsel %vm2548, %v2544, inf
      %2550 = vmin.xlane.f32.xlu0 %v2549
      %v2551 = vpop.xlane.xlu0 %2550
      %v2552 = vcvt.f32.s32 %v2551
      %v2553 = vcvt.f32.s32 %v2547
      %v2554 = vshll.u32 %v2553, 16
      %v2555 = vadd.s32 %v2554, %v2552
      %v2556 = vsel %vm1930, %v2090, 2147483647
      %v2557 = vand.u32 %v2556, 65535
      %v2558 = vshra.s32 %v2556, 16
      %v2559 = vcvt.s32.f32 %v2557
      %v2560 = vcvt.s32.f32 %v2558
      %2561 = vmin.xlane.f32.xlu0 %v2560
      %v2562 = vpop.xlane.xlu0 %2561
      %vm2563 = vcmp.eq.f32.partialorder %v2560, %v2562
      %v2564 = vsel %vm2563, %v2559, inf
      %2565 = vmin.xlane.f32.xlu0 %v2564
      %v2566 = vpop.xlane.xlu0 %2565
      %v2567 = vcvt.f32.s32 %v2566
      %v2568 = vcvt.f32.s32 %v2562
      %v2569 = vshll.u32 %v2568, 16
      %v2570 = vadd.s32 %v2569, %v2567
      %v2571 = vmax.f32 %v1931, %v1943
      %v2572 = vmax.f32 %v1934, %v1946
      %v2573 = vmax.f32 %v1937, %v1949
      %v2574 = vmax.f32 %v1940, %v1952
      %v2575 = vmax.f32 %v2571, %v1955
      %v2576 = vmax.f32 %v2572, %v1958
      %v2577 = vmax.f32 %v2573, %v1961
      %v2578 = vmax.f32 %v2574, %v1964
      %v2579 = vmax.f32 %v2575, %v1967
      %v2580 = vmax.f32 %v2576, %v1970
      %v2581 = vmax.f32 %v2577, %v1973
      %v2582 = vmax.f32 %v2578, %v1976
      %v2583 = vmax.f32 %v2579, %v1979
      %v2584 = vmax.f32 %v2580, %v1982
      %v2585 = vmax.f32 %v2581, %v1985
      %v2586 = vmax.f32 %v2582, %v1988
      %v2587 = vmax.f32 %v2583, %v1991
      %v2588 = vmax.f32 %v2584, %v1994
      %v2589 = vmax.f32 %v2585, %v1997
      %v2590 = vmax.f32 %v2586, %v2000
      %v2591 = vmax.f32 %v2587, %v2003
      %v2592 = vmax.f32 %v2588, %v2006
      %v2593 = vmax.f32 %v2589, %v2009
      %v2594 = vmax.f32 %v2590, %v2012
      %v2595 = vmax.f32 %v2591, %v2015
      %v2596 = vmax.f32 %v2592, %v2018
      %v2597 = vmax.f32 %v2593, %v2021
      %v2598 = vmax.f32 %v2594, %v2024
      %v2599 = vmax.f32 %v2595, %v2596
      %v2600 = vmax.f32 %v2597, %v2598
      %v2601 = vmax.f32 %v2599, %v2600
      %v2602 = vrot.slane %v2601, 4
      %v2603 = vmax.f32 %v2601, %v2602
      %v2604 = vrot.slane %v2603, 2
      %v2605 = vmax.f32 %v2603, %v2604
      %v2606 = vrot.slane %v2605, 1
      %v2607 = vmax.f32 %v2605, %v2606
      %vm2608 = vcmp.ge.f32.partialorder %v1832, %v2607
      %vm2609 = vcmp.ge.f32.partialorder %v1834, %v2607
      %vm2610 = vcmp.ge.f32.partialorder %v1836, %v2607
      %vm2611 = vcmp.ge.f32.partialorder %v1838, %v2607
      %vm2612 = vcmp.ge.f32.partialorder %v1840, %v2607
      %vm2613 = vcmp.ge.f32.partialorder %v1842, %v2607
      %vm2614 = vcmp.ge.f32.partialorder %v1844, %v2607
      %vm2615 = vcmp.ge.f32.partialorder %v1846, %v2607
      %vm2616 = vcmp.ge.f32.partialorder %v1848, %v2607
      %vm2617 = vcmp.ge.f32.partialorder %v1850, %v2607
      %vm2618 = vcmp.ge.f32.partialorder %v1852, %v2607
      %vm2619 = vcmp.ge.f32.partialorder %v1854, %v2607
      %vm2620 = vcmp.ge.f32.partialorder %v1856, %v2607
      %vm2621 = vcmp.ge.f32.partialorder %v1858, %v2607
      %vm2622 = vcmp.ge.f32.partialorder %v1860, %v2607
      %vm2623 = vcmp.ge.f32.partialorder %v1862, %v2607
      %vm2624 = vcmp.ge.f32.partialorder %v1864, %v2607
      %vm2625 = vcmp.ge.f32.partialorder %v1866, %v2607
      %vm2626 = vcmp.ge.f32.partialorder %v1868, %v2607
      %vm2627 = vcmp.ge.f32.partialorder %v1870, %v2607
      %vm2628 = vcmp.ge.f32.partialorder %v1872, %v2607
      %vm2629 = vcmp.ge.f32.partialorder %v1874, %v2607
      %vm2630 = vcmp.ge.f32.partialorder %v1876, %v2607
      %vm2631 = vcmp.ge.f32.partialorder %v1878, %v2607
      %vm2632 = vcmp.ge.f32.partialorder %v1880, %v2607
      %vm2633 = vcmp.ge.f32.partialorder %v1882, %v2607
      %vm2634 = vcmp.ge.f32.partialorder %v1884, %v2607
      %vm2635 = vcmp.ge.f32.partialorder %v1886, %v2607
      %vm2636 = vcmp.ge.f32.partialorder %v1888, %v2607
      %vm2637 = vcmp.ge.f32.partialorder %v1890, %v2607
      %vm2638 = vcmp.ge.f32.partialorder %v1892, %v2607
      %vm2639 = vcmp.ge.f32.partialorder %v1894, %v2607
      %v2640 = vsel %vm2608, %v1898, 256
      %v2641 = vsel %vm2609, %v1899, 256
      %v2642 = vsel %vm2610, %v1900, 256
      %v2643 = vsel %vm2611, %v1901, 256
      %v2644 = vsel %vm2612, %v1902, 256
      %v2645 = vsel %vm2613, %v1903, 256
      %v2646 = vsel %vm2614, %v1904, 256
      %v2647 = vsel %vm2615, %v1905, 256
      %v2648 = vsel %vm2616, %v1906, 256
      %v2649 = vsel %vm2617, %v1907, 256
      %v2650 = vsel %vm2618, %v1908, 256
      %v2651 = vsel %vm2619, %v1909, 256
      %v2652 = vsel %vm2620, %v1910, 256
      %v2653 = vsel %vm2621, %v1911, 256
      %v2654 = vsel %vm2622, %v1912, 256
      %v2655 = vsel %vm2623, %v1913, 256
      %v2656 = vsel %vm2624, %v1914, 256
      %v2657 = vsel %vm2625, %v1915, 256
      %v2658 = vsel %vm2626, %v1916, 256
      %v2659 = vsel %vm2627, %v1917, 256
      %v2660 = vsel %vm2628, %v1918, 256
      %v2661 = vsel %vm2629, %v1919, 256
      %v2662 = vsel %vm2630, %v1920, 256
      %v2663 = vsel %vm2631, %v1921, 256
      %v2664 = vsel %vm2632, %v1922, 256
      %v2665 = vsel %vm2633, %v1923, 256
      %v2666 = vsel %vm2634, %v1924, 256
      %v2667 = vsel %vm2635, %v1925, 256
      %v2668 = vsel %vm2636, %v1926, 256
      %v2669 = vsel %vm2637, %v1927, 256
      %v2670 = vsel %vm2638, %v1928, 256
      %v2671 = vsel %vm2639, %v1929, 256
      %v2672 = vsel %vm1930, %v2640, 2147483647
      %v2673 = vsel %vm1930, %v2641, 2147483647
      %v2674 = vsel %vm1930, %v2642, 2147483647
      %v2675 = vsel %vm1930, %v2643, 2147483647
      %v2676 = vsel %vm1930, %v2644, 2147483647
      %vm2677 = vcmp.lt.s32.totalorder %v2672, %v2676
      %v2678 = vsel %vm2677, %v2672, %v2676
      %v2679 = vsel %vm1930, %v2645, 2147483647
      %vm2680 = vcmp.lt.s32.totalorder %v2673, %v2679
      %v2681 = vsel %vm2680, %v2673, %v2679
      %v2682 = vsel %vm1930, %v2646, 2147483647
      %vm2683 = vcmp.lt.s32.totalorder %v2674, %v2682
      %v2684 = vsel %vm2683, %v2674, %v2682
      %v2685 = vsel %vm1930, %v2647, 2147483647
      %vm2686 = vcmp.lt.s32.totalorder %v2675, %v2685
      %v2687 = vsel %vm2686, %v2675, %v2685
      %v2688 = vsel %vm1930, %v2648, 2147483647
      %vm2689 = vcmp.lt.s32.totalorder %v2678, %v2688
      %v2690 = vsel %vm2689, %v2678, %v2688
      %v2691 = vsel %vm1930, %v2649, 2147483647
      %vm2692 = vcmp.lt.s32.totalorder %v2681, %v2691
      %v2693 = vsel %vm2692, %v2681, %v2691
      %v2694 = vsel %vm1930, %v2650, 2147483647
      %vm2695 = vcmp.lt.s32.totalorder %v2684, %v2694
      %v2696 = vsel %vm2695, %v2684, %v2694
      %v2697 = vsel %vm1930, %v2651, 2147483647
      %vm2698 = vcmp.lt.s32.totalorder %v2687, %v2697
      %v2699 = vsel %vm2698, %v2687, %v2697
      %v2700 = vsel %vm1930, %v2652, 2147483647
      %vm2701 = vcmp.lt.s32.totalorder %v2690, %v2700
      %v2702 = vsel %vm2701, %v2690, %v2700
      %v2703 = vsel %vm1930, %v2653, 2147483647
      %vm2704 = vcmp.lt.s32.totalorder %v2693, %v2703
      %v2705 = vsel %vm2704, %v2693, %v2703
      %v2706 = vsel %vm1930, %v2654, 2147483647
      %vm2707 = vcmp.lt.s32.totalorder %v2696, %v2706
      %v2708 = vsel %vm2707, %v2696, %v2706
      %v2709 = vsel %vm1930, %v2655, 2147483647
      %vm2710 = vcmp.lt.s32.totalorder %v2699, %v2709
      %v2711 = vsel %vm2710, %v2699, %v2709
      %v2712 = vsel %vm1930, %v2656, 2147483647
      %vm2713 = vcmp.lt.s32.totalorder %v2702, %v2712
      %v2714 = vsel %vm2713, %v2702, %v2712
      %v2715 = vsel %vm1930, %v2657, 2147483647
      %vm2716 = vcmp.lt.s32.totalorder %v2705, %v2715
      %v2717 = vsel %vm2716, %v2705, %v2715
      %v2718 = vsel %vm1930, %v2658, 2147483647
      %vm2719 = vcmp.lt.s32.totalorder %v2708, %v2718
      %v2720 = vsel %vm2719, %v2708, %v2718
      %v2721 = vsel %vm1930, %v2659, 2147483647
      %vm2722 = vcmp.lt.s32.totalorder %v2711, %v2721
      %v2723 = vsel %vm2722, %v2711, %v2721
      %v2724 = vsel %vm1930, %v2660, 2147483647
      %vm2725 = vcmp.lt.s32.totalorder %v2714, %v2724
      %v2726 = vsel %vm2725, %v2714, %v2724
      %v2727 = vsel %vm1930, %v2661, 2147483647
      %vm2728 = vcmp.lt.s32.totalorder %v2717, %v2727
      %v2729 = vsel %vm2728, %v2717, %v2727
      %v2730 = vsel %vm1930, %v2662, 2147483647
      %vm2731 = vcmp.lt.s32.totalorder %v2720, %v2730
      %v2732 = vsel %vm2731, %v2720, %v2730
      %v2733 = vsel %vm1930, %v2663, 2147483647
      %vm2734 = vcmp.lt.s32.totalorder %v2723, %v2733
      %v2735 = vsel %vm2734, %v2723, %v2733
      %v2736 = vsel %vm1930, %v2664, 2147483647
      %vm2737 = vcmp.lt.s32.totalorder %v2726, %v2736
      %v2738 = vsel %vm2737, %v2726, %v2736
      %v2739 = vsel %vm1930, %v2665, 2147483647
      %vm2740 = vcmp.lt.s32.totalorder %v2729, %v2739
      %v2741 = vsel %vm2740, %v2729, %v2739
      %v2742 = vsel %vm1930, %v2666, 2147483647
      %vm2743 = vcmp.lt.s32.totalorder %v2732, %v2742
      %v2744 = vsel %vm2743, %v2732, %v2742
      %v2745 = vsel %vm1930, %v2667, 2147483647
      %vm2746 = vcmp.lt.s32.totalorder %v2735, %v2745
      %v2747 = vsel %vm2746, %v2735, %v2745
      %v2748 = vsel %vm1930, %v2668, 2147483647
      %vm2749 = vcmp.lt.s32.totalorder %v2738, %v2748
      %v2750 = vsel %vm2749, %v2738, %v2748
      %v2751 = vsel %vm1930, %v2669, 2147483647
      %vm2752 = vcmp.lt.s32.totalorder %v2741, %v2751
      %v2753 = vsel %vm2752, %v2741, %v2751
      %v2754 = vsel %vm1930, %v2670, 2147483647
      %vm2755 = vcmp.lt.s32.totalorder %v2744, %v2754
      %v2756 = vsel %vm2755, %v2744, %v2754
      %v2757 = vsel %vm1930, %v2671, 2147483647
      %vm2758 = vcmp.lt.s32.totalorder %v2747, %v2757
      %v2759 = vsel %vm2758, %v2747, %v2757
      %vm2760 = vcmp.lt.s32.totalorder %v2750, %v2753
      %v2761 = vsel %vm2760, %v2750, %v2753
      %vm2762 = vcmp.lt.s32.totalorder %v2756, %v2759
      %v2763 = vsel %vm2762, %v2756, %v2759
      %vm2764 = vcmp.lt.s32.totalorder %v2761, %v2763
      %v2765 = vsel %vm2764, %v2761, %v2763
      %v2766 = vrot.slane %v2765, 4
      %vm2767 = vcmp.lt.s32.totalorder %v2765, %v2766
      %v2768 = vsel %vm2767, %v2765, %v2766
      %v2769 = vrot.slane %v2768, 2
      %vm2770 = vcmp.lt.s32.totalorder %v2768, %v2769
      %v2771 = vsel %vm2770, %v2768, %v2769
      %v2772 = vrot.slane %v2771, 1
      %vm2773 = vcmp.lt.s32.totalorder %v2771, %v2772
      %v2774 = vsel %vm2773, %v2771, %v2772
      %vm2775 = vcmp.eq.s32.totalorder %v1898, %v2774
      %vm2776 = vcmp.eq.s32.totalorder %v1899, %v2774
      %vm2777 = vcmp.eq.s32.totalorder %v1900, %v2774
      %vm2778 = vcmp.eq.s32.totalorder %v1901, %v2774
      %vm2779 = vcmp.eq.s32.totalorder %v1902, %v2774
      %vm2780 = vcmp.eq.s32.totalorder %v1903, %v2774
      %vm2781 = vcmp.eq.s32.totalorder %v1904, %v2774
      %vm2782 = vcmp.eq.s32.totalorder %v1905, %v2774
      %vm2783 = vcmp.eq.s32.totalorder %v1906, %v2774
      %vm2784 = vcmp.eq.s32.totalorder %v1907, %v2774
      %vm2785 = vcmp.eq.s32.totalorder %v1908, %v2774
      %vm2786 = vcmp.eq.s32.totalorder %v1909, %v2774
      %vm2787 = vcmp.eq.s32.totalorder %v1910, %v2774
      %vm2788 = vcmp.eq.s32.totalorder %v1911, %v2774
      %vm2789 = vcmp.eq.s32.totalorder %v1912, %v2774
      %vm2790 = vcmp.eq.s32.totalorder %v1913, %v2774
      %vm2791 = vcmp.eq.s32.totalorder %v1914, %v2774
      %vm2792 = vcmp.eq.s32.totalorder %v1915, %v2774
      %vm2793 = vcmp.eq.s32.totalorder %v1916, %v2774
      %vm2794 = vcmp.eq.s32.totalorder %v1917, %v2774
      %vm2795 = vcmp.eq.s32.totalorder %v1918, %v2774
      %vm2796 = vcmp.eq.s32.totalorder %v1919, %v2774
      %vm2797 = vcmp.eq.s32.totalorder %v1920, %v2774
      %vm2798 = vcmp.eq.s32.totalorder %v1921, %v2774
      %vm2799 = vcmp.eq.s32.totalorder %v1922, %v2774
      %vm2800 = vcmp.eq.s32.totalorder %v1923, %v2774
      %vm2801 = vcmp.eq.s32.totalorder %v1924, %v2774
      %vm2802 = vcmp.eq.s32.totalorder %v1925, %v2774
      %vm2803 = vcmp.eq.s32.totalorder %v1926, %v2774
      %vm2804 = vcmp.eq.s32.totalorder %v1927, %v2774
      %vm2805 = vcmp.eq.s32.totalorder %v1928, %v2774
      %vm2806 = vcmp.eq.s32.totalorder %v1929, %v2774
      %v2807 = vsel %vm2775, %v1896, 4294967295
      %v2808 = vsel %vm2776, %v1896, 4294967295
      %v2809 = vsel %vm2777, %v1896, 4294967295
      %v2810 = vsel %vm2778, %v1896, 4294967295
      %v2811 = vsel %vm2779, %v1896, 4294967295
      %v2812 = vsel %vm2780, %v1896, 4294967295
      %v2813 = vsel %vm2781, %v1896, 4294967295
      %v2814 = vsel %vm2782, %v1896, 4294967295
      %v2815 = vsel %vm2783, %v1896, 4294967295
      %v2816 = vsel %vm2784, %v1896, 4294967295
      %v2817 = vsel %vm2785, %v1896, 4294967295
      %v2818 = vsel %vm2786, %v1896, 4294967295
      %v2819 = vsel %vm2787, %v1896, 4294967295
      %v2820 = vsel %vm2788, %v1896, 4294967295
      %v2821 = vsel %vm2789, %v1896, 4294967295
      %v2822 = vsel %vm2790, %v1896, 4294967295
      %v2823 = vsel %vm2791, %v1896, 4294967295
      %v2824 = vsel %vm2792, %v1896, 4294967295
      %v2825 = vsel %vm2793, %v1896, 4294967295
      %v2826 = vsel %vm2794, %v1896, 4294967295
      %v2827 = vsel %vm2795, %v1896, 4294967295
      %v2828 = vsel %vm2796, %v1896, 4294967295
      %v2829 = vsel %vm2797, %v1896, 4294967295
      %v2830 = vsel %vm2798, %v1896, 4294967295
      %v2831 = vsel %vm2799, %v1896, 4294967295
      %v2832 = vsel %vm2800, %v1896, 4294967295
      %v2833 = vsel %vm2801, %v1896, 4294967295
      %v2834 = vsel %vm2802, %v1896, 4294967295
      %v2835 = vsel %vm2803, %v1896, 4294967295
      %v2836 = vsel %vm2804, %v1896, 4294967295
      %v2837 = vsel %vm2805, %v1896, 4294967295
      %v2838 = vsel %vm2806, %v1896, 4294967295
      %v2839 = vsel %vm1930, %v2807, 2147483648
      %v2840 = vand.u32 %v2839, 65535
      %v2841 = vshra.s32 %v2839, 16
      %v2842 = vcvt.s32.f32 %v2840
      %v2843 = vcvt.s32.f32 %v2841
      %2844 = vmax.xlane.f32.xlu0 %v2843
      %v2845 = vpop.xlane.xlu0 %2844
      %vm2846 = vcmp.eq.f32.partialorder %v2843, %v2845
      %v2847 = vsel %vm2846, %v2842, -inf
      %2848 = vmax.xlane.f32.xlu0 %v2847
      %v2849 = vpop.xlane.xlu0 %2848
      %v2850 = vcvt.f32.s32 %v2849
      %v2851 = vcvt.f32.s32 %v2845
      %v2852 = vshll.u32 %v2851, 16
      %v2853 = vadd.s32 %v2852, %v2850
      %v2854 = vsel %vm1930, %v2808, 2147483648
      %v2855 = vand.u32 %v2854, 65535
      %v2856 = vshra.s32 %v2854, 16
      %v2857 = vcvt.s32.f32 %v2855
      %v2858 = vcvt.s32.f32 %v2856
      %2859 = vmax.xlane.f32.xlu0 %v2858
      %v2860 = vpop.xlane.xlu0 %2859
      %vm2861 = vcmp.eq.f32.partialorder %v2858, %v2860
      %v2862 = vsel %vm2861, %v2857, -inf
      %2863 = vmax.xlane.f32.xlu0 %v2862
      %v2864 = vpop.xlane.xlu0 %2863
      %v2865 = vcvt.f32.s32 %v2864
      %v2866 = vcvt.f32.s32 %v2860
      %v2867 = vshll.u32 %v2866, 16
      %v2868 = vadd.s32 %v2867, %v2865
      %v2869 = vsel %vm1930, %v2809, 2147483648
      %v2870 = vand.u32 %v2869, 65535
      %v2871 = vshra.s32 %v2869, 16
      %v2872 = vcvt.s32.f32 %v2870
      %v2873 = vcvt.s32.f32 %v2871
      %2874 = vmax.xlane.f32.xlu0 %v2873
      %v2875 = vpop.xlane.xlu0 %2874
      %vm2876 = vcmp.eq.f32.partialorder %v2873, %v2875
      %v2877 = vsel %vm2876, %v2872, -inf
      %2878 = vmax.xlane.f32.xlu0 %v2877
      %v2879 = vpop.xlane.xlu0 %2878
      %v2880 = vcvt.f32.s32 %v2879
      %v2881 = vcvt.f32.s32 %v2875
      %v2882 = vshll.u32 %v2881, 16
      %v2883 = vadd.s32 %v2882, %v2880
      %v2884 = vsel %vm1930, %v2810, 2147483648
      %v2885 = vand.u32 %v2884, 65535
      %v2886 = vshra.s32 %v2884, 16
      %v2887 = vcvt.s32.f32 %v2885
      %v2888 = vcvt.s32.f32 %v2886
      %2889 = vmax.xlane.f32.xlu0 %v2888
      %v2890 = vpop.xlane.xlu0 %2889
      %vm2891 = vcmp.eq.f32.partialorder %v2888, %v2890
      %v2892 = vsel %vm2891, %v2887, -inf
      %2893 = vmax.xlane.f32.xlu0 %v2892
      %v2894 = vpop.xlane.xlu0 %2893
      %v2895 = vcvt.f32.s32 %v2894
      %v2896 = vcvt.f32.s32 %v2890
      %v2897 = vshll.u32 %v2896, 16
      %v2898 = vadd.s32 %v2897, %v2895
      %v2899 = vsel %vm1930, %v2811, 2147483648
      %v2900 = vand.u32 %v2899, 65535
      %v2901 = vshra.s32 %v2899, 16
      %v2902 = vcvt.s32.f32 %v2900
      %v2903 = vcvt.s32.f32 %v2901
      %2904 = vmax.xlane.f32.xlu0 %v2903
      %v2905 = vpop.xlane.xlu0 %2904
      %vm2906 = vcmp.eq.f32.partialorder %v2903, %v2905
      %v2907 = vsel %vm2906, %v2902, -inf
      %2908 = vmax.xlane.f32.xlu0 %v2907
      %v2909 = vpop.xlane.xlu0 %2908
      %v2910 = vcvt.f32.s32 %v2909
      %v2911 = vcvt.f32.s32 %v2905
      %v2912 = vshll.u32 %v2911, 16
      %v2913 = vadd.s32 %v2912, %v2910
      %v2914 = vsel %vm1930, %v2812, 2147483648
      %v2915 = vand.u32 %v2914, 65535
      %v2916 = vshra.s32 %v2914, 16
      %v2917 = vcvt.s32.f32 %v2915
      %v2918 = vcvt.s32.f32 %v2916
      %2919 = vmax.xlane.f32.xlu0 %v2918
      %v2920 = vpop.xlane.xlu0 %2919
      %vm2921 = vcmp.eq.f32.partialorder %v2918, %v2920
      %v2922 = vsel %vm2921, %v2917, -inf
      %2923 = vmax.xlane.f32.xlu0 %v2922
      %v2924 = vpop.xlane.xlu0 %2923
      %v2925 = vcvt.f32.s32 %v2924
      %v2926 = vcvt.f32.s32 %v2920
      %v2927 = vshll.u32 %v2926, 16
      %v2928 = vadd.s32 %v2927, %v2925
      %v2929 = vsel %vm1930, %v2813, 2147483648
      %v2930 = vand.u32 %v2929, 65535
      %v2931 = vshra.s32 %v2929, 16
      %v2932 = vcvt.s32.f32 %v2930
      %v2933 = vcvt.s32.f32 %v2931
      %2934 = vmax.xlane.f32.xlu0 %v2933
      %v2935 = vpop.xlane.xlu0 %2934
      %vm2936 = vcmp.eq.f32.partialorder %v2933, %v2935
      %v2937 = vsel %vm2936, %v2932, -inf
      %2938 = vmax.xlane.f32.xlu0 %v2937
      %v2939 = vpop.xlane.xlu0 %2938
      %v2940 = vcvt.f32.s32 %v2939
      %v2941 = vcvt.f32.s32 %v2935
      %v2942 = vshll.u32 %v2941, 16
      %v2943 = vadd.s32 %v2942, %v2940
      %v2944 = vsel %vm1930, %v2814, 2147483648
      %v2945 = vand.u32 %v2944, 65535
      %v2946 = vshra.s32 %v2944, 16
      %v2947 = vcvt.s32.f32 %v2945
      %v2948 = vcvt.s32.f32 %v2946
      %2949 = vmax.xlane.f32.xlu0 %v2948
      %v2950 = vpop.xlane.xlu0 %2949
      %vm2951 = vcmp.eq.f32.partialorder %v2948, %v2950
      %v2952 = vsel %vm2951, %v2947, -inf
      %2953 = vmax.xlane.f32.xlu0 %v2952
      %v2954 = vpop.xlane.xlu0 %2953
      %v2955 = vcvt.f32.s32 %v2954
      %v2956 = vcvt.f32.s32 %v2950
      %v2957 = vshll.u32 %v2956, 16
      %v2958 = vadd.s32 %v2957, %v2955
      %v2959 = vsel %vm1930, %v2815, 2147483648
      %v2960 = vand.u32 %v2959, 65535
      %v2961 = vshra.s32 %v2959, 16
      %v2962 = vcvt.s32.f32 %v2960
      %v2963 = vcvt.s32.f32 %v2961
      %2964 = vmax.xlane.f32.xlu0 %v2963
      %v2965 = vpop.xlane.xlu0 %2964
      %vm2966 = vcmp.eq.f32.partialorder %v2963, %v2965
      %v2967 = vsel %vm2966, %v2962, -inf
      %2968 = vmax.xlane.f32.xlu0 %v2967
      %v2969 = vpop.xlane.xlu0 %2968
      %v2970 = vcvt.f32.s32 %v2969
      %v2971 = vcvt.f32.s32 %v2965
      %v2972 = vshll.u32 %v2971, 16
      %v2973 = vadd.s32 %v2972, %v2970
      %v2974 = vsel %vm1930, %v2816, 2147483648
      %v2975 = vand.u32 %v2974, 65535
      %v2976 = vshra.s32 %v2974, 16
      %v2977 = vcvt.s32.f32 %v2975
      %v2978 = vcvt.s32.f32 %v2976
      %2979 = vmax.xlane.f32.xlu0 %v2978
      %v2980 = vpop.xlane.xlu0 %2979
      %vm2981 = vcmp.eq.f32.partialorder %v2978, %v2980
      %v2982 = vsel %vm2981, %v2977, -inf
      %2983 = vmax.xlane.f32.xlu0 %v2982
      %v2984 = vpop.xlane.xlu0 %2983
      %v2985 = vcvt.f32.s32 %v2984
      %v2986 = vcvt.f32.s32 %v2980
      %v2987 = vshll.u32 %v2986, 16
      %v2988 = vadd.s32 %v2987, %v2985
      %v2989 = vsel %vm1930, %v2817, 2147483648
      %v2990 = vand.u32 %v2989, 65535
      %v2991 = vshra.s32 %v2989, 16
      %v2992 = vcvt.s32.f32 %v2990
      %v2993 = vcvt.s32.f32 %v2991
      %2994 = vmax.xlane.f32.xlu0 %v2993
      %v2995 = vpop.xlane.xlu0 %2994
      %vm2996 = vcmp.eq.f32.partialorder %v2993, %v2995
      %v2997 = vsel %vm2996, %v2992, -inf
      %2998 = vmax.xlane.f32.xlu0 %v2997
      %v2999 = vpop.xlane.xlu0 %2998
      %v3000 = vcvt.f32.s32 %v2999
      %v3001 = vcvt.f32.s32 %v2995
      %v3002 = vshll.u32 %v3001, 16
      %v3003 = vadd.s32 %v3002, %v3000
      %v3004 = vsel %vm1930, %v2818, 2147483648
      %v3005 = vand.u32 %v3004, 65535
      %v3006 = vshra.s32 %v3004, 16
      %v3007 = vcvt.s32.f32 %v3005
      %v3008 = vcvt.s32.f32 %v3006
      %3009 = vmax.xlane.f32.xlu0 %v3008
      %v3010 = vpop.xlane.xlu0 %3009
      %vm3011 = vcmp.eq.f32.partialorder %v3008, %v3010
      %v3012 = vsel %vm3011, %v3007, -inf
      %3013 = vmax.xlane.f32.xlu0 %v3012
      %v3014 = vpop.xlane.xlu0 %3013
      %v3015 = vcvt.f32.s32 %v3014
      %v3016 = vcvt.f32.s32 %v3010
      %v3017 = vshll.u32 %v3016, 16
      %v3018 = vadd.s32 %v3017, %v3015
      %v3019 = vsel %vm1930, %v2819, 2147483648
      %v3020 = vand.u32 %v3019, 65535
      %v3021 = vshra.s32 %v3019, 16
      %v3022 = vcvt.s32.f32 %v3020
      %v3023 = vcvt.s32.f32 %v3021
      %3024 = vmax.xlane.f32.xlu0 %v3023
      %v3025 = vpop.xlane.xlu0 %3024
      %vm3026 = vcmp.eq.f32.partialorder %v3023, %v3025
      %v3027 = vsel %vm3026, %v3022, -inf
      %3028 = vmax.xlane.f32.xlu0 %v3027
      %v3029 = vpop.xlane.xlu0 %3028
      %v3030 = vcvt.f32.s32 %v3029
      %v3031 = vcvt.f32.s32 %v3025
      %v3032 = vshll.u32 %v3031, 16
      %v3033 = vadd.s32 %v3032, %v3030
      %v3034 = vsel %vm1930, %v2820, 2147483648
      %v3035 = vand.u32 %v3034, 65535
      %v3036 = vshra.s32 %v3034, 16
      %v3037 = vcvt.s32.f32 %v3035
      %v3038 = vcvt.s32.f32 %v3036
      %3039 = vmax.xlane.f32.xlu0 %v3038
      %v3040 = vpop.xlane.xlu0 %3039
      %vm3041 = vcmp.eq.f32.partialorder %v3038, %v3040
      %v3042 = vsel %vm3041, %v3037, -inf
      %3043 = vmax.xlane.f32.xlu0 %v3042
      %v3044 = vpop.xlane.xlu0 %3043
      %v3045 = vcvt.f32.s32 %v3044
      %v3046 = vcvt.f32.s32 %v3040
      %v3047 = vshll.u32 %v3046, 16
      %v3048 = vadd.s32 %v3047, %v3045
      %v3049 = vsel %vm1930, %v2821, 2147483648
      %v3050 = vand.u32 %v3049, 65535
      %v3051 = vshra.s32 %v3049, 16
      %v3052 = vcvt.s32.f32 %v3050
      %v3053 = vcvt.s32.f32 %v3051
      %3054 = vmax.xlane.f32.xlu0 %v3053
      %v3055 = vpop.xlane.xlu0 %3054
      %vm3056 = vcmp.eq.f32.partialorder %v3053, %v3055
      %v3057 = vsel %vm3056, %v3052, -inf
      %3058 = vmax.xlane.f32.xlu0 %v3057
      %v3059 = vpop.xlane.xlu0 %3058
      %v3060 = vcvt.f32.s32 %v3059
      %v3061 = vcvt.f32.s32 %v3055
      %v3062 = vshll.u32 %v3061, 16
      %v3063 = vadd.s32 %v3062, %v3060
      %v3064 = vsel %vm1930, %v2822, 2147483648
      %v3065 = vand.u32 %v3064, 65535
      %v3066 = vshra.s32 %v3064, 16
      %v3067 = vcvt.s32.f32 %v3065
      %v3068 = vcvt.s32.f32 %v3066
      %3069 = vmax.xlane.f32.xlu0 %v3068
      %v3070 = vpop.xlane.xlu0 %3069
      %vm3071 = vcmp.eq.f32.partialorder %v3068, %v3070
      %v3072 = vsel %vm3071, %v3067, -inf
      %3073 = vmax.xlane.f32.xlu0 %v3072
      %v3074 = vpop.xlane.xlu0 %3073
      %v3075 = vcvt.f32.s32 %v3074
      %v3076 = vcvt.f32.s32 %v3070
      %v3077 = vshll.u32 %v3076, 16
      %v3078 = vadd.s32 %v3077, %v3075
      %v3079 = vsel %vm1930, %v2823, 2147483648
      %v3080 = vand.u32 %v3079, 65535
      %v3081 = vshra.s32 %v3079, 16
      %v3082 = vcvt.s32.f32 %v3080
      %v3083 = vcvt.s32.f32 %v3081
      %3084 = vmax.xlane.f32.xlu0 %v3083
      %v3085 = vpop.xlane.xlu0 %3084
      %vm3086 = vcmp.eq.f32.partialorder %v3083, %v3085
      %v3087 = vsel %vm3086, %v3082, -inf
      %3088 = vmax.xlane.f32.xlu0 %v3087
      %v3089 = vpop.xlane.xlu0 %3088
      %v3090 = vcvt.f32.s32 %v3089
      %v3091 = vcvt.f32.s32 %v3085
      %v3092 = vshll.u32 %v3091, 16
      %v3093 = vadd.s32 %v3092, %v3090
      %v3094 = vsel %vm1930, %v2824, 2147483648
      %v3095 = vand.u32 %v3094, 65535
      %v3096 = vshra.s32 %v3094, 16
      %v3097 = vcvt.s32.f32 %v3095
      %v3098 = vcvt.s32.f32 %v3096
      %3099 = vmax.xlane.f32.xlu0 %v3098
      %v3100 = vpop.xlane.xlu0 %3099
      %vm3101 = vcmp.eq.f32.partialorder %v3098, %v3100
      %v3102 = vsel %vm3101, %v3097, -inf
      %3103 = vmax.xlane.f32.xlu0 %v3102
      %v3104 = vpop.xlane.xlu0 %3103
      %v3105 = vcvt.f32.s32 %v3104
      %v3106 = vcvt.f32.s32 %v3100
      %v3107 = vshll.u32 %v3106, 16
      %v3108 = vadd.s32 %v3107, %v3105
      %v3109 = vsel %vm1930, %v2825, 2147483648
      %v3110 = vand.u32 %v3109, 65535
      %v3111 = vshra.s32 %v3109, 16
      %v3112 = vcvt.s32.f32 %v3110
      %v3113 = vcvt.s32.f32 %v3111
      %3114 = vmax.xlane.f32.xlu0 %v3113
      %v3115 = vpop.xlane.xlu0 %3114
      %vm3116 = vcmp.eq.f32.partialorder %v3113, %v3115
      %v3117 = vsel %vm3116, %v3112, -inf
      %3118 = vmax.xlane.f32.xlu0 %v3117
      %v3119 = vpop.xlane.xlu0 %3118
      %v3120 = vcvt.f32.s32 %v3119
      %v3121 = vcvt.f32.s32 %v3115
      %v3122 = vshll.u32 %v3121, 16
      %v3123 = vadd.s32 %v3122, %v3120
      %v3124 = vsel %vm1930, %v2826, 2147483648
      %v3125 = vand.u32 %v3124, 65535
      %v3126 = vshra.s32 %v3124, 16
      %v3127 = vcvt.s32.f32 %v3125
      %v3128 = vcvt.s32.f32 %v3126
      %3129 = vmax.xlane.f32.xlu0 %v3128
      %v3130 = vpop.xlane.xlu0 %3129
      %vm3131 = vcmp.eq.f32.partialorder %v3128, %v3130
      %v3132 = vsel %vm3131, %v3127, -inf
      %3133 = vmax.xlane.f32.xlu0 %v3132
      %v3134 = vpop.xlane.xlu0 %3133
      %v3135 = vcvt.f32.s32 %v3134
      %v3136 = vcvt.f32.s32 %v3130
      %v3137 = vshll.u32 %v3136, 16
      %v3138 = vadd.s32 %v3137, %v3135
      %v3139 = vsel %vm1930, %v2827, 2147483648
      %v3140 = vand.u32 %v3139, 65535
      %v3141 = vshra.s32 %v3139, 16
      %v3142 = vcvt.s32.f32 %v3140
      %v3143 = vcvt.s32.f32 %v3141
      %3144 = vmax.xlane.f32.xlu0 %v3143
      %v3145 = vpop.xlane.xlu0 %3144
      %vm3146 = vcmp.eq.f32.partialorder %v3143, %v3145
      %v3147 = vsel %vm3146, %v3142, -inf
      %3148 = vmax.xlane.f32.xlu0 %v3147
      %v3149 = vpop.xlane.xlu0 %3148
      %v3150 = vcvt.f32.s32 %v3149
      %v3151 = vcvt.f32.s32 %v3145
      %v3152 = vshll.u32 %v3151, 16
      %v3153 = vadd.s32 %v3152, %v3150
      %v3154 = vsel %vm1930, %v2828, 2147483648
      %v3155 = vand.u32 %v3154, 65535
      %v3156 = vshra.s32 %v3154, 16
      %v3157 = vcvt.s32.f32 %v3155
      %v3158 = vcvt.s32.f32 %v3156
      %3159 = vmax.xlane.f32.xlu0 %v3158
      %v3160 = vpop.xlane.xlu0 %3159
      %vm3161 = vcmp.eq.f32.partialorder %v3158, %v3160
      %v3162 = vsel %vm3161, %v3157, -inf
      %3163 = vmax.xlane.f32.xlu0 %v3162
      %v3164 = vpop.xlane.xlu0 %3163
      %v3165 = vcvt.f32.s32 %v3164
      %v3166 = vcvt.f32.s32 %v3160
      %v3167 = vshll.u32 %v3166, 16
      %v3168 = vadd.s32 %v3167, %v3165
      %v3169 = vsel %vm1930, %v2829, 2147483648
      %v3170 = vand.u32 %v3169, 65535
      %v3171 = vshra.s32 %v3169, 16
      %v3172 = vcvt.s32.f32 %v3170
      %v3173 = vcvt.s32.f32 %v3171
      %3174 = vmax.xlane.f32.xlu0 %v3173
      %v3175 = vpop.xlane.xlu0 %3174
      %vm3176 = vcmp.eq.f32.partialorder %v3173, %v3175
      %v3177 = vsel %vm3176, %v3172, -inf
      %3178 = vmax.xlane.f32.xlu0 %v3177
      %v3179 = vpop.xlane.xlu0 %3178
      %v3180 = vcvt.f32.s32 %v3179
      %v3181 = vcvt.f32.s32 %v3175
      %v3182 = vshll.u32 %v3181, 16
      %v3183 = vadd.s32 %v3182, %v3180
      %v3184 = vsel %vm1930, %v2830, 2147483648
      %v3185 = vand.u32 %v3184, 65535
      %v3186 = vshra.s32 %v3184, 16
      %v3187 = vcvt.s32.f32 %v3185
      %v3188 = vcvt.s32.f32 %v3186
      %3189 = vmax.xlane.f32.xlu0 %v3188
      %v3190 = vpop.xlane.xlu0 %3189
      %vm3191 = vcmp.eq.f32.partialorder %v3188, %v3190
      %v3192 = vsel %vm3191, %v3187, -inf
      %3193 = vmax.xlane.f32.xlu0 %v3192
      %v3194 = vpop.xlane.xlu0 %3193
      %v3195 = vcvt.f32.s32 %v3194
      %v3196 = vcvt.f32.s32 %v3190
      %v3197 = vshll.u32 %v3196, 16
      %v3198 = vadd.s32 %v3197, %v3195
      %v3199 = vsel %vm1930, %v2831, 2147483648
      %v3200 = vand.u32 %v3199, 65535
      %v3201 = vshra.s32 %v3199, 16
      %v3202 = vcvt.s32.f32 %v3200
      %v3203 = vcvt.s32.f32 %v3201
      %3204 = vmax.xlane.f32.xlu0 %v3203
      %v3205 = vpop.xlane.xlu0 %3204
      %vm3206 = vcmp.eq.f32.partialorder %v3203, %v3205
      %v3207 = vsel %vm3206, %v3202, -inf
      %3208 = vmax.xlane.f32.xlu0 %v3207
      %v3209 = vpop.xlane.xlu0 %3208
      %v3210 = vcvt.f32.s32 %v3209
      %v3211 = vcvt.f32.s32 %v3205
      %v3212 = vshll.u32 %v3211, 16
      %v3213 = vadd.s32 %v3212, %v3210
      %v3214 = vsel %vm1930, %v2832, 2147483648
      %v3215 = vand.u32 %v3214, 65535
      %v3216 = vshra.s32 %v3214, 16
      %v3217 = vcvt.s32.f32 %v3215
      %v3218 = vcvt.s32.f32 %v3216
      %3219 = vmax.xlane.f32.xlu0 %v3218
      %v3220 = vpop.xlane.xlu0 %3219
      %vm3221 = vcmp.eq.f32.partialorder %v3218, %v3220
      %v3222 = vsel %vm3221, %v3217, -inf
      %3223 = vmax.xlane.f32.xlu0 %v3222
      %v3224 = vpop.xlane.xlu0 %3223
      %v3225 = vcvt.f32.s32 %v3224
      %v3226 = vcvt.f32.s32 %v3220
      %v3227 = vshll.u32 %v3226, 16
      %v3228 = vadd.s32 %v3227, %v3225
      %v3229 = vsel %vm1930, %v2833, 2147483648
      %v3230 = vand.u32 %v3229, 65535
      %v3231 = vshra.s32 %v3229, 16
      %v3232 = vcvt.s32.f32 %v3230
      %v3233 = vcvt.s32.f32 %v3231
      %3234 = vmax.xlane.f32.xlu0 %v3233
      %v3235 = vpop.xlane.xlu0 %3234
      %vm3236 = vcmp.eq.f32.partialorder %v3233, %v3235
      %v3237 = vsel %vm3236, %v3232, -inf
      %3238 = vmax.xlane.f32.xlu0 %v3237
      %v3239 = vpop.xlane.xlu0 %3238
      %v3240 = vcvt.f32.s32 %v3239
      %v3241 = vcvt.f32.s32 %v3235
      %v3242 = vshll.u32 %v3241, 16
      %v3243 = vadd.s32 %v3242, %v3240
      %v3244 = vsel %vm1930, %v2834, 2147483648
      %v3245 = vand.u32 %v3244, 65535
      %v3246 = vshra.s32 %v3244, 16
      %v3247 = vcvt.s32.f32 %v3245
      %v3248 = vcvt.s32.f32 %v3246
      %3249 = vmax.xlane.f32.xlu0 %v3248
      %v3250 = vpop.xlane.xlu0 %3249
      %vm3251 = vcmp.eq.f32.partialorder %v3248, %v3250
      %v3252 = vsel %vm3251, %v3247, -inf
      %3253 = vmax.xlane.f32.xlu0 %v3252
      %v3254 = vpop.xlane.xlu0 %3253
      %v3255 = vcvt.f32.s32 %v3254
      %v3256 = vcvt.f32.s32 %v3250
      %v3257 = vshll.u32 %v3256, 16
      %v3258 = vadd.s32 %v3257, %v3255
      %v3259 = vsel %vm1930, %v2835, 2147483648
      %v3260 = vand.u32 %v3259, 65535
      %v3261 = vshra.s32 %v3259, 16
      %v3262 = vcvt.s32.f32 %v3260
      %v3263 = vcvt.s32.f32 %v3261
      %3264 = vmax.xlane.f32.xlu0 %v3263
      %v3265 = vpop.xlane.xlu0 %3264
      %vm3266 = vcmp.eq.f32.partialorder %v3263, %v3265
      %v3267 = vsel %vm3266, %v3262, -inf
      %3268 = vmax.xlane.f32.xlu0 %v3267
      %v3269 = vpop.xlane.xlu0 %3268
      %v3270 = vcvt.f32.s32 %v3269
      %v3271 = vcvt.f32.s32 %v3265
      %v3272 = vshll.u32 %v3271, 16
      %v3273 = vadd.s32 %v3272, %v3270
      %v3274 = vsel %vm1930, %v2836, 2147483648
      %v3275 = vand.u32 %v3274, 65535
      %v3276 = vshra.s32 %v3274, 16
      %v3277 = vcvt.s32.f32 %v3275
      %v3278 = vcvt.s32.f32 %v3276
      %3279 = vmax.xlane.f32.xlu0 %v3278
      %v3280 = vpop.xlane.xlu0 %3279
      %vm3281 = vcmp.eq.f32.partialorder %v3278, %v3280
      %v3282 = vsel %vm3281, %v3277, -inf
      %3283 = vmax.xlane.f32.xlu0 %v3282
      %v3284 = vpop.xlane.xlu0 %3283
      %v3285 = vcvt.f32.s32 %v3284
      %v3286 = vcvt.f32.s32 %v3280
      %v3287 = vshll.u32 %v3286, 16
      %v3288 = vadd.s32 %v3287, %v3285
      %v3289 = vsel %vm1930, %v2837, 2147483648
      %v3290 = vand.u32 %v3289, 65535
      %v3291 = vshra.s32 %v3289, 16
      %v3292 = vcvt.s32.f32 %v3290
      %v3293 = vcvt.s32.f32 %v3291
      %3294 = vmax.xlane.f32.xlu0 %v3293
      %v3295 = vpop.xlane.xlu0 %3294
      %vm3296 = vcmp.eq.f32.partialorder %v3293, %v3295
      %v3297 = vsel %vm3296, %v3292, -inf
      %3298 = vmax.xlane.f32.xlu0 %v3297
      %v3299 = vpop.xlane.xlu0 %3298
      %v3300 = vcvt.f32.s32 %v3299
      %v3301 = vcvt.f32.s32 %v3295
      %v3302 = vshll.u32 %v3301, 16
      %v3303 = vadd.s32 %v3302, %v3300
      %v3304 = vsel %vm1930, %v2838, 2147483648
      %v3305 = vand.u32 %v3304, 65535
      %v3306 = vshra.s32 %v3304, 16
      %v3307 = vcvt.s32.f32 %v3305
      %v3308 = vcvt.s32.f32 %v3306
      %3309 = vmax.xlane.f32.xlu0 %v3308
      %v3310 = vpop.xlane.xlu0 %3309
      %vm3311 = vcmp.eq.f32.partialorder %v3308, %v3310
      %v3312 = vsel %vm3311, %v3307, -inf
      %3313 = vmax.xlane.f32.xlu0 %v3312
      %v3314 = vpop.xlane.xlu0 %3313
      %v3315 = vcvt.f32.s32 %v3314
      %v3316 = vcvt.f32.s32 %v3310
      %v3317 = vshll.u32 %v3316, 16
      %v3318 = vadd.s32 %v3317, %v3315
      %vm3319 = vcmp.ge.s32.totalorder %v2853, 0
      %vm3320 = vcmp.ge.s32.totalorder %v2868, 0
      %vm3321 = vcmp.ge.s32.totalorder %v2883, 0
      %vm3322 = vcmp.ge.s32.totalorder %v2898, 0
      %vm3323 = vcmp.ge.s32.totalorder %v2913, 0
      %vm3324 = vcmp.ge.s32.totalorder %v2928, 0
      %vm3325 = vcmp.ge.s32.totalorder %v2943, 0
      %vm3326 = vcmp.ge.s32.totalorder %v2958, 0
      %vm3327 = vcmp.ge.s32.totalorder %v2973, 0
      %vm3328 = vcmp.ge.s32.totalorder %v2988, 0
      %vm3329 = vcmp.ge.s32.totalorder %v3003, 0
      %vm3330 = vcmp.ge.s32.totalorder %v3018, 0
      %vm3331 = vcmp.ge.s32.totalorder %v3033, 0
      %vm3332 = vcmp.ge.s32.totalorder %v3048, 0
      %vm3333 = vcmp.ge.s32.totalorder %v3063, 0
      %vm3334 = vcmp.ge.s32.totalorder %v3078, 0
      %vm3335 = vcmp.ge.s32.totalorder %v3093, 0
      %vm3336 = vcmp.ge.s32.totalorder %v3108, 0
      %vm3337 = vcmp.ge.s32.totalorder %v3123, 0
      %vm3338 = vcmp.ge.s32.totalorder %v3138, 0
      %vm3339 = vcmp.ge.s32.totalorder %v3153, 0
      %vm3340 = vcmp.ge.s32.totalorder %v3168, 0
      %vm3341 = vcmp.ge.s32.totalorder %v3183, 0
      %vm3342 = vcmp.ge.s32.totalorder %v3198, 0
      %vm3343 = vcmp.ge.s32.totalorder %v3213, 0
      %vm3344 = vcmp.ge.s32.totalorder %v3228, 0
      %vm3345 = vcmp.ge.s32.totalorder %v3243, 0
      %vm3346 = vcmp.ge.s32.totalorder %v3258, 0
      %vm3347 = vcmp.ge.s32.totalorder %v3273, 0
      %vm3348 = vcmp.ge.s32.totalorder %v3288, 0
      %vm3349 = vcmp.ge.s32.totalorder %v3303, 0
      %vm3350 = vcmp.ge.s32.totalorder %v3318, 0
      %v3351 = vsel %vm3319, %v2853, %v2105
      %v3352 = vsel %vm3320, %v2868, %v2120
      %v3353 = vsel %vm3321, %v2883, %v2135
      %v3354 = vsel %vm3322, %v2898, %v2150
      %v3355 = vsel %vm3323, %v2913, %v2165
      %v3356 = vsel %vm3324, %v2928, %v2180
      %v3357 = vsel %vm3325, %v2943, %v2195
      %v3358 = vsel %vm3326, %v2958, %v2210
      %v3359 = vsel %vm3327, %v2973, %v2225
      %v3360 = vsel %vm3328, %v2988, %v2240
      %v3361 = vsel %vm3329, %v3003, %v2255
      %v3362 = vsel %vm3330, %v3018, %v2270
      %v3363 = vsel %vm3331, %v3033, %v2285
      %v3364 = vsel %vm3332, %v3048, %v2300
      %v3365 = vsel %vm3333, %v3063, %v2315
      %v3366 = vsel %vm3334, %v3078, %v2330
      %v3367 = vsel %vm3335, %v3093, %v2345
      %v3368 = vsel %vm3336, %v3108, %v2360
      %v3369 = vsel %vm3337, %v3123, %v2375
      %v3370 = vsel %vm3338, %v3138, %v2390
      %v3371 = vsel %vm3339, %v3153, %v2405
      %v3372 = vsel %vm3340, %v3168, %v2420
      %v3373 = vsel %vm3341, %v3183, %v2435
      %v3374 = vsel %vm3342, %v3198, %v2450
      %v3375 = vsel %vm3343, %v3213, %v2465
      %v3376 = vsel %vm3344, %v3228, %v2480
      %v3377 = vsel %vm3345, %v3243, %v2495
      %v3378 = vsel %vm3346, %v3258, %v2510
      %v3379 = vsel %vm3347, %v3273, %v2525
      %v3380 = vsel %vm3348, %v3288, %v2540
      %v3381 = vsel %vm3349, %v3303, %v2555
      %v3382 = vsel %vm3350, %v3318, %v2570
      %v3383 = vsel %vm3319, 1.0, %v1933
      %v3384 = vsel %vm3320, 1.0, %v1936
      %v3385 = vsel %vm3321, 1.0, %v1939
      %v3386 = vsel %vm3322, 1.0, %v1942
      %v3387 = vsel %vm3323, 1.0, %v1945
      %v3388 = vsel %vm3324, 1.0, %v1948
      %v3389 = vsel %vm3325, 1.0, %v1951
      %v3390 = vsel %vm3326, 1.0, %v1954
      %v3391 = vsel %vm3327, 1.0, %v1957
      %v3392 = vsel %vm3328, 1.0, %v1960
      %v3393 = vsel %vm3329, 1.0, %v1963
      %v3394 = vsel %vm3330, 1.0, %v1966
      %v3395 = vsel %vm3331, 1.0, %v1969
      %v3396 = vsel %vm3332, 1.0, %v1972
      %v3397 = vsel %vm3333, 1.0, %v1975
      %v3398 = vsel %vm3334, 1.0, %v1978
      %v3399 = vsel %vm3335, 1.0, %v1981
      %v3400 = vsel %vm3336, 1.0, %v1984
      %v3401 = vsel %vm3337, 1.0, %v1987
      %v3402 = vsel %vm3338, 1.0, %v1990
      %v3403 = vsel %vm3339, 1.0, %v1993
      %v3404 = vsel %vm3340, 1.0, %v1996
      %v3405 = vsel %vm3341, 1.0, %v1999
      %v3406 = vsel %vm3342, 1.0, %v2002
      %v3407 = vsel %vm3343, 1.0, %v2005
      %v3408 = vsel %vm3344, 1.0, %v2008
      %v3409 = vsel %vm3345, 1.0, %v2011
      %v3410 = vsel %vm3346, 1.0, %v2014
      %v3411 = vsel %vm3347, 1.0, %v2017
      %v3412 = vsel %vm3348, 1.0, %v2020
      %v3413 = vsel %vm3349, 1.0, %v2023
      %v3414 = vsel %vm3350, 1.0, %v2026
      %vm3415 = vcmp.eq.s32.totalorder %v1896, %v3351
      %vm3416 = vcmp.eq.s32.totalorder %v1896, %v3352
      %vm3417 = vcmp.eq.s32.totalorder %v1896, %v3353
      %vm3418 = vcmp.eq.s32.totalorder %v1896, %v3354
      %vm3419 = vcmp.eq.s32.totalorder %v1896, %v3355
      %vm3420 = vcmp.eq.s32.totalorder %v1896, %v3356
      %vm3421 = vcmp.eq.s32.totalorder %v1896, %v3357
      %vm3422 = vcmp.eq.s32.totalorder %v1896, %v3358
      %vm3423 = vcmp.eq.s32.totalorder %v1896, %v3359
      %vm3424 = vcmp.eq.s32.totalorder %v1896, %v3360
      %vm3425 = vcmp.eq.s32.totalorder %v1896, %v3361
      %vm3426 = vcmp.eq.s32.totalorder %v1896, %v3362
      %vm3427 = vcmp.eq.s32.totalorder %v1896, %v3363
      %vm3428 = vcmp.eq.s32.totalorder %v1896, %v3364
      %vm3429 = vcmp.eq.s32.totalorder %v1896, %v3365
      %vm3430 = vcmp.eq.s32.totalorder %v1896, %v3366
      %vm3431 = vcmp.eq.s32.totalorder %v1896, %v3367
      %vm3432 = vcmp.eq.s32.totalorder %v1896, %v3368
      %vm3433 = vcmp.eq.s32.totalorder %v1896, %v3369
      %vm3434 = vcmp.eq.s32.totalorder %v1896, %v3370
      %vm3435 = vcmp.eq.s32.totalorder %v1896, %v3371
      %vm3436 = vcmp.eq.s32.totalorder %v1896, %v3372
      %vm3437 = vcmp.eq.s32.totalorder %v1896, %v3373
      %vm3438 = vcmp.eq.s32.totalorder %v1896, %v3374
      %vm3439 = vcmp.eq.s32.totalorder %v1896, %v3375
      %vm3440 = vcmp.eq.s32.totalorder %v1896, %v3376
      %vm3441 = vcmp.eq.s32.totalorder %v1896, %v3377
      %vm3442 = vcmp.eq.s32.totalorder %v1896, %v3378
      %vm3443 = vcmp.eq.s32.totalorder %v1896, %v3379
      %vm3444 = vcmp.eq.s32.totalorder %v1896, %v3380
      %vm3445 = vcmp.eq.s32.totalorder %v1896, %v3381
      %vm3446 = vcmp.eq.s32.totalorder %v1896, %v3382
      %v3447 = vld [vmem:[%s400] sm:$0x1]
      %v3448 = vlaneseq
      %v3449 = vshrl.u32 %v3448, 7
      %v3450 = vsub.s32 0, %v3449
      %v3451 = vrot.slane %v3447, %v3450
      %v3452 = vsel %vm3415, %v3451, 0
      %v3453 = vsel %vm3416, %v3451, 0
      %v3454 = vsel %vm3417, %v3451, 0
      %v3455 = vsel %vm3418, %v3451, 0
      %v3456 = vsel %vm3419, %v3451, 0
      %v3457 = vsel %vm3420, %v3451, 0
      %v3458 = vsel %vm3421, %v3451, 0
      %v3459 = vsel %vm3422, %v3451, 0
      %v3460 = vsel %vm3423, %v3451, 0
      %v3461 = vsel %vm3424, %v3451, 0
      %v3462 = vsel %vm3425, %v3451, 0
      %v3463 = vsel %vm3426, %v3451, 0
      %v3464 = vsel %vm3427, %v3451, 0
      %v3465 = vsel %vm3428, %v3451, 0
      %v3466 = vsel %vm3429, %v3451, 0
      %v3467 = vsel %vm3430, %v3451, 0
      %v3468 = vsel %vm3431, %v3451, 0
      %v3469 = vsel %vm3432, %v3451, 0
      %v3470 = vsel %vm3433, %v3451, 0
      %v3471 = vsel %vm3434, %v3451, 0
      %v3472 = vsel %vm3435, %v3451, 0
      %v3473 = vsel %vm3436, %v3451, 0
      %v3474 = vsel %vm3437, %v3451, 0
      %v3475 = vsel %vm3438, %v3451, 0
      %v3476 = vsel %vm3439, %v3451, 0
      %v3477 = vsel %vm3440, %v3451, 0
      %v3478 = vsel %vm3441, %v3451, 0
      %v3479 = vsel %vm3442, %v3451, 0
      %v3480 = vsel %vm3443, %v3451, 0
      %v3481 = vsel %vm3444, %v3451, 0
      %v3482 = vsel %vm3445, %v3451, 0
      %v3483 = vsel %vm3446, %v3451, 0
      %v3484 = vsel %vm1930, %v3452, 2147483648
      %v3485 = vand.u32 %v3484, 65535
      %v3486 = vshra.s32 %v3484, 16
      %v3487 = vcvt.s32.f32 %v3485
      %v3488 = vcvt.s32.f32 %v3486
      %3489 = vmax.xlane.f32.xlu0 %v3488
      %v3490 = vpop.xlane.xlu0 %3489
      %vm3491 = vcmp.eq.f32.partialorder %v3488, %v3490
      %v3492 = vsel %vm3491, %v3487, -inf
      %3493 = vmax.xlane.f32.xlu0 %v3492
      %v3494 = vpop.xlane.xlu0 %3493
      %v3495 = vcvt.f32.s32 %v3494
      %v3496 = vcvt.f32.s32 %v3490
      %v3497 = vshll.u32 %v3496, 16
      %v3498 = vadd.s32 %v3497, %v3495
      %v3499 = vsel %vm1930, %v3453, 2147483648
      %v3500 = vand.u32 %v3499, 65535
      %v3501 = vshra.s32 %v3499, 16
      %v3502 = vcvt.s32.f32 %v3500
      %v3503 = vcvt.s32.f32 %v3501
      %3504 = vmax.xlane.f32.xlu0 %v3503
      %v3505 = vpop.xlane.xlu0 %3504
      %vm3506 = vcmp.eq.f32.partialorder %v3503, %v3505
      %v3507 = vsel %vm3506, %v3502, -inf
      %3508 = vmax.xlane.f32.xlu0 %v3507
      %v3509 = vpop.xlane.xlu0 %3508
      %v3510 = vcvt.f32.s32 %v3509
      %v3511 = vcvt.f32.s32 %v3505
      %v3512 = vshll.u32 %v3511, 16
      %v3513 = vadd.s32 %v3512, %v3510
      %v3514 = vsel %vm1930, %v3454, 2147483648
      %v3515 = vand.u32 %v3514, 65535
      %v3516 = vshra.s32 %v3514, 16
      %v3517 = vcvt.s32.f32 %v3515
      %v3518 = vcvt.s32.f32 %v3516
      %3519 = vmax.xlane.f32.xlu0 %v3518
      %v3520 = vpop.xlane.xlu0 %3519
      %vm3521 = vcmp.eq.f32.partialorder %v3518, %v3520
      %v3522 = vsel %vm3521, %v3517, -inf
      %3523 = vmax.xlane.f32.xlu0 %v3522
      %v3524 = vpop.xlane.xlu0 %3523
      %v3525 = vcvt.f32.s32 %v3524
      %v3526 = vcvt.f32.s32 %v3520
      %v3527 = vshll.u32 %v3526, 16
      %v3528 = vadd.s32 %v3527, %v3525
      %v3529 = vsel %vm1930, %v3455, 2147483648
      %v3530 = vand.u32 %v3529, 65535
      %v3531 = vshra.s32 %v3529, 16
      %v3532 = vcvt.s32.f32 %v3530
      %v3533 = vcvt.s32.f32 %v3531
      %3534 = vmax.xlane.f32.xlu0 %v3533
      %v3535 = vpop.xlane.xlu0 %3534
      %vm3536 = vcmp.eq.f32.partialorder %v3533, %v3535
      %v3537 = vsel %vm3536, %v3532, -inf
      %3538 = vmax.xlane.f32.xlu0 %v3537
      %v3539 = vpop.xlane.xlu0 %3538
      %v3540 = vcvt.f32.s32 %v3539
      %v3541 = vcvt.f32.s32 %v3535
      %v3542 = vshll.u32 %v3541, 16
      %v3543 = vadd.s32 %v3542, %v3540
      %v3544 = vsel %vm1930, %v3456, 2147483648
      %v3545 = vand.u32 %v3544, 65535
      %v3546 = vshra.s32 %v3544, 16
      %v3547 = vcvt.s32.f32 %v3545
      %v3548 = vcvt.s32.f32 %v3546
      %3549 = vmax.xlane.f32.xlu0 %v3548
      %v3550 = vpop.xlane.xlu0 %3549
      %vm3551 = vcmp.eq.f32.partialorder %v3548, %v3550
      %v3552 = vsel %vm3551, %v3547, -inf
      %3553 = vmax.xlane.f32.xlu0 %v3552
      %v3554 = vpop.xlane.xlu0 %3553
      %v3555 = vcvt.f32.s32 %v3554
      %v3556 = vcvt.f32.s32 %v3550
      %v3557 = vshll.u32 %v3556, 16
      %v3558 = vadd.s32 %v3557, %v3555
      %v3559 = vsel %vm1930, %v3457, 2147483648
      %v3560 = vand.u32 %v3559, 65535
      %v3561 = vshra.s32 %v3559, 16
      %v3562 = vcvt.s32.f32 %v3560
      %v3563 = vcvt.s32.f32 %v3561
      %3564 = vmax.xlane.f32.xlu0 %v3563
      %v3565 = vpop.xlane.xlu0 %3564
      %vm3566 = vcmp.eq.f32.partialorder %v3563, %v3565
      %v3567 = vsel %vm3566, %v3562, -inf
      %3568 = vmax.xlane.f32.xlu0 %v3567
      %v3569 = vpop.xlane.xlu0 %3568
      %v3570 = vcvt.f32.s32 %v3569
      %v3571 = vcvt.f32.s32 %v3565
      %v3572 = vshll.u32 %v3571, 16
      %v3573 = vadd.s32 %v3572, %v3570
      %v3574 = vsel %vm1930, %v3458, 2147483648
      %v3575 = vand.u32 %v3574, 65535
      %v3576 = vshra.s32 %v3574, 16
      %v3577 = vcvt.s32.f32 %v3575
      %v3578 = vcvt.s32.f32 %v3576
      %3579 = vmax.xlane.f32.xlu0 %v3578
      %v3580 = vpop.xlane.xlu0 %3579
      %vm3581 = vcmp.eq.f32.partialorder %v3578, %v3580
      %v3582 = vsel %vm3581, %v3577, -inf
      %3583 = vmax.xlane.f32.xlu0 %v3582
      %v3584 = vpop.xlane.xlu0 %3583
      %v3585 = vcvt.f32.s32 %v3584
      %v3586 = vcvt.f32.s32 %v3580
      %v3587 = vshll.u32 %v3586, 16
      %v3588 = vadd.s32 %v3587, %v3585
      %v3589 = vsel %vm1930, %v3459, 2147483648
      %v3590 = vand.u32 %v3589, 65535
      %v3591 = vshra.s32 %v3589, 16
      %v3592 = vcvt.s32.f32 %v3590
      %v3593 = vcvt.s32.f32 %v3591
      %3594 = vmax.xlane.f32.xlu0 %v3593
      %v3595 = vpop.xlane.xlu0 %3594
      %vm3596 = vcmp.eq.f32.partialorder %v3593, %v3595
      %v3597 = vsel %vm3596, %v3592, -inf
      %3598 = vmax.xlane.f32.xlu0 %v3597
      %v3599 = vpop.xlane.xlu0 %3598
      %v3600 = vcvt.f32.s32 %v3599
      %v3601 = vcvt.f32.s32 %v3595
      %v3602 = vshll.u32 %v3601, 16
      %v3603 = vadd.s32 %v3602, %v3600
      %v3604 = vsel %vm1930, %v3460, 2147483648
      %v3605 = vand.u32 %v3604, 65535
      %v3606 = vshra.s32 %v3604, 16
      %v3607 = vcvt.s32.f32 %v3605
      %v3608 = vcvt.s32.f32 %v3606
      %3609 = vmax.xlane.f32.xlu0 %v3608
      %v3610 = vpop.xlane.xlu0 %3609
      %vm3611 = vcmp.eq.f32.partialorder %v3608, %v3610
      %v3612 = vsel %vm3611, %v3607, -inf
      %3613 = vmax.xlane.f32.xlu0 %v3612
      %v3614 = vpop.xlane.xlu0 %3613
      %v3615 = vcvt.f32.s32 %v3614
      %v3616 = vcvt.f32.s32 %v3610
      %v3617 = vshll.u32 %v3616, 16
      %v3618 = vadd.s32 %v3617, %v3615
      %v3619 = vsel %vm1930, %v3461, 2147483648
      %v3620 = vand.u32 %v3619, 65535
      %v3621 = vshra.s32 %v3619, 16
      %v3622 = vcvt.s32.f32 %v3620
      %v3623 = vcvt.s32.f32 %v3621
      %3624 = vmax.xlane.f32.xlu0 %v3623
      %v3625 = vpop.xlane.xlu0 %3624
      %vm3626 = vcmp.eq.f32.partialorder %v3623, %v3625
      %v3627 = vsel %vm3626, %v3622, -inf
      %3628 = vmax.xlane.f32.xlu0 %v3627
      %v3629 = vpop.xlane.xlu0 %3628
      %v3630 = vcvt.f32.s32 %v3629
      %v3631 = vcvt.f32.s32 %v3625
      %v3632 = vshll.u32 %v3631, 16
      %v3633 = vadd.s32 %v3632, %v3630
      %v3634 = vsel %vm1930, %v3462, 2147483648
      %v3635 = vand.u32 %v3634, 65535
      %v3636 = vshra.s32 %v3634, 16
      %v3637 = vcvt.s32.f32 %v3635
      %v3638 = vcvt.s32.f32 %v3636
      %3639 = vmax.xlane.f32.xlu0 %v3638
      %v3640 = vpop.xlane.xlu0 %3639
      %vm3641 = vcmp.eq.f32.partialorder %v3638, %v3640
      %v3642 = vsel %vm3641, %v3637, -inf
      %3643 = vmax.xlane.f32.xlu0 %v3642
      %v3644 = vpop.xlane.xlu0 %3643
      %v3645 = vcvt.f32.s32 %v3644
      %v3646 = vcvt.f32.s32 %v3640
      %v3647 = vshll.u32 %v3646, 16
      %v3648 = vadd.s32 %v3647, %v3645
      %v3649 = vsel %vm1930, %v3463, 2147483648
      %v3650 = vand.u32 %v3649, 65535
      %v3651 = vshra.s32 %v3649, 16
      %v3652 = vcvt.s32.f32 %v3650
      %v3653 = vcvt.s32.f32 %v3651
      %3654 = vmax.xlane.f32.xlu0 %v3653
      %v3655 = vpop.xlane.xlu0 %3654
      %vm3656 = vcmp.eq.f32.partialorder %v3653, %v3655
      %v3657 = vsel %vm3656, %v3652, -inf
      %3658 = vmax.xlane.f32.xlu0 %v3657
      %v3659 = vpop.xlane.xlu0 %3658
      %v3660 = vcvt.f32.s32 %v3659
      %v3661 = vcvt.f32.s32 %v3655
      %v3662 = vshll.u32 %v3661, 16
      %v3663 = vadd.s32 %v3662, %v3660
      %v3664 = vsel %vm1930, %v3464, 2147483648
      %v3665 = vand.u32 %v3664, 65535
      %v3666 = vshra.s32 %v3664, 16
      %v3667 = vcvt.s32.f32 %v3665
      %v3668 = vcvt.s32.f32 %v3666
      %3669 = vmax.xlane.f32.xlu0 %v3668
      %v3670 = vpop.xlane.xlu0 %3669
      %vm3671 = vcmp.eq.f32.partialorder %v3668, %v3670
      %v3672 = vsel %vm3671, %v3667, -inf
      %3673 = vmax.xlane.f32.xlu0 %v3672
      %v3674 = vpop.xlane.xlu0 %3673
      %v3675 = vcvt.f32.s32 %v3674
      %v3676 = vcvt.f32.s32 %v3670
      %v3677 = vshll.u32 %v3676, 16
      %v3678 = vadd.s32 %v3677, %v3675
      %v3679 = vsel %vm1930, %v3465, 2147483648
      %v3680 = vand.u32 %v3679, 65535
      %v3681 = vshra.s32 %v3679, 16
      %v3682 = vcvt.s32.f32 %v3680
      %v3683 = vcvt.s32.f32 %v3681
      %3684 = vmax.xlane.f32.xlu0 %v3683
      %v3685 = vpop.xlane.xlu0 %3684
      %vm3686 = vcmp.eq.f32.partialorder %v3683, %v3685
      %v3687 = vsel %vm3686, %v3682, -inf
      %3688 = vmax.xlane.f32.xlu0 %v3687
      %v3689 = vpop.xlane.xlu0 %3688
      %v3690 = vcvt.f32.s32 %v3689
      %v3691 = vcvt.f32.s32 %v3685
      %v3692 = vshll.u32 %v3691, 16
      %v3693 = vadd.s32 %v3692, %v3690
      %v3694 = vsel %vm1930, %v3466, 2147483648
      %v3695 = vand.u32 %v3694, 65535
      %v3696 = vshra.s32 %v3694, 16
      %v3697 = vcvt.s32.f32 %v3695
      %v3698 = vcvt.s32.f32 %v3696
      %3699 = vmax.xlane.f32.xlu0 %v3698
      %v3700 = vpop.xlane.xlu0 %3699
      %vm3701 = vcmp.eq.f32.partialorder %v3698, %v3700
      %v3702 = vsel %vm3701, %v3697, -inf
      %3703 = vmax.xlane.f32.xlu0 %v3702
      %v3704 = vpop.xlane.xlu0 %3703
      %v3705 = vcvt.f32.s32 %v3704
      %v3706 = vcvt.f32.s32 %v3700
      %v3707 = vshll.u32 %v3706, 16
      %v3708 = vadd.s32 %v3707, %v3705
      %v3709 = vsel %vm1930, %v3467, 2147483648
      %v3710 = vand.u32 %v3709, 65535
      %v3711 = vshra.s32 %v3709, 16
      %v3712 = vcvt.s32.f32 %v3710
      %v3713 = vcvt.s32.f32 %v3711
      %3714 = vmax.xlane.f32.xlu0 %v3713
      %v3715 = vpop.xlane.xlu0 %3714
      %vm3716 = vcmp.eq.f32.partialorder %v3713, %v3715
      %v3717 = vsel %vm3716, %v3712, -inf
      %3718 = vmax.xlane.f32.xlu0 %v3717
      %v3719 = vpop.xlane.xlu0 %3718
      %v3720 = vcvt.f32.s32 %v3719
      %v3721 = vcvt.f32.s32 %v3715
      %v3722 = vshll.u32 %v3721, 16
      %v3723 = vadd.s32 %v3722, %v3720
      %v3724 = vsel %vm1930, %v3468, 2147483648
      %v3725 = vand.u32 %v3724, 65535
      %v3726 = vshra.s32 %v3724, 16
      %v3727 = vcvt.s32.f32 %v3725
      %v3728 = vcvt.s32.f32 %v3726
      %3729 = vmax.xlane.f32.xlu0 %v3728
      %v3730 = vpop.xlane.xlu0 %3729
      %vm3731 = vcmp.eq.f32.partialorder %v3728, %v3730
      %v3732 = vsel %vm3731, %v3727, -inf
      %3733 = vmax.xlane.f32.xlu0 %v3732
      %v3734 = vpop.xlane.xlu0 %3733
      %v3735 = vcvt.f32.s32 %v3734
      %v3736 = vcvt.f32.s32 %v3730
      %v3737 = vshll.u32 %v3736, 16
      %v3738 = vadd.s32 %v3737, %v3735
      %v3739 = vsel %vm1930, %v3469, 2147483648
      %v3740 = vand.u32 %v3739, 65535
      %v3741 = vshra.s32 %v3739, 16
      %v3742 = vcvt.s32.f32 %v3740
      %v3743 = vcvt.s32.f32 %v3741
      %3744 = vmax.xlane.f32.xlu0 %v3743
      %v3745 = vpop.xlane.xlu0 %3744
      %vm3746 = vcmp.eq.f32.partialorder %v3743, %v3745
      %v3747 = vsel %vm3746, %v3742, -inf
      %3748 = vmax.xlane.f32.xlu0 %v3747
      %v3749 = vpop.xlane.xlu0 %3748
      %v3750 = vcvt.f32.s32 %v3749
      %v3751 = vcvt.f32.s32 %v3745
      %v3752 = vshll.u32 %v3751, 16
      %v3753 = vadd.s32 %v3752, %v3750
      %v3754 = vsel %vm1930, %v3470, 2147483648
      %v3755 = vand.u32 %v3754, 65535
      %v3756 = vshra.s32 %v3754, 16
      %v3757 = vcvt.s32.f32 %v3755
      %v3758 = vcvt.s32.f32 %v3756
      %3759 = vmax.xlane.f32.xlu0 %v3758
      %v3760 = vpop.xlane.xlu0 %3759
      %vm3761 = vcmp.eq.f32.partialorder %v3758, %v3760
      %v3762 = vsel %vm3761, %v3757, -inf
      %3763 = vmax.xlane.f32.xlu0 %v3762
      %v3764 = vpop.xlane.xlu0 %3763
      %v3765 = vcvt.f32.s32 %v3764
      %v3766 = vcvt.f32.s32 %v3760
      %v3767 = vshll.u32 %v3766, 16
      %v3768 = vadd.s32 %v3767, %v3765
      %v3769 = vsel %vm1930, %v3471, 2147483648
      %v3770 = vand.u32 %v3769, 65535
      %v3771 = vshra.s32 %v3769, 16
      %v3772 = vcvt.s32.f32 %v3770
      %v3773 = vcvt.s32.f32 %v3771
      %3774 = vmax.xlane.f32.xlu0 %v3773
      %v3775 = vpop.xlane.xlu0 %3774
      %vm3776 = vcmp.eq.f32.partialorder %v3773, %v3775
      %v3777 = vsel %vm3776, %v3772, -inf
      %3778 = vmax.xlane.f32.xlu0 %v3777
      %v3779 = vpop.xlane.xlu0 %3778
      %v3780 = vcvt.f32.s32 %v3779
      %v3781 = vcvt.f32.s32 %v3775
      %v3782 = vshll.u32 %v3781, 16
      %v3783 = vadd.s32 %v3782, %v3780
      %v3784 = vsel %vm1930, %v3472, 2147483648
      %v3785 = vand.u32 %v3784, 65535
      %v3786 = vshra.s32 %v3784, 16
      %v3787 = vcvt.s32.f32 %v3785
      %v3788 = vcvt.s32.f32 %v3786
      %3789 = vmax.xlane.f32.xlu0 %v3788
      %v3790 = vpop.xlane.xlu0 %3789
      %vm3791 = vcmp.eq.f32.partialorder %v3788, %v3790
      %v3792 = vsel %vm3791, %v3787, -inf
      %3793 = vmax.xlane.f32.xlu0 %v3792
      %v3794 = vpop.xlane.xlu0 %3793
      %v3795 = vcvt.f32.s32 %v3794
      %v3796 = vcvt.f32.s32 %v3790
      %v3797 = vshll.u32 %v3796, 16
      %v3798 = vadd.s32 %v3797, %v3795
      %v3799 = vsel %vm1930, %v3473, 2147483648
      %v3800 = vand.u32 %v3799, 65535
      %v3801 = vshra.s32 %v3799, 16
      %v3802 = vcvt.s32.f32 %v3800
      %v3803 = vcvt.s32.f32 %v3801
      %3804 = vmax.xlane.f32.xlu0 %v3803
      %v3805 = vpop.xlane.xlu0 %3804
      %vm3806 = vcmp.eq.f32.partialorder %v3803, %v3805
      %v3807 = vsel %vm3806, %v3802, -inf
      %3808 = vmax.xlane.f32.xlu0 %v3807
      %v3809 = vpop.xlane.xlu0 %3808
      %v3810 = vcvt.f32.s32 %v3809
      %v3811 = vcvt.f32.s32 %v3805
      %v3812 = vshll.u32 %v3811, 16
      %v3813 = vadd.s32 %v3812, %v3810
      %v3814 = vsel %vm1930, %v3474, 2147483648
      %v3815 = vand.u32 %v3814, 65535
      %v3816 = vshra.s32 %v3814, 16
      %v3817 = vcvt.s32.f32 %v3815
      %v3818 = vcvt.s32.f32 %v3816
      %3819 = vmax.xlane.f32.xlu0 %v3818
      %v3820 = vpop.xlane.xlu0 %3819
      %vm3821 = vcmp.eq.f32.partialorder %v3818, %v3820
      %v3822 = vsel %vm3821, %v3817, -inf
      %3823 = vmax.xlane.f32.xlu0 %v3822
      %v3824 = vpop.xlane.xlu0 %3823
      %v3825 = vcvt.f32.s32 %v3824
      %v3826 = vcvt.f32.s32 %v3820
      %v3827 = vshll.u32 %v3826, 16
      %v3828 = vadd.s32 %v3827, %v3825
      %v3829 = vsel %vm1930, %v3475, 2147483648
      %v3830 = vand.u32 %v3829, 65535
      %v3831 = vshra.s32 %v3829, 16
      %v3832 = vcvt.s32.f32 %v3830
      %v3833 = vcvt.s32.f32 %v3831
      %3834 = vmax.xlane.f32.xlu0 %v3833
      %v3835 = vpop.xlane.xlu0 %3834
      %vm3836 = vcmp.eq.f32.partialorder %v3833, %v3835
      %v3837 = vsel %vm3836, %v3832, -inf
      %3838 = vmax.xlane.f32.xlu0 %v3837
      %v3839 = vpop.xlane.xlu0 %3838
      %v3840 = vcvt.f32.s32 %v3839
      %v3841 = vcvt.f32.s32 %v3835
      %v3842 = vshll.u32 %v3841, 16
      %v3843 = vadd.s32 %v3842, %v3840
      %v3844 = vsel %vm1930, %v3476, 2147483648
      %v3845 = vand.u32 %v3844, 65535
      %v3846 = vshra.s32 %v3844, 16
      %v3847 = vcvt.s32.f32 %v3845
      %v3848 = vcvt.s32.f32 %v3846
      %3849 = vmax.xlane.f32.xlu0 %v3848
      %v3850 = vpop.xlane.xlu0 %3849
      %vm3851 = vcmp.eq.f32.partialorder %v3848, %v3850
      %v3852 = vsel %vm3851, %v3847, -inf
      %3853 = vmax.xlane.f32.xlu0 %v3852
      %v3854 = vpop.xlane.xlu0 %3853
      %v3855 = vcvt.f32.s32 %v3854
      %v3856 = vcvt.f32.s32 %v3850
      %v3857 = vshll.u32 %v3856, 16
      %v3858 = vadd.s32 %v3857, %v3855
      %v3859 = vsel %vm1930, %v3477, 2147483648
      %v3860 = vand.u32 %v3859, 65535
      %v3861 = vshra.s32 %v3859, 16
      %v3862 = vcvt.s32.f32 %v3860
      %v3863 = vcvt.s32.f32 %v3861
      %3864 = vmax.xlane.f32.xlu0 %v3863
      %v3865 = vpop.xlane.xlu0 %3864
      %vm3866 = vcmp.eq.f32.partialorder %v3863, %v3865
      %v3867 = vsel %vm3866, %v3862, -inf
      %3868 = vmax.xlane.f32.xlu0 %v3867
      %v3869 = vpop.xlane.xlu0 %3868
      %v3870 = vcvt.f32.s32 %v3869
      %v3871 = vcvt.f32.s32 %v3865
      %v3872 = vshll.u32 %v3871, 16
      %v3873 = vadd.s32 %v3872, %v3870
      %v3874 = vsel %vm1930, %v3478, 2147483648
      %v3875 = vand.u32 %v3874, 65535
      %v3876 = vshra.s32 %v3874, 16
      %v3877 = vcvt.s32.f32 %v3875
      %v3878 = vcvt.s32.f32 %v3876
      %3879 = vmax.xlane.f32.xlu0 %v3878
      %v3880 = vpop.xlane.xlu0 %3879
      %vm3881 = vcmp.eq.f32.partialorder %v3878, %v3880
      %v3882 = vsel %vm3881, %v3877, -inf
      %3883 = vmax.xlane.f32.xlu0 %v3882
      %v3884 = vpop.xlane.xlu0 %3883
      %v3885 = vcvt.f32.s32 %v3884
      %v3886 = vcvt.f32.s32 %v3880
      %v3887 = vshll.u32 %v3886, 16
      %v3888 = vadd.s32 %v3887, %v3885
      %v3889 = vsel %vm1930, %v3479, 2147483648
      %v3890 = vand.u32 %v3889, 65535
      %v3891 = vshra.s32 %v3889, 16
      %v3892 = vcvt.s32.f32 %v3890
      %v3893 = vcvt.s32.f32 %v3891
      %3894 = vmax.xlane.f32.xlu0 %v3893
      %v3895 = vpop.xlane.xlu0 %3894
      %vm3896 = vcmp.eq.f32.partialorder %v3893, %v3895
      %v3897 = vsel %vm3896, %v3892, -inf
      %3898 = vmax.xlane.f32.xlu0 %v3897
      %v3899 = vpop.xlane.xlu0 %3898
      %v3900 = vcvt.f32.s32 %v3899
      %v3901 = vcvt.f32.s32 %v3895
      %v3902 = vshll.u32 %v3901, 16
      %v3903 = vadd.s32 %v3902, %v3900
      %v3904 = vsel %vm1930, %v3480, 2147483648
      %v3905 = vand.u32 %v3904, 65535
      %v3906 = vshra.s32 %v3904, 16
      %v3907 = vcvt.s32.f32 %v3905
      %v3908 = vcvt.s32.f32 %v3906
      %3909 = vmax.xlane.f32.xlu0 %v3908
      %v3910 = vpop.xlane.xlu0 %3909
      %vm3911 = vcmp.eq.f32.partialorder %v3908, %v3910
      %v3912 = vsel %vm3911, %v3907, -inf
      %3913 = vmax.xlane.f32.xlu0 %v3912
      %v3914 = vpop.xlane.xlu0 %3913
      %v3915 = vcvt.f32.s32 %v3914
      %v3916 = vcvt.f32.s32 %v3910
      %v3917 = vshll.u32 %v3916, 16
      %v3918 = vadd.s32 %v3917, %v3915
      %v3919 = vsel %vm1930, %v3481, 2147483648
      %v3920 = vand.u32 %v3919, 65535
      %v3921 = vshra.s32 %v3919, 16
      %v3922 = vcvt.s32.f32 %v3920
      %v3923 = vcvt.s32.f32 %v3921
      %3924 = vmax.xlane.f32.xlu0 %v3923
      %v3925 = vpop.xlane.xlu0 %3924
      %vm3926 = vcmp.eq.f32.partialorder %v3923, %v3925
      %v3927 = vsel %vm3926, %v3922, -inf
      %3928 = vmax.xlane.f32.xlu0 %v3927
      %v3929 = vpop.xlane.xlu0 %3928
      %v3930 = vcvt.f32.s32 %v3929
      %v3931 = vcvt.f32.s32 %v3925
      %v3932 = vshll.u32 %v3931, 16
      %v3933 = vadd.s32 %v3932, %v3930
      %v3934 = vsel %vm1930, %v3482, 2147483648
      %v3935 = vand.u32 %v3934, 65535
      %v3936 = vshra.s32 %v3934, 16
      %v3937 = vcvt.s32.f32 %v3935
      %v3938 = vcvt.s32.f32 %v3936
      %3939 = vmax.xlane.f32.xlu0 %v3938
      %v3940 = vpop.xlane.xlu0 %3939
      %vm3941 = vcmp.eq.f32.partialorder %v3938, %v3940
      %v3942 = vsel %vm3941, %v3937, -inf
      %3943 = vmax.xlane.f32.xlu0 %v3942
      %v3944 = vpop.xlane.xlu0 %3943
      %v3945 = vcvt.f32.s32 %v3944
      %v3946 = vcvt.f32.s32 %v3940
      %v3947 = vshll.u32 %v3946, 16
      %v3948 = vadd.s32 %v3947, %v3945
      %v3949 = vsel %vm1930, %v3483, 2147483648
      %v3950 = vand.u32 %v3949, 65535
      %v3951 = vshra.s32 %v3949, 16
      %v3952 = vcvt.s32.f32 %v3950
      %v3953 = vcvt.s32.f32 %v3951
      %3954 = vmax.xlane.f32.xlu0 %v3953
      %v3955 = vpop.xlane.xlu0 %3954
      %vm3956 = vcmp.eq.f32.partialorder %v3953, %v3955
      %v3957 = vsel %vm3956, %v3952, -inf
      %3958 = vmax.xlane.f32.xlu0 %v3957
      %v3959 = vpop.xlane.xlu0 %3958
      %v3960 = vcvt.f32.s32 %v3959
      %v3961 = vcvt.f32.s32 %v3955
      %v3962 = vshll.u32 %v3961, 16
      %v3963 = vadd.s32 %v3962, %v3960
      %vm3964 = vcmp.lt.f32.partialorder %v3383, 0.5
      %vm3965 = vcmp.lt.f32.partialorder %v3384, 0.5
      %vm3966 = vcmp.lt.f32.partialorder %v3385, 0.5
      %vm3967 = vcmp.lt.f32.partialorder %v3386, 0.5
      %vm3968 = vcmp.lt.f32.partialorder %v3387, 0.5
      %vm3969 = vcmp.lt.f32.partialorder %v3388, 0.5
      %vm3970 = vcmp.lt.f32.partialorder %v3389, 0.5
      %vm3971 = vcmp.lt.f32.partialorder %v3390, 0.5
      %vm3972 = vcmp.lt.f32.partialorder %v3391, 0.5
      %vm3973 = vcmp.lt.f32.partialorder %v3392, 0.5
      %vm3974 = vcmp.lt.f32.partialorder %v3393, 0.5
      %vm3975 = vcmp.lt.f32.partialorder %v3394, 0.5
      %vm3976 = vcmp.lt.f32.partialorder %v3395, 0.5
      %vm3977 = vcmp.lt.f32.partialorder %v3396, 0.5
      %vm3978 = vcmp.lt.f32.partialorder %v3397, 0.5
      %vm3979 = vcmp.lt.f32.partialorder %v3398, 0.5
      %vm3980 = vcmp.lt.f32.partialorder %v3399, 0.5
      %vm3981 = vcmp.lt.f32.partialorder %v3400, 0.5
      %vm3982 = vcmp.lt.f32.partialorder %v3401, 0.5
      %vm3983 = vcmp.lt.f32.partialorder %v3402, 0.5
      %vm3984 = vcmp.lt.f32.partialorder %v3403, 0.5
      %vm3985 = vcmp.lt.f32.partialorder %v3404, 0.5
      %vm3986 = vcmp.lt.f32.partialorder %v3405, 0.5
      %vm3987 = vcmp.lt.f32.partialorder %v3406, 0.5
      %vm3988 = vcmp.lt.f32.partialorder %v3407, 0.5
      %vm3989 = vcmp.lt.f32.partialorder %v3408, 0.5
      %vm3990 = vcmp.lt.f32.partialorder %v3409, 0.5
      %vm3991 = vcmp.lt.f32.partialorder %v3410, 0.5
      %vm3992 = vcmp.lt.f32.partialorder %v3411, 0.5
      %vm3993 = vcmp.lt.f32.partialorder %v3412, 0.5
      %vm3994 = vcmp.lt.f32.partialorder %v3413, 0.5
      %vm3995 = vcmp.lt.f32.partialorder %v3414, 0.5
      %v3996 = vsel %vm3964, 0, %v3498
      %v3997 = vsel %vm3965, 0, %v3513
      %v3998 = vsel %vm3966, 0, %v3528
      %v3999 = vsel %vm3967, 0, %v3543
      %v4000 = vsel %vm3968, 0, %v3558
      %v4001 = vsel %vm3969, 0, %v3573
      %v4002 = vsel %vm3970, 0, %v3588
      %v4003 = vsel %vm3971, 0, %v3603
      %v4004 = vsel %vm3972, 0, %v3618
      %v4005 = vsel %vm3973, 0, %v3633
      %v4006 = vsel %vm3974, 0, %v3648
      %v4007 = vsel %vm3975, 0, %v3663
      %v4008 = vsel %vm3976, 0, %v3678
      %v4009 = vsel %vm3977, 0, %v3693
      %v4010 = vsel %vm3978, 0, %v3708
      %v4011 = vsel %vm3979, 0, %v3723
      %v4012 = vsel %vm3980, 0, %v3738
      %v4013 = vsel %vm3981, 0, %v3753
      %v4014 = vsel %vm3982, 0, %v3768
      %v4015 = vsel %vm3983, 0, %v3783
      %v4016 = vsel %vm3984, 0, %v3798
      %v4017 = vsel %vm3985, 0, %v3813
      %v4018 = vsel %vm3986, 0, %v3828
      %v4019 = vsel %vm3987, 0, %v3843
      %v4020 = vsel %vm3988, 0, %v3858
      %v4021 = vsel %vm3989, 0, %v3873
      %v4022 = vsel %vm3990, 0, %v3888
      %v4023 = vsel %vm3991, 0, %v3903
      %v4024 = vsel %vm3992, 0, %v3918
      %v4025 = vsel %vm3993, 0, %v3933
      %v4026 = vsel %vm3994, 0, %v3948
      %v4027 = vsel %vm3995, 0, %v3963
      %vm4028 = vcmask 7168
      %4029 = vst.msk [vmem:[%s415] sm:$0xff] %vm4028, %v3996
      %4030 = vst.msk [vmem:[%s415 + $0x8] sm:$0xff] %vm4028, %v3997
      %4031 = vst.msk [vmem:[%s415 + $0x10] sm:$0xff] %vm4028, %v3998
      %4032 = vst.msk [vmem:[%s415 + $0x18] sm:$0xff] %vm4028, %v3999
      %4033 = vst.msk [vmem:[%s415 + $0x20] sm:$0xff] %vm4028, %v4000
      %4034 = vst.msk [vmem:[%s415 + $0x28] sm:$0xff] %vm4028, %v4001
      %4035 = vst.msk [vmem:[%s415 + $0x30] sm:$0xff] %vm4028, %v4002
      %4036 = vst.msk [vmem:[%s415 + $0x38] sm:$0xff] %vm4028, %v4003
      %4037 = vst.msk [vmem:[%s415 + $0x40] sm:$0xff] %vm4028, %v4004
      %4038 = vst.msk [vmem:[%s415 + $0x48] sm:$0xff] %vm4028, %v4005
      %4039 = vst.msk [vmem:[%s415 + $0x50] sm:$0xff] %vm4028, %v4006
      %4040 = vst.msk [vmem:[%s415 + $0x58] sm:$0xff] %vm4028, %v4007
      %4041 = vst.msk [vmem:[%s415 + $0x60] sm:$0xff] %vm4028, %v4008
      %4042 = vst.msk [vmem:[%s415 + $0x68] sm:$0xff] %vm4028, %v4009
      %4043 = vst.msk [vmem:[%s415 + $0x70] sm:$0xff] %vm4028, %v4010
      %4044 = vst.msk [vmem:[%s415 + $0x78] sm:$0xff] %vm4028, %v4011
      %4045 = vst.msk [vmem:[%s415 + $0x80] sm:$0xff] %vm4028, %v4012
      %4046 = vst.msk [vmem:[%s415 + $0x88] sm:$0xff] %vm4028, %v4013
      %4047 = vst.msk [vmem:[%s415 + $0x90] sm:$0xff] %vm4028, %v4014
      %4048 = vst.msk [vmem:[%s415 + $0x98] sm:$0xff] %vm4028, %v4015
      %4049 = vst.msk [vmem:[%s415 + $0xa0] sm:$0xff] %vm4028, %v4016
      %4050 = vst.msk [vmem:[%s415 + $0xa8] sm:$0xff] %vm4028, %v4017
      %4051 = vst.msk [vmem:[%s415 + $0xb0] sm:$0xff] %vm4028, %v4018
      %4052 = vst.msk [vmem:[%s415 + $0xb8] sm:$0xff] %vm4028, %v4019
      %4053 = vst.msk [vmem:[%s415 + $0xc0] sm:$0xff] %vm4028, %v4020
      %4054 = vst.msk [vmem:[%s415 + $0xc8] sm:$0xff] %vm4028, %v4021
      %4055 = vst.msk [vmem:[%s415 + $0xd0] sm:$0xff] %vm4028, %v4022
      %4056 = vst.msk [vmem:[%s415 + $0xd8] sm:$0xff] %vm4028, %v4023
      %4057 = vst.msk [vmem:[%s415 + $0xe0] sm:$0xff] %vm4028, %v4024
      %4058 = vst.msk [vmem:[%s415 + $0xe8] sm:$0xff] %vm4028, %v4025
      %4059 = vst.msk [vmem:[%s415 + $0xf0] sm:$0xff] %vm4028, %v4026
      %4060 = vst.msk [vmem:[%s415 + $0xf8] sm:$0xff] %vm4028, %v4027
      %v4061 = vld [vmem:[%s397] sm:$0xff]
      %4063 = vrot.lane.b32.xlu0 %v4061, 126
      %v4064 = vpop.permute.xlu0 %4063
      %v4066 = vadd.f32 %v4061, %v4064
      %v4067 = vmul.f32 %v4066, 0.5
      %4068 = vrot.lane.b32.xlu0 %v4061, 2
      %v4069 = vpop.permute.xlu0 %4068
      %v4071 = vsub.f32 %v4061, %v4069
      %vm4072 = vcmask 15360
      %v4073 = vsel %vm4072, %v4067, %v4071
      %v4074 = vsel %vm3415, 1, 0
      %v4075 = vsel %vm3416, 1, 0
      %v4076 = vsel %vm3417, 1, 0
      %v4077 = vsel %vm3418, 1, 0
      %v4078 = vsel %vm3419, 1, 0
      %v4079 = vsel %vm3420, 1, 0
      %v4080 = vsel %vm3421, 1, 0
      %v4081 = vsel %vm3422, 1, 0
      %v4082 = vsel %vm3423, 1, 0
      %v4083 = vsel %vm3424, 1, 0
      %v4084 = vsel %vm3425, 1, 0
      %v4085 = vsel %vm3426, 1, 0
      %v4086 = vsel %vm3427, 1, 0
      %v4087 = vsel %vm3428, 1, 0
      %v4088 = vsel %vm3429, 1, 0
      %v4089 = vsel %vm3430, 1, 0
      %v4090 = vsel %vm3431, 1, 0
      %v4091 = vsel %vm3432, 1, 0
      %v4092 = vsel %vm3433, 1, 0
      %v4093 = vsel %vm3434, 1, 0
      %v4094 = vsel %vm3435, 1, 0
      %v4095 = vsel %vm3436, 1, 0
      %v4096 = vsel %vm3437, 1, 0
      %v4097 = vsel %vm3438, 1, 0
      %v4098 = vsel %vm3439, 1, 0
      %v4099 = vsel %vm3440, 1, 0
      %v4100 = vsel %vm3441, 1, 0
      %v4101 = vsel %vm3442, 1, 0
      %v4102 = vsel %vm3443, 1, 0
      %v4103 = vsel %vm3444, 1, 0
      %v4104 = vsel %vm3445, 1, 0
      %v4105 = vsel %vm3446, 1, 0
      %v4106 = vcvt.s32.f32 %v4074
      %v4107 = vcvt.s32.f32 %v4075
      %v4108 = vcvt.s32.f32 %v4076
      %v4109 = vcvt.s32.f32 %v4077
      %v4110 = vcvt.s32.f32 %v4078
      %v4111 = vcvt.s32.f32 %v4079
      %v4112 = vcvt.s32.f32 %v4080
      %v4113 = vcvt.s32.f32 %v4081
      %v4114 = vcvt.s32.f32 %v4082
      %v4115 = vcvt.s32.f32 %v4083
      %v4116 = vcvt.s32.f32 %v4084
      %v4117 = vcvt.s32.f32 %v4085
      %v4118 = vcvt.s32.f32 %v4086
      %v4119 = vcvt.s32.f32 %v4087
      %v4120 = vcvt.s32.f32 %v4088
      %v4121 = vcvt.s32.f32 %v4089
      %v4122 = vcvt.s32.f32 %v4090
      %v4123 = vcvt.s32.f32 %v4091
      %v4124 = vcvt.s32.f32 %v4092
      %v4125 = vcvt.s32.f32 %v4093
      %v4126 = vcvt.s32.f32 %v4094
      %v4127 = vcvt.s32.f32 %v4095
      %v4128 = vcvt.s32.f32 %v4096
      %v4129 = vcvt.s32.f32 %v4097
      %v4130 = vcvt.s32.f32 %v4098
      %v4131 = vcvt.s32.f32 %v4099
      %v4132 = vcvt.s32.f32 %v4100
      %v4133 = vcvt.s32.f32 %v4101
      %v4134 = vcvt.s32.f32 %v4102
      %v4135 = vcvt.s32.f32 %v4103
      %v4136 = vcvt.s32.f32 %v4104
      %v4137 = vcvt.s32.f32 %v4105
      %v4139 = vsel %vm1930, %v4106, 0
      %v4142 = vsel %vm1930, %v4107, 0
      %v4145 = vsel %vm1930, %v4108, 0
      %v4148 = vsel %vm1930, %v4109, 0
      %v4151 = vsel %vm1930, %v4110, 0
      %v4154 = vsel %vm1930, %v4111, 0
      %v4157 = vsel %vm1930, %v4112, 0
      %v4160 = vsel %vm1930, %v4113, 0
      %v4163 = vsel %vm1930, %v4114, 0
      %v4166 = vsel %vm1930, %v4115, 0
      %v4169 = vsel %vm1930, %v4116, 0
      %v4172 = vsel %vm1930, %v4117, 0
      %v4175 = vsel %vm1930, %v4118, 0
      %v4178 = vsel %vm1930, %v4119, 0
      %v4181 = vsel %vm1930, %v4120, 0
      %v4184 = vsel %vm1930, %v4121, 0
      %v4187 = vsel %vm1930, %v4122, 0
      %v4190 = vsel %vm1930, %v4123, 0
      %v4193 = vsel %vm1930, %v4124, 0
      %v4196 = vsel %vm1930, %v4125, 0
      %v4199 = vsel %vm1930, %v4126, 0
      %v4202 = vsel %vm1930, %v4127, 0
      %v4205 = vsel %vm1930, %v4128, 0
      %v4208 = vsel %vm1930, %v4129, 0
      %v4211 = vsel %vm1930, %v4130, 0
      %v4214 = vsel %vm1930, %v4131, 0
      %v4217 = vsel %vm1930, %v4132, 0
      %v4220 = vsel %vm1930, %v4133, 0
      %v4223 = vsel %vm1930, %v4134, 0
      %v4226 = vsel %vm1930, %v4135, 0
      %v4229 = vsel %vm1930, %v4136, 0
      %v4232 = vsel %vm1930, %v4137, 0
      %4234 = vmatprep.subr.mxu0 0.0
      %4235 = vmatpush1.msra.mxu0 %v4073
      %4236 = vmatprep.subr.mxu0 0.0
      %4237 = vmatpush1.msra.mxu0 0.0
      %4238 = vmatprep.subr.mxu0 0.0
      %4239 = vmatpush1.msra.mxu0 0.0
      %4240 = vmatprep.subr.mxu0 0.0
      %4241 = vmatpush1.msra.mxu0 0.0
      %4242 = vmatprep.subr.mxu0 0.0
      %4243 = vmatpush1.msra.mxu0 0.0
      %4244 = vmatprep.subr.mxu0 0.0
      %4245 = vmatpush1.msra.mxu0 0.0
      %4246 = vmatprep.subr.mxu0 0.0
      %4247 = vmatpush1.msra.mxu0 0.0
      %4248 = vmatprep.subr.mxu0 0.0
      %4249 = vmatpush1.msra.mxu0 0.0
      %4250 = vmatprep.subr.mxu0 0.0
      %4251 = vmatpush1.msra.mxu0 0.0
      %4252 = vmatprep.subr.mxu0 0.0
      %4253 = vmatpush1.msra.mxu0 0.0
      %4254 = vmatprep.subr.mxu0 0.0
      %4255 = vmatpush1.msra.mxu0 0.0
      %4256 = vmatprep.subr.mxu0 0.0
      %4257 = vmatpush1.msra.mxu0 0.0
      %4258 = vmatprep.subr.mxu0 0.0
      %4259 = vmatpush1.msra.mxu0 0.0
      %4260 = vmatprep.subr.mxu0 0.0
      %4261 = vmatpush1.msra.mxu0 0.0
      %4262 = vmatprep.subr.mxu0 0.0
      %4263 = vmatpush1.msra.mxu0 0.0
      %4264 = vmatprep.subr.mxu0 0.0
      %4265 = vmatpush1.msra.mxu0 0.0
      %4266 = vmatprep.subr.mxu0 0.0
      %4267 = vmatpush1.msra.mxu0 0.0
      %4268 = vmatprep.subr.mxu0 0.0
      %4269 = vmatpush1.msra.mxu0 0.0
      %4270 = vmatprep.subr.mxu0 0.0
      %4271 = vmatpush1.msra.mxu0 0.0
      %4272 = vmatprep.subr.mxu0 0.0
      %4273 = vmatpush1.msra.mxu0 0.0
      %4274 = vmatprep.subr.mxu0 0.0
      %4275 = vmatpush1.msra.mxu0 0.0
      %4276 = vmatprep.subr.mxu0 0.0
      %4277 = vmatpush1.msra.mxu0 0.0
      %4278 = vmatprep.subr.mxu0 0.0
      %4279 = vmatpush1.msra.mxu0 0.0
      %4280 = vmatprep.subr.mxu0 0.0
      %4281 = vmatpush1.msra.mxu0 0.0
      %4282 = vmatprep.subr.mxu0 0.0
      %4283 = vmatpush1.msra.mxu0 0.0
      %4284 = vmatprep.subr.mxu0 0.0
      %4285 = vmatpush1.msra.mxu0 0.0
      %4286 = vmatprep.subr.mxu0 0.0
      %4287 = vmatpush1.msra.mxu0 0.0
      %4288 = vmatprep.subr.mxu0 0.0
      %4289 = vmatpush1.msra.mxu0 0.0
      %4290 = vmatprep.subr.mxu0 0.0
      %4291 = vmatpush1.msra.mxu0 0.0
      %4292 = vmatprep.subr.mxu0 0.0
      %4293 = vmatpush1.msra.mxu0 0.0
      %4294 = vmatprep.subr.mxu0 0.0
      %4295 = vmatpush1.msra.mxu0 0.0
      %4296 = vmatprep.subr.mxu0 0.0
      %4297 = vmatpush1.msra.mxu0 0.0
      %4298 = vmatprep.mubr.f32.mxu0 0.0
      %4299 = vmatmul.mubr.f32.gmra.mrb[0].mxu0 %v4139
      %v4300 = vpop.f32.mrb[0].mxu0
      %v4301 = vadd.f32 0.0, %v4300
      %v4302 = vpop.f32.mrb[0].mxu0
      %4303 = vmatprep.mubr.f32.mxu0 0.0
      %4304 = vmatmul.mubr.f32.gmra.mrb[0].mxu0 %v4142
      %v4305 = vpop.f32.mrb[0].mxu0
      %v4306 = vadd.f32 0.0, %v4305
      %v4307 = vpop.f32.mrb[0].mxu0
      %4308 = vmatprep.mubr.f32.mxu0 0.0
      %4309 = vmatmul.mubr.f32.gmra.mrb[0].mxu0 %v4145
      %v4310 = vpop.f32.mrb[0].mxu0
      %v4311 = vadd.f32 0.0, %v4310
      %v4312 = vpop.f32.mrb[0].mxu0
      %4313 = vmatprep.mubr.f32.mxu0 0.0
      %4314 = vmatmul.mubr.f32.gmra.mrb[0].mxu0 %v4148
      %v4315 = vpop.f32.mrb[0].mxu0
      %v4316 = vadd.f32 0.0, %v4315
      %v4317 = vpop.f32.mrb[0].mxu0
      %4318 = vmatprep.mubr.f32.mxu0 0.0
      %4319 = vmatmul.mubr.f32.gmra.mrb[0].mxu0 %v4151
      %v4320 = vpop.f32.mrb[0].mxu0
      %v4321 = vadd.f32 0.0, %v4320
      %v4322 = vpop.f32.mrb[0].mxu0
      %4323 = vmatprep.mubr.f32.mxu0 0.0
      %4324 = vmatmul.mubr.f32.gmra.mrb[0].mxu0 %v4154
      %v4325 = vpop.f32.mrb[0].mxu0
      %v4326 = vadd.f32 0.0, %v4325
      %v4327 = vpop.f32.mrb[0].mxu0
      %4328 = vmatprep.mubr.f32.mxu0 0.0
      %4329 = vmatmul.mubr.f32.gmra.mrb[0].mxu0 %v4157
      %v4330 = vpop.f32.mrb[0].mxu0
      %v4331 = vadd.f32 0.0, %v4330
      %v4332 = vpop.f32.mrb[0].mxu0
      %4333 = vmatprep.mubr.f32.mxu0 0.0
      %4334 = vmatmul.mubr.f32.gmra.mrb[0].mxu0 %v4160
      %v4335 = vpop.f32.mrb[0].mxu0
      %v4336 = vadd.f32 0.0, %v4335
      %v4337 = vpop.f32.mrb[0].mxu0
      %4338 = vmatprep.mubr.f32.mxu0 0.0
      %4339 = vmatmul.mubr.f32.gmra.mrb[0].mxu0 %v4163
      %v4340 = vpop.f32.mrb[0].mxu0
      %v4341 = vadd.f32 0.0, %v4340
      %v4342 = vpop.f32.mrb[0].mxu0
      %4343 = vmatprep.mubr.f32.mxu0 0.0
      %4344 = vmatmul.mubr.f32.gmra.mrb[0].mxu0 %v4166
      %v4345 = vpop.f32.mrb[0].mxu0
      %v4346 = vadd.f32 0.0, %v4345
      %v4347 = vpop.f32.mrb[0].mxu0
      %4348 = vmatprep.mubr.f32.mxu0 0.0
      %4349 = vmatmul.mubr.f32.gmra.mrb[0].mxu0 %v4169
      %v4350 = vpop.f32.mrb[0].mxu0
      %v4351 = vadd.f32 0.0, %v4350
      %v4352 = vpop.f32.mrb[0].mxu0
      %4353 = vmatprep.mubr.f32.mxu0 0.0
      %4354 = vmatmul.mubr.f32.gmra.mrb[0].mxu0 %v4172
      %v4355 = vpop.f32.mrb[0].mxu0
      %v4356 = vadd.f32 0.0, %v4355
      %v4357 = vpop.f32.mrb[0].mxu0
      %4358 = vmatprep.mubr.f32.mxu0 0.0
      %4359 = vmatmul.mubr.f32.gmra.mrb[0].mxu0 %v4175
      %v4360 = vpop.f32.mrb[0].mxu0
      %v4361 = vadd.f32 0.0, %v4360
      %v4362 = vpop.f32.mrb[0].mxu0
      %4363 = vmatprep.mubr.f32.mxu0 0.0
      %4364 = vmatmul.mubr.f32.gmra.mrb[0].mxu0 %v4178
      %v4365 = vpop.f32.mrb[0].mxu0
      %v4366 = vadd.f32 0.0, %v4365
      %v4367 = vpop.f32.mrb[0].mxu0
      %4368 = vmatprep.mubr.f32.mxu0 0.0
      %4369 = vmatmul.mubr.f32.gmra.mrb[0].mxu0 %v4181
      %v4370 = vpop.f32.mrb[0].mxu0
      %v4371 = vadd.f32 0.0, %v4370
      %v4372 = vpop.f32.mrb[0].mxu0
      %4373 = vmatprep.mubr.f32.mxu0 0.0
      %4374 = vmatmul.mubr.f32.gmra.mrb[0].mxu0 %v4184
      %v4375 = vpop.f32.mrb[0].mxu0
      %v4376 = vadd.f32 0.0, %v4375
      %v4377 = vpop.f32.mrb[0].mxu0
      %4378 = vmatprep.mubr.f32.mxu0 0.0
      %4379 = vmatmul.mubr.f32.gmra.mrb[0].mxu0 %v4187
      %v4380 = vpop.f32.mrb[0].mxu0
      %v4381 = vadd.f32 0.0, %v4380
      %v4382 = vpop.f32.mrb[0].mxu0
      %4383 = vmatprep.mubr.f32.mxu0 0.0
      %4384 = vmatmul.mubr.f32.gmra.mrb[0].mxu0 %v4190
      %v4385 = vpop.f32.mrb[0].mxu0
      %v4386 = vadd.f32 0.0, %v4385
      %v4387 = vpop.f32.mrb[0].mxu0
      %4388 = vmatprep.mubr.f32.mxu0 0.0
      %4389 = vmatmul.mubr.f32.gmra.mrb[0].mxu0 %v4193
      %v4390 = vpop.f32.mrb[0].mxu0
      %v4391 = vadd.f32 0.0, %v4390
      %v4392 = vpop.f32.mrb[0].mxu0
      %4393 = vmatprep.mubr.f32.mxu0 0.0
      %4394 = vmatmul.mubr.f32.gmra.mrb[0].mxu0 %v4196
      %v4395 = vpop.f32.mrb[0].mxu0
      %v4396 = vadd.f32 0.0, %v4395
      %v4397 = vpop.f32.mrb[0].mxu0
      %4398 = vmatprep.mubr.f32.mxu0 0.0
      %4399 = vmatmul.mubr.f32.gmra.mrb[0].mxu0 %v4199
      %v4400 = vpop.f32.mrb[0].mxu0
      %v4401 = vadd.f32 0.0, %v4400
      %v4402 = vpop.f32.mrb[0].mxu0
      %4403 = vmatprep.mubr.f32.mxu0 0.0
      %4404 = vmatmul.mubr.f32.gmra.mrb[0].mxu0 %v4202
      %v4405 = vpop.f32.mrb[0].mxu0
      %v4406 = vadd.f32 0.0, %v4405
      %v4407 = vpop.f32.mrb[0].mxu0
      %4408 = vmatprep.mubr.f32.mxu0 0.0
      %4409 = vmatmul.mubr.f32.gmra.mrb[0].mxu0 %v4205
      %v4410 = vpop.f32.mrb[0].mxu0
      %v4411 = vadd.f32 0.0, %v4410
      %v4412 = vpop.f32.mrb[0].mxu0
      %4413 = vmatprep.mubr.f32.mxu0 0.0
      %4414 = vmatmul.mubr.f32.gmra.mrb[0].mxu0 %v4208
      %v4415 = vpop.f32.mrb[0].mxu0
      %v4416 = vadd.f32 0.0, %v4415
      %v4417 = vpop.f32.mrb[0].mxu0
      %4418 = vmatprep.mubr.f32.mxu0 0.0
      %4419 = vmatmul.mubr.f32.gmra.mrb[0].mxu0 %v4211
      %v4420 = vpop.f32.mrb[0].mxu0
      %v4421 = vadd.f32 0.0, %v4420
      %v4422 = vpop.f32.mrb[0].mxu0
      %4423 = vmatprep.mubr.f32.mxu0 0.0
      %4424 = vmatmul.mubr.f32.gmra.mrb[0].mxu0 %v4214
      %v4425 = vpop.f32.mrb[0].mxu0
      %v4426 = vadd.f32 0.0, %v4425
      %v4427 = vpop.f32.mrb[0].mxu0
      %4428 = vmatprep.mubr.f32.mxu0 0.0
      %4429 = vmatmul.mubr.f32.gmra.mrb[0].mxu0 %v4217
      %v4430 = vpop.f32.mrb[0].mxu0
      %v4431 = vadd.f32 0.0, %v4430
      %v4432 = vpop.f32.mrb[0].mxu0
      %4433 = vmatprep.mubr.f32.mxu0 0.0
      %4434 = vmatmul.mubr.f32.gmra.mrb[0].mxu0 %v4220
      %v4435 = vpop.f32.mrb[0].mxu0
      %v4436 = vadd.f32 0.0, %v4435
      %v4437 = vpop.f32.mrb[0].mxu0
      %4438 = vmatprep.mubr.f32.mxu0 0.0
      %4439 = vmatmul.mubr.f32.gmra.mrb[0].mxu0 %v4223
      %v4440 = vpop.f32.mrb[0].mxu0
      %v4441 = vadd.f32 0.0, %v4440
      %v4442 = vpop.f32.mrb[0].mxu0
      %4443 = vmatprep.mubr.f32.mxu0 0.0
      %4444 = vmatmul.mubr.f32.gmra.mrb[0].mxu0 %v4226
      %v4445 = vpop.f32.mrb[0].mxu0
      %v4446 = vadd.f32 0.0, %v4445
      %v4447 = vpop.f32.mrb[0].mxu0
      %4448 = vmatprep.mubr.f32.mxu0 0.0
      %4449 = vmatmul.mubr.f32.gmra.mrb[0].mxu0 %v4229
      %v4450 = vpop.f32.mrb[0].mxu0
      %v4451 = vadd.f32 0.0, %v4450
      %v4452 = vpop.f32.mrb[0].mxu0
      %4453 = vmatprep.mubr.f32.mxu0 0.0
      %4454 = vmatmul.mubr.f32.gmra.mrb[0].mxu0 %v4232
      %v4455 = vpop.f32.mrb[0].mxu0
      %v4456 = vadd.f32 0.0, %v4455
      %v4457 = vpop.f32.mrb[0].mxu0
      %4458 = vdwg.mxu0
      %v4459 = vld [vmem:[%s4] sm:$0xff]
      %v4460 = vld [vmem:[%s4 + $0x8] sm:$0xff]
      %v4461 = vld [vmem:[%s4 + $0x10] sm:$0xff]
      %v4462 = vld [vmem:[%s4 + $0x18] sm:$0xff]
      %v4463 = vld [vmem:[%s4 + $0x20] sm:$0xff]
      %v4464 = vld [vmem:[%s4 + $0x28] sm:$0xff]
      %v4465 = vld [vmem:[%s4 + $0x30] sm:$0xff]
      %v4466 = vld [vmem:[%s4 + $0x38] sm:$0xff]
      %v4467 = vld [vmem:[%s4 + $0x40] sm:$0xff]
      %v4468 = vld [vmem:[%s4 + $0x48] sm:$0xff]
      %v4469 = vld [vmem:[%s4 + $0x50] sm:$0xff]
      %v4470 = vld [vmem:[%s4 + $0x58] sm:$0xff]
      %v4471 = vld [vmem:[%s4 + $0x60] sm:$0xff]
      %v4472 = vld [vmem:[%s4 + $0x68] sm:$0xff]
      %v4473 = vld [vmem:[%s4 + $0x70] sm:$0xff]
      %v4474 = vld [vmem:[%s4 + $0x78] sm:$0xff]
      %v4475 = vld [vmem:[%s4 + $0x80] sm:$0xff]
      %v4476 = vld [vmem:[%s4 + $0x88] sm:$0xff]
      %v4477 = vld [vmem:[%s4 + $0x90] sm:$0xff]
      %v4478 = vld [vmem:[%s4 + $0x98] sm:$0xff]
      %v4479 = vld [vmem:[%s4 + $0xa0] sm:$0xff]
      %v4480 = vld [vmem:[%s4 + $0xa8] sm:$0xff]
      %v4481 = vld [vmem:[%s4 + $0xb0] sm:$0xff]
      %v4482 = vld [vmem:[%s4 + $0xb8] sm:$0xff]
      %v4483 = vld [vmem:[%s4 + $0xc0] sm:$0xff]
      %v4484 = vld [vmem:[%s4 + $0xc8] sm:$0xff]
      %v4485 = vld [vmem:[%s4 + $0xd0] sm:$0xff]
      %v4486 = vld [vmem:[%s4 + $0xd8] sm:$0xff]
      %v4487 = vld [vmem:[%s4 + $0xe0] sm:$0xff]
      %v4488 = vld [vmem:[%s4 + $0xe8] sm:$0xff]
      %v4489 = vld [vmem:[%s4 + $0xf0] sm:$0xff]
      %v4490 = vld [vmem:[%s4 + $0xf8] sm:$0xff]
      %v4491 = vsub.f32 %v4301, %v4459
      %v4492 = vsub.f32 %v4306, %v4460
      %v4493 = vsub.f32 %v4311, %v4461
      %v4494 = vsub.f32 %v4316, %v4462
      %v4495 = vsub.f32 %v4321, %v4463
      %v4496 = vsub.f32 %v4326, %v4464
      %v4497 = vsub.f32 %v4331, %v4465
      %v4498 = vsub.f32 %v4336, %v4466
      %v4499 = vsub.f32 %v4341, %v4467
      %v4500 = vsub.f32 %v4346, %v4468
      %v4501 = vsub.f32 %v4351, %v4469
      %v4502 = vsub.f32 %v4356, %v4470
      %v4503 = vsub.f32 %v4361, %v4471
      %v4504 = vsub.f32 %v4366, %v4472
      %v4505 = vsub.f32 %v4371, %v4473
      %v4506 = vsub.f32 %v4376, %v4474
      %v4507 = vsub.f32 %v4381, %v4475
      %v4508 = vsub.f32 %v4386, %v4476
      %v4509 = vsub.f32 %v4391, %v4477
      %v4510 = vsub.f32 %v4396, %v4478
      %v4511 = vsub.f32 %v4401, %v4479
      %v4512 = vsub.f32 %v4406, %v4480
      %v4513 = vsub.f32 %v4411, %v4481
      %v4514 = vsub.f32 %v4416, %v4482
      %v4515 = vsub.f32 %v4421, %v4483
      %v4516 = vsub.f32 %v4426, %v4484
      %v4517 = vsub.f32 %v4431, %v4485
      %v4518 = vsub.f32 %v4436, %v4486
      %v4519 = vsub.f32 %v4441, %v4487
      %v4520 = vsub.f32 %v4446, %v4488
      %v4521 = vsub.f32 %v4451, %v4489
      %v4522 = vsub.f32 %v4456, %v4490
      %v4523 = vrcp.pop %v4459
      %v4524 = vmul.f32 10.0, %v4523
      %v4525 = vrcp.pop %v4460
      %v4526 = vmul.f32 10.0, %v4525
      %v4527 = vrcp.pop %v4461
      %v4528 = vmul.f32 10.0, %v4527
      %v4529 = vrcp.pop %v4462
      %v4530 = vmul.f32 10.0, %v4529
      %v4531 = vrcp.pop %v4463
      %v4532 = vmul.f32 10.0, %v4531
      %v4533 = vrcp.pop %v4464
      %v4534 = vmul.f32 10.0, %v4533
      %v4535 = vrcp.pop %v4465
      %v4536 = vmul.f32 10.0, %v4535
      %v4537 = vrcp.pop %v4466
      %v4538 = vmul.f32 10.0, %v4537
      %v4539 = vrcp.pop %v4467
      %v4540 = vmul.f32 10.0, %v4539
      %v4541 = vrcp.pop %v4468
      %v4542 = vmul.f32 10.0, %v4541
      %v4543 = vrcp.pop %v4469
      %v4544 = vmul.f32 10.0, %v4543
      %v4545 = vrcp.pop %v4470
      %v4546 = vmul.f32 10.0, %v4545
      %v4547 = vrcp.pop %v4471
      %v4548 = vmul.f32 10.0, %v4547
      %v4549 = vrcp.pop %v4472
      %v4550 = vmul.f32 10.0, %v4549
      %v4551 = vrcp.pop %v4473
      %v4552 = vmul.f32 10.0, %v4551
      %v4553 = vrcp.pop %v4474
      %v4554 = vmul.f32 10.0, %v4553
      %v4555 = vrcp.pop %v4475
      %v4556 = vmul.f32 10.0, %v4555
      %v4557 = vrcp.pop %v4476
      %v4558 = vmul.f32 10.0, %v4557
      %v4559 = vrcp.pop %v4477
      %v4560 = vmul.f32 10.0, %v4559
      %v4561 = vrcp.pop %v4478
      %v4562 = vmul.f32 10.0, %v4561
      %v4563 = vrcp.pop %v4479
      %v4564 = vmul.f32 10.0, %v4563
      %v4565 = vrcp.pop %v4480
      %v4566 = vmul.f32 10.0, %v4565
      %v4567 = vrcp.pop %v4481
      %v4568 = vmul.f32 10.0, %v4567
      %v4569 = vrcp.pop %v4482
      %v4570 = vmul.f32 10.0, %v4569
      %v4571 = vrcp.pop %v4483
      %v4572 = vmul.f32 10.0, %v4571
      %v4573 = vrcp.pop %v4484
      %v4574 = vmul.f32 10.0, %v4573
      %v4575 = vrcp.pop %v4485
      %v4576 = vmul.f32 10.0, %v4575
      %v4577 = vrcp.pop %v4486
      %v4578 = vmul.f32 10.0, %v4577
      %v4579 = vrcp.pop %v4487
      %v4580 = vmul.f32 10.0, %v4579
      %v4581 = vrcp.pop %v4488
      %v4582 = vmul.f32 10.0, %v4581
      %v4583 = vrcp.pop %v4489
      %v4584 = vmul.f32 10.0, %v4583
      %v4585 = vrcp.pop %v4490
      %v4586 = vmul.f32 10.0, %v4585
      %4619 = vrot.lane.b32.xlu0 %v4524, 126
      %v4620 = vpop.permute.xlu0 %4619
      %4621 = vrot.lane.b32.xlu0 %v4526, 126
      %v4622 = vpop.permute.xlu0 %4621
      %4623 = vrot.lane.b32.xlu0 %v4528, 126
      %v4624 = vpop.permute.xlu0 %4623
      %4625 = vrot.lane.b32.xlu0 %v4530, 126
      %v4626 = vpop.permute.xlu0 %4625
      %4627 = vrot.lane.b32.xlu0 %v4532, 126
      %v4628 = vpop.permute.xlu0 %4627
      %4629 = vrot.lane.b32.xlu0 %v4534, 126
      %v4630 = vpop.permute.xlu0 %4629
      %4631 = vrot.lane.b32.xlu0 %v4536, 126
      %v4632 = vpop.permute.xlu0 %4631
      %4633 = vrot.lane.b32.xlu0 %v4538, 126
      %v4634 = vpop.permute.xlu0 %4633
      %4635 = vrot.lane.b32.xlu0 %v4540, 126
      %v4636 = vpop.permute.xlu0 %4635
      %4637 = vrot.lane.b32.xlu0 %v4542, 126
      %v4638 = vpop.permute.xlu0 %4637
      %4639 = vrot.lane.b32.xlu0 %v4544, 126
      %v4640 = vpop.permute.xlu0 %4639
      %4641 = vrot.lane.b32.xlu0 %v4546, 126
      %v4642 = vpop.permute.xlu0 %4641
      %4643 = vrot.lane.b32.xlu0 %v4548, 126
      %v4644 = vpop.permute.xlu0 %4643
      %4645 = vrot.lane.b32.xlu0 %v4550, 126
      %v4646 = vpop.permute.xlu0 %4645
      %4647 = vrot.lane.b32.xlu0 %v4552, 126
      %v4648 = vpop.permute.xlu0 %4647
      %4649 = vrot.lane.b32.xlu0 %v4554, 126
      %v4650 = vpop.permute.xlu0 %4649
      %4651 = vrot.lane.b32.xlu0 %v4556, 126
      %v4652 = vpop.permute.xlu0 %4651
      %4653 = vrot.lane.b32.xlu0 %v4558, 126
      %v4654 = vpop.permute.xlu0 %4653
      %4655 = vrot.lane.b32.xlu0 %v4560, 126
      %v4656 = vpop.permute.xlu0 %4655
      %4657 = vrot.lane.b32.xlu0 %v4562, 126
      %v4658 = vpop.permute.xlu0 %4657
      %4659 = vrot.lane.b32.xlu0 %v4564, 126
      %v4660 = vpop.permute.xlu0 %4659
      %4661 = vrot.lane.b32.xlu0 %v4566, 126
      %v4662 = vpop.permute.xlu0 %4661
      %4663 = vrot.lane.b32.xlu0 %v4568, 126
      %v4664 = vpop.permute.xlu0 %4663
      %4665 = vrot.lane.b32.xlu0 %v4570, 126
      %v4666 = vpop.permute.xlu0 %4665
      %4667 = vrot.lane.b32.xlu0 %v4572, 126
      %v4668 = vpop.permute.xlu0 %4667
      %4669 = vrot.lane.b32.xlu0 %v4574, 126
      %v4670 = vpop.permute.xlu0 %4669
      %4671 = vrot.lane.b32.xlu0 %v4576, 126
      %v4672 = vpop.permute.xlu0 %4671
      %4673 = vrot.lane.b32.xlu0 %v4578, 126
      %v4674 = vpop.permute.xlu0 %4673
      %4675 = vrot.lane.b32.xlu0 %v4580, 126
      %v4676 = vpop.permute.xlu0 %4675
      %4677 = vrot.lane.b32.xlu0 %v4582, 126
      %v4678 = vpop.permute.xlu0 %4677
      %4679 = vrot.lane.b32.xlu0 %v4584, 126
      %v4680 = vpop.permute.xlu0 %4679
      %4681 = vrot.lane.b32.xlu0 %v4586, 126
      %v4682 = vpop.permute.xlu0 %4681
      %v4715 = vmul.f32 %v4491, %v4620
      %v4716 = vmul.f32 %v4492, %v4622
      %v4717 = vmul.f32 %v4493, %v4624
      %v4718 = vmul.f32 %v4494, %v4626
      %v4719 = vmul.f32 %v4495, %v4628
      %v4720 = vmul.f32 %v4496, %v4630
      %v4721 = vmul.f32 %v4497, %v4632
      %v4722 = vmul.f32 %v4498, %v4634
      %v4723 = vmul.f32 %v4499, %v4636
      %v4724 = vmul.f32 %v4500, %v4638
      %v4725 = vmul.f32 %v4501, %v4640
      %v4726 = vmul.f32 %v4502, %v4642
      %v4727 = vmul.f32 %v4503, %v4644
      %v4728 = vmul.f32 %v4504, %v4646
      %v4729 = vmul.f32 %v4505, %v4648
      %v4730 = vmul.f32 %v4506, %v4650
      %v4731 = vmul.f32 %v4507, %v4652
      %v4732 = vmul.f32 %v4508, %v4654
      %v4733 = vmul.f32 %v4509, %v4656
      %v4734 = vmul.f32 %v4510, %v4658
      %v4735 = vmul.f32 %v4511, %v4660
      %v4736 = vmul.f32 %v4512, %v4662
      %v4737 = vmul.f32 %v4513, %v4664
      %v4738 = vmul.f32 %v4514, %v4666
      %v4739 = vmul.f32 %v4515, %v4668
      %v4740 = vmul.f32 %v4516, %v4670
      %v4741 = vmul.f32 %v4517, %v4672
      %v4742 = vmul.f32 %v4518, %v4674
      %v4743 = vmul.f32 %v4519, %v4676
      %v4744 = vmul.f32 %v4520, %v4678
      %v4745 = vmul.f32 %v4521, %v4680
      %v4746 = vmul.f32 %v4522, %v4682
      %v4747 = vmul.f32 %v4301, %v4523
      %v4748 = vmul.f32 %v4306, %v4525
      %v4749 = vmul.f32 %v4311, %v4527
      %v4750 = vmul.f32 %v4316, %v4529
      %v4751 = vmul.f32 %v4321, %v4531
      %v4752 = vmul.f32 %v4326, %v4533
      %v4753 = vmul.f32 %v4331, %v4535
      %v4754 = vmul.f32 %v4336, %v4537
      %v4755 = vmul.f32 %v4341, %v4539
      %v4756 = vmul.f32 %v4346, %v4541
      %v4757 = vmul.f32 %v4351, %v4543
      %v4758 = vmul.f32 %v4356, %v4545
      %v4759 = vmul.f32 %v4361, %v4547
      %v4760 = vmul.f32 %v4366, %v4549
      %v4761 = vmul.f32 %v4371, %v4551
      %v4762 = vmul.f32 %v4376, %v4553
      %v4763 = vmul.f32 %v4381, %v4555
      %v4764 = vmul.f32 %v4386, %v4557
      %v4765 = vmul.f32 %v4391, %v4559
      %v4766 = vmul.f32 %v4396, %v4561
      %v4767 = vmul.f32 %v4401, %v4563
      %v4768 = vmul.f32 %v4406, %v4565
      %v4769 = vmul.f32 %v4411, %v4567
      %v4770 = vmul.f32 %v4416, %v4569
      %v4771 = vmul.f32 %v4421, %v4571
      %v4772 = vmul.f32 %v4426, %v4573
      %v4773 = vmul.f32 %v4431, %v4575
      %v4774 = vmul.f32 %v4436, %v4577
      %v4775 = vmul.f32 %v4441, %v4579
      %v4776 = vmul.f32 %v4446, %v4581
      %v4777 = vmul.f32 %v4451, %v4583
      %v4778 = vmul.f32 %v4456, %v4585
      %v4779 = vlog2.pop %v4747
      %v4780 = vmul.f32 %v4779, 0.6931472
      %v4781 = vlog2.pop %v4748
      %v4782 = vmul.f32 %v4781, 0.6931472
      %v4783 = vlog2.pop %v4749
      %v4784 = vmul.f32 %v4783, 0.6931472
      %v4785 = vlog2.pop %v4750
      %v4786 = vmul.f32 %v4785, 0.6931472
      %v4787 = vlog2.pop %v4751
      %v4788 = vmul.f32 %v4787, 0.6931472
      %v4789 = vlog2.pop %v4752
      %v4790 = vmul.f32 %v4789, 0.6931472
      %v4791 = vlog2.pop %v4753
      %v4792 = vmul.f32 %v4791, 0.6931472
      %v4793 = vlog2.pop %v4754
      %v4794 = vmul.f32 %v4793, 0.6931472
      %v4795 = vlog2.pop %v4755
      %v4796 = vmul.f32 %v4795, 0.6931472
      %v4797 = vlog2.pop %v4756
      %v4798 = vmul.f32 %v4797, 0.6931472
      %v4799 = vlog2.pop %v4757
      %v4800 = vmul.f32 %v4799, 0.6931472
      %v4801 = vlog2.pop %v4758
      %v4802 = vmul.f32 %v4801, 0.6931472
      %v4803 = vlog2.pop %v4759
      %v4804 = vmul.f32 %v4803, 0.6931472
      %v4805 = vlog2.pop %v4760
      %v4806 = vmul.f32 %v4805, 0.6931472
      %v4807 = vlog2.pop %v4761
      %v4808 = vmul.f32 %v4807, 0.6931472
      %v4809 = vlog2.pop %v4762
      %v4810 = vmul.f32 %v4809, 0.6931472
      %v4811 = vlog2.pop %v4763
      %v4812 = vmul.f32 %v4811, 0.6931472
      %v4813 = vlog2.pop %v4764
      %v4814 = vmul.f32 %v4813, 0.6931472
      %v4815 = vlog2.pop %v4765
      %v4816 = vmul.f32 %v4815, 0.6931472
      %v4817 = vlog2.pop %v4766
      %v4818 = vmul.f32 %v4817, 0.6931472
      %v4819 = vlog2.pop %v4767
      %v4820 = vmul.f32 %v4819, 0.6931472
      %v4821 = vlog2.pop %v4768
      %v4822 = vmul.f32 %v4821, 0.6931472
      %v4823 = vlog2.pop %v4769
      %v4824 = vmul.f32 %v4823, 0.6931472
      %v4825 = vlog2.pop %v4770
      %v4826 = vmul.f32 %v4825, 0.6931472
      %v4827 = vlog2.pop %v4771
      %v4828 = vmul.f32 %v4827, 0.6931472
      %v4829 = vlog2.pop %v4772
      %v4830 = vmul.f32 %v4829, 0.6931472
      %v4831 = vlog2.pop %v4773
      %v4832 = vmul.f32 %v4831, 0.6931472
      %v4833 = vlog2.pop %v4774
      %v4834 = vmul.f32 %v4833, 0.6931472
      %v4835 = vlog2.pop %v4775
      %v4836 = vmul.f32 %v4835, 0.6931472
      %v4837 = vlog2.pop %v4776
      %v4838 = vmul.f32 %v4837, 0.6931472
      %v4839 = vlog2.pop %v4777
      %v4840 = vmul.f32 %v4839, 0.6931472
      %v4841 = vlog2.pop %v4778
      %v4842 = vmul.f32 %v4841, 0.6931472
      %v4843 = vmul.f32 %v4780, 5.0
      %v4844 = vmul.f32 %v4782, 5.0
      %v4845 = vmul.f32 %v4784, 5.0
      %v4846 = vmul.f32 %v4786, 5.0
      %v4847 = vmul.f32 %v4788, 5.0
      %v4848 = vmul.f32 %v4790, 5.0
      %v4849 = vmul.f32 %v4792, 5.0
      %v4850 = vmul.f32 %v4794, 5.0
      %v4851 = vmul.f32 %v4796, 5.0
      %v4852 = vmul.f32 %v4798, 5.0
      %v4853 = vmul.f32 %v4800, 5.0
      %v4854 = vmul.f32 %v4802, 5.0
      %v4855 = vmul.f32 %v4804, 5.0
      %v4856 = vmul.f32 %v4806, 5.0
      %v4857 = vmul.f32 %v4808, 5.0
      %v4858 = vmul.f32 %v4810, 5.0
      %v4859 = vmul.f32 %v4812, 5.0
      %v4860 = vmul.f32 %v4814, 5.0
      %v4861 = vmul.f32 %v4816, 5.0
      %v4862 = vmul.f32 %v4818, 5.0
      %v4863 = vmul.f32 %v4820, 5.0
      %v4864 = vmul.f32 %v4822, 5.0
      %v4865 = vmul.f32 %v4824, 5.0
      %v4866 = vmul.f32 %v4826, 5.0
      %v4867 = vmul.f32 %v4828, 5.0
      %v4868 = vmul.f32 %v4830, 5.0
      %v4869 = vmul.f32 %v4832, 5.0
      %v4870 = vmul.f32 %v4834, 5.0
      %v4871 = vmul.f32 %v4836, 5.0
      %v4872 = vmul.f32 %v4838, 5.0
      %v4873 = vmul.f32 %v4840, 5.0
      %v4874 = vmul.f32 %v4842, 5.0
      %v4875 = vld [vmem:[%s410] sm:$0xff]
      %v4876 = vld [vmem:[%s410 + $0x8] sm:$0xff]
      %v4877 = vld [vmem:[%s410 + $0x10] sm:$0xff]
      %v4878 = vld [vmem:[%s410 + $0x18] sm:$0xff]
      %v4879 = vld [vmem:[%s410 + $0x20] sm:$0xff]
      %v4880 = vld [vmem:[%s410 + $0x28] sm:$0xff]
      %v4881 = vld [vmem:[%s410 + $0x30] sm:$0xff]
      %v4882 = vld [vmem:[%s410 + $0x38] sm:$0xff]
      %v4883 = vld [vmem:[%s410 + $0x40] sm:$0xff]
      %v4884 = vld [vmem:[%s410 + $0x48] sm:$0xff]
      %v4885 = vld [vmem:[%s410 + $0x50] sm:$0xff]
      %v4886 = vld [vmem:[%s410 + $0x58] sm:$0xff]
      %v4887 = vld [vmem:[%s410 + $0x60] sm:$0xff]
      %v4888 = vld [vmem:[%s410 + $0x68] sm:$0xff]
      %v4889 = vld [vmem:[%s410 + $0x70] sm:$0xff]
      %v4890 = vld [vmem:[%s410 + $0x78] sm:$0xff]
      %v4891 = vld [vmem:[%s410 + $0x80] sm:$0xff]
      %v4892 = vld [vmem:[%s410 + $0x88] sm:$0xff]
      %v4893 = vld [vmem:[%s410 + $0x90] sm:$0xff]
      %v4894 = vld [vmem:[%s410 + $0x98] sm:$0xff]
      %v4895 = vld [vmem:[%s410 + $0xa0] sm:$0xff]
      %v4896 = vld [vmem:[%s410 + $0xa8] sm:$0xff]
      %v4897 = vld [vmem:[%s410 + $0xb0] sm:$0xff]
      %v4898 = vld [vmem:[%s410 + $0xb8] sm:$0xff]
      %v4899 = vld [vmem:[%s410 + $0xc0] sm:$0xff]
      %v4900 = vld [vmem:[%s410 + $0xc8] sm:$0xff]
      %v4901 = vld [vmem:[%s410 + $0xd0] sm:$0xff]
      %v4902 = vld [vmem:[%s410 + $0xd8] sm:$0xff]
      %v4903 = vld [vmem:[%s410 + $0xe0] sm:$0xff]
      %v4904 = vld [vmem:[%s410 + $0xe8] sm:$0xff]
      %v4905 = vld [vmem:[%s410 + $0xf0] sm:$0xff]
      %v4906 = vld [vmem:[%s410 + $0xf8] sm:$0xff]
      %v4907 = vsub.f32 %v4875, %v4715
      %v4908 = vsub.f32 %v4876, %v4716
      %v4909 = vsub.f32 %v4877, %v4717
      %v4910 = vsub.f32 %v4878, %v4718
      %v4911 = vsub.f32 %v4879, %v4719
      %v4912 = vsub.f32 %v4880, %v4720
      %v4913 = vsub.f32 %v4881, %v4721
      %v4914 = vsub.f32 %v4882, %v4722
      %v4915 = vsub.f32 %v4883, %v4723
      %v4916 = vsub.f32 %v4884, %v4724
      %v4917 = vsub.f32 %v4885, %v4725
      %v4918 = vsub.f32 %v4886, %v4726
      %v4919 = vsub.f32 %v4887, %v4727
      %v4920 = vsub.f32 %v4888, %v4728
      %v4921 = vsub.f32 %v4889, %v4729
      %v4922 = vsub.f32 %v4890, %v4730
      %v4923 = vsub.f32 %v4891, %v4731
      %v4924 = vsub.f32 %v4892, %v4732
      %v4925 = vsub.f32 %v4893, %v4733
      %v4926 = vsub.f32 %v4894, %v4734
      %v4927 = vsub.f32 %v4895, %v4735
      %v4928 = vsub.f32 %v4896, %v4736
      %v4929 = vsub.f32 %v4897, %v4737
      %v4930 = vsub.f32 %v4898, %v4738
      %v4931 = vsub.f32 %v4899, %v4739
      %v4932 = vsub.f32 %v4900, %v4740
      %v4933 = vsub.f32 %v4901, %v4741
      %v4934 = vsub.f32 %v4902, %v4742
      %v4935 = vsub.f32 %v4903, %v4743
      %v4936 = vsub.f32 %v4904, %v4744
      %v4937 = vsub.f32 %v4905, %v4745
      %v4938 = vsub.f32 %v4906, %v4746
      %v4939 = vand.u32 2147483647, %v4907
      %v4940 = vand.u32 2147483647, %v4908
      %v4941 = vand.u32 2147483647, %v4909
      %v4942 = vand.u32 2147483647, %v4910
      %v4943 = vand.u32 2147483647, %v4911
      %v4944 = vand.u32 2147483647, %v4912
      %v4945 = vand.u32 2147483647, %v4913
      %v4946 = vand.u32 2147483647, %v4914
      %v4947 = vand.u32 2147483647, %v4915
      %v4948 = vand.u32 2147483647, %v4916
      %v4949 = vand.u32 2147483647, %v4917
      %v4950 = vand.u32 2147483647, %v4918
      %v4951 = vand.u32 2147483647, %v4919
      %v4952 = vand.u32 2147483647, %v4920
      %v4953 = vand.u32 2147483647, %v4921
      %v4954 = vand.u32 2147483647, %v4922
      %v4955 = vand.u32 2147483647, %v4923
      %v4956 = vand.u32 2147483647, %v4924
      %v4957 = vand.u32 2147483647, %v4925
      %v4958 = vand.u32 2147483647, %v4926
      %v4959 = vand.u32 2147483647, %v4927
      %v4960 = vand.u32 2147483647, %v4928
      %v4961 = vand.u32 2147483647, %v4929
      %v4962 = vand.u32 2147483647, %v4930
      %v4963 = vand.u32 2147483647, %v4931
      %v4964 = vand.u32 2147483647, %v4932
      %v4965 = vand.u32 2147483647, %v4933
      %v4966 = vand.u32 2147483647, %v4934
      %v4967 = vand.u32 2147483647, %v4935
      %v4968 = vand.u32 2147483647, %v4936
      %v4969 = vand.u32 2147483647, %v4937
      %v4970 = vand.u32 2147483647, %v4938
      %v4971 = vsel %vm4072, %v4939, 0.0
      %4972 = vadd.xlane.f32.xlu0 %v4971
      %v4973 = vpop.xlane.xlu0 %4972
      %v4974 = vsel %vm4072, %v4940, 0.0
      %4975 = vadd.xlane.f32.xlu0 %v4974
      %v4976 = vpop.xlane.xlu0 %4975
      %v4977 = vsel %vm4072, %v4941, 0.0
      %4978 = vadd.xlane.f32.xlu0 %v4977
      %v4979 = vpop.xlane.xlu0 %4978
      %v4980 = vsel %vm4072, %v4942, 0.0
      %4981 = vadd.xlane.f32.xlu0 %v4980
      %v4982 = vpop.xlane.xlu0 %4981
      %v4983 = vsel %vm4072, %v4943, 0.0
      %4984 = vadd.xlane.f32.xlu0 %v4983
      %v4985 = vpop.xlane.xlu0 %4984
      %v4986 = vsel %vm4072, %v4944, 0.0
      %4987 = vadd.xlane.f32.xlu0 %v4986
      %v4988 = vpop.xlane.xlu0 %4987
      %v4989 = vsel %vm4072, %v4945, 0.0
      %4990 = vadd.xlane.f32.xlu0 %v4989
      %v4991 = vpop.xlane.xlu0 %4990
      %v4992 = vsel %vm4072, %v4946, 0.0
      %4993 = vadd.xlane.f32.xlu0 %v4992
      %v4994 = vpop.xlane.xlu0 %4993
      %v4995 = vsel %vm4072, %v4947, 0.0
      %4996 = vadd.xlane.f32.xlu0 %v4995
      %v4997 = vpop.xlane.xlu0 %4996
      %v4998 = vsel %vm4072, %v4948, 0.0
      %4999 = vadd.xlane.f32.xlu0 %v4998
      %v5000 = vpop.xlane.xlu0 %4999
      %v5001 = vsel %vm4072, %v4949, 0.0
      %5002 = vadd.xlane.f32.xlu0 %v5001
      %v5003 = vpop.xlane.xlu0 %5002
      %v5004 = vsel %vm4072, %v4950, 0.0
      %5005 = vadd.xlane.f32.xlu0 %v5004
      %v5006 = vpop.xlane.xlu0 %5005
      %v5007 = vsel %vm4072, %v4951, 0.0
      %5008 = vadd.xlane.f32.xlu0 %v5007
      %v5009 = vpop.xlane.xlu0 %5008
      %v5010 = vsel %vm4072, %v4952, 0.0
      %5011 = vadd.xlane.f32.xlu0 %v5010
      %v5012 = vpop.xlane.xlu0 %5011
      %v5013 = vsel %vm4072, %v4953, 0.0
      %5014 = vadd.xlane.f32.xlu0 %v5013
      %v5015 = vpop.xlane.xlu0 %5014
      %v5016 = vsel %vm4072, %v4954, 0.0
      %5017 = vadd.xlane.f32.xlu0 %v5016
      %v5018 = vpop.xlane.xlu0 %5017
      %v5019 = vsel %vm4072, %v4955, 0.0
      %5020 = vadd.xlane.f32.xlu0 %v5019
      %v5021 = vpop.xlane.xlu0 %5020
      %v5022 = vsel %vm4072, %v4956, 0.0
      %5023 = vadd.xlane.f32.xlu0 %v5022
      %v5024 = vpop.xlane.xlu0 %5023
      %v5025 = vsel %vm4072, %v4957, 0.0
      %5026 = vadd.xlane.f32.xlu0 %v5025
      %v5027 = vpop.xlane.xlu0 %5026
      %v5028 = vsel %vm4072, %v4958, 0.0
      %5029 = vadd.xlane.f32.xlu0 %v5028
      %v5030 = vpop.xlane.xlu0 %5029
      %v5031 = vsel %vm4072, %v4959, 0.0
      %5032 = vadd.xlane.f32.xlu0 %v5031
      %v5033 = vpop.xlane.xlu0 %5032
      %v5034 = vsel %vm4072, %v4960, 0.0
      %5035 = vadd.xlane.f32.xlu0 %v5034
      %v5036 = vpop.xlane.xlu0 %5035
      %v5037 = vsel %vm4072, %v4961, 0.0
      %5038 = vadd.xlane.f32.xlu0 %v5037
      %v5039 = vpop.xlane.xlu0 %5038
      %v5040 = vsel %vm4072, %v4962, 0.0
      %5041 = vadd.xlane.f32.xlu0 %v5040
      %v5042 = vpop.xlane.xlu0 %5041
      %v5043 = vsel %vm4072, %v4963, 0.0
      %5044 = vadd.xlane.f32.xlu0 %v5043
      %v5045 = vpop.xlane.xlu0 %5044
      %v5046 = vsel %vm4072, %v4964, 0.0
      %5047 = vadd.xlane.f32.xlu0 %v5046
      %v5048 = vpop.xlane.xlu0 %5047
      %v5049 = vsel %vm4072, %v4965, 0.0
      %5050 = vadd.xlane.f32.xlu0 %v5049
      %v5051 = vpop.xlane.xlu0 %5050
      %v5052 = vsel %vm4072, %v4966, 0.0
      %5053 = vadd.xlane.f32.xlu0 %v5052
      %v5054 = vpop.xlane.xlu0 %5053
      %v5055 = vsel %vm4072, %v4967, 0.0
      %5056 = vadd.xlane.f32.xlu0 %v5055
      %v5057 = vpop.xlane.xlu0 %5056
      %v5058 = vsel %vm4072, %v4968, 0.0
      %5059 = vadd.xlane.f32.xlu0 %v5058
      %v5060 = vpop.xlane.xlu0 %5059
      %v5061 = vsel %vm4072, %v4969, 0.0
      %5062 = vadd.xlane.f32.xlu0 %v5061
      %v5063 = vpop.xlane.xlu0 %5062
      %v5064 = vsel %vm4072, %v4970, 0.0
      %5065 = vadd.xlane.f32.xlu0 %v5064
      %v5066 = vpop.xlane.xlu0 %5065
      %v5067 = vsub.f32 %v4875, %v4843
      %v5068 = vsub.f32 %v4876, %v4844
      %v5069 = vsub.f32 %v4877, %v4845
      %v5070 = vsub.f32 %v4878, %v4846
      %v5071 = vsub.f32 %v4879, %v4847
      %v5072 = vsub.f32 %v4880, %v4848
      %v5073 = vsub.f32 %v4881, %v4849
      %v5074 = vsub.f32 %v4882, %v4850
      %v5075 = vsub.f32 %v4883, %v4851
      %v5076 = vsub.f32 %v4884, %v4852
      %v5077 = vsub.f32 %v4885, %v4853
      %v5078 = vsub.f32 %v4886, %v4854
      %v5079 = vsub.f32 %v4887, %v4855
      %v5080 = vsub.f32 %v4888, %v4856
      %v5081 = vsub.f32 %v4889, %v4857
      %v5082 = vsub.f32 %v4890, %v4858
      %v5083 = vsub.f32 %v4891, %v4859
      %v5084 = vsub.f32 %v4892, %v4860
      %v5085 = vsub.f32 %v4893, %v4861
      %v5086 = vsub.f32 %v4894, %v4862
      %v5087 = vsub.f32 %v4895, %v4863
      %v5088 = vsub.f32 %v4896, %v4864
      %v5089 = vsub.f32 %v4897, %v4865
      %v5090 = vsub.f32 %v4898, %v4866
      %v5091 = vsub.f32 %v4899, %v4867
      %v5092 = vsub.f32 %v4900, %v4868
      %v5093 = vsub.f32 %v4901, %v4869
      %v5094 = vsub.f32 %v4902, %v4870
      %v5095 = vsub.f32 %v4903, %v4871
      %v5096 = vsub.f32 %v4904, %v4872
      %v5097 = vsub.f32 %v4905, %v4873
      %v5098 = vsub.f32 %v4906, %v4874
      %v5099 = vand.u32 2147483647, %v5067
      %v5100 = vand.u32 2147483647, %v5068
      %v5101 = vand.u32 2147483647, %v5069
      %v5102 = vand.u32 2147483647, %v5070
      %v5103 = vand.u32 2147483647, %v5071
      %v5104 = vand.u32 2147483647, %v5072
      %v5105 = vand.u32 2147483647, %v5073
      %v5106 = vand.u32 2147483647, %v5074
      %v5107 = vand.u32 2147483647, %v5075
      %v5108 = vand.u32 2147483647, %v5076
      %v5109 = vand.u32 2147483647, %v5077
      %v5110 = vand.u32 2147483647, %v5078
      %v5111 = vand.u32 2147483647, %v5079
      %v5112 = vand.u32 2147483647, %v5080
      %v5113 = vand.u32 2147483647, %v5081
      %v5114 = vand.u32 2147483647, %v5082
      %v5115 = vand.u32 2147483647, %v5083
      %v5116 = vand.u32 2147483647, %v5084
      %v5117 = vand.u32 2147483647, %v5085
      %v5118 = vand.u32 2147483647, %v5086
      %v5119 = vand.u32 2147483647, %v5087
      %v5120 = vand.u32 2147483647, %v5088
      %v5121 = vand.u32 2147483647, %v5089
      %v5122 = vand.u32 2147483647, %v5090
      %v5123 = vand.u32 2147483647, %v5091
      %v5124 = vand.u32 2147483647, %v5092
      %v5125 = vand.u32 2147483647, %v5093
      %v5126 = vand.u32 2147483647, %v5094
      %v5127 = vand.u32 2147483647, %v5095
      %v5128 = vand.u32 2147483647, %v5096
      %v5129 = vand.u32 2147483647, %v5097
      %v5130 = vand.u32 2147483647, %v5098
      %5163 = vrot.lane.b32.xlu0 %v5099, 126
      %v5164 = vpop.permute.xlu0 %5163
      %5165 = vrot.lane.b32.xlu0 %v5100, 126
      %v5166 = vpop.permute.xlu0 %5165
      %5167 = vrot.lane.b32.xlu0 %v5101, 126
      %v5168 = vpop.permute.xlu0 %5167
      %5169 = vrot.lane.b32.xlu0 %v5102, 126
      %v5170 = vpop.permute.xlu0 %5169
      %5171 = vrot.lane.b32.xlu0 %v5103, 126
      %v5172 = vpop.permute.xlu0 %5171
      %5173 = vrot.lane.b32.xlu0 %v5104, 126
      %v5174 = vpop.permute.xlu0 %5173
      %5175 = vrot.lane.b32.xlu0 %v5105, 126
      %v5176 = vpop.permute.xlu0 %5175
      %5177 = vrot.lane.b32.xlu0 %v5106, 126
      %v5178 = vpop.permute.xlu0 %5177
      %5179 = vrot.lane.b32.xlu0 %v5107, 126
      %v5180 = vpop.permute.xlu0 %5179
      %5181 = vrot.lane.b32.xlu0 %v5108, 126
      %v5182 = vpop.permute.xlu0 %5181
      %5183 = vrot.lane.b32.xlu0 %v5109, 126
      %v5184 = vpop.permute.xlu0 %5183
      %5185 = vrot.lane.b32.xlu0 %v5110, 126
      %v5186 = vpop.permute.xlu0 %5185
      %5187 = vrot.lane.b32.xlu0 %v5111, 126
      %v5188 = vpop.permute.xlu0 %5187
      %5189 = vrot.lane.b32.xlu0 %v5112, 126
      %v5190 = vpop.permute.xlu0 %5189
      %5191 = vrot.lane.b32.xlu0 %v5113, 126
      %v5192 = vpop.permute.xlu0 %5191
      %5193 = vrot.lane.b32.xlu0 %v5114, 126
      %v5194 = vpop.permute.xlu0 %5193
      %5195 = vrot.lane.b32.xlu0 %v5115, 126
      %v5196 = vpop.permute.xlu0 %5195
      %5197 = vrot.lane.b32.xlu0 %v5116, 126
      %v5198 = vpop.permute.xlu0 %5197
      %5199 = vrot.lane.b32.xlu0 %v5117, 126
      %v5200 = vpop.permute.xlu0 %5199
      %5201 = vrot.lane.b32.xlu0 %v5118, 126
      %v5202 = vpop.permute.xlu0 %5201
      %5203 = vrot.lane.b32.xlu0 %v5119, 126
      %v5204 = vpop.permute.xlu0 %5203
      %5205 = vrot.lane.b32.xlu0 %v5120, 126
      %v5206 = vpop.permute.xlu0 %5205
      %5207 = vrot.lane.b32.xlu0 %v5121, 126
      %v5208 = vpop.permute.xlu0 %5207
      %5209 = vrot.lane.b32.xlu0 %v5122, 126
      %v5210 = vpop.permute.xlu0 %5209
      %5211 = vrot.lane.b32.xlu0 %v5123, 126
      %v5212 = vpop.permute.xlu0 %5211
      %5213 = vrot.lane.b32.xlu0 %v5124, 126
      %v5214 = vpop.permute.xlu0 %5213
      %5215 = vrot.lane.b32.xlu0 %v5125, 126
      %v5216 = vpop.permute.xlu0 %5215
      %5217 = vrot.lane.b32.xlu0 %v5126, 126
      %v5218 = vpop.permute.xlu0 %5217
      %5219 = vrot.lane.b32.xlu0 %v5127, 126
      %v5220 = vpop.permute.xlu0 %5219
      %5221 = vrot.lane.b32.xlu0 %v5128, 126
      %v5222 = vpop.permute.xlu0 %5221
      %5223 = vrot.lane.b32.xlu0 %v5129, 126
      %v5224 = vpop.permute.xlu0 %5223
      %5225 = vrot.lane.b32.xlu0 %v5130, 126
      %v5226 = vpop.permute.xlu0 %5225
      %v5259 = vsel %vm4072, %v5164, 0.0
      %5260 = vadd.xlane.f32.xlu0 %v5259
      %v5261 = vpop.xlane.xlu0 %5260
      %v5262 = vsel %vm4072, %v5166, 0.0
      %5263 = vadd.xlane.f32.xlu0 %v5262
      %v5264 = vpop.xlane.xlu0 %5263
      %v5265 = vsel %vm4072, %v5168, 0.0
      %5266 = vadd.xlane.f32.xlu0 %v5265
      %v5267 = vpop.xlane.xlu0 %5266
      %v5268 = vsel %vm4072, %v5170, 0.0
      %5269 = vadd.xlane.f32.xlu0 %v5268
      %v5270 = vpop.xlane.xlu0 %5269
      %v5271 = vsel %vm4072, %v5172, 0.0
      %5272 = vadd.xlane.f32.xlu0 %v5271
      %v5273 = vpop.xlane.xlu0 %5272
      %v5274 = vsel %vm4072, %v5174, 0.0
      %5275 = vadd.xlane.f32.xlu0 %v5274
      %v5276 = vpop.xlane.xlu0 %5275
      %v5277 = vsel %vm4072, %v5176, 0.0
      %5278 = vadd.xlane.f32.xlu0 %v5277
      %v5279 = vpop.xlane.xlu0 %5278
      %v5280 = vsel %vm4072, %v5178, 0.0
      %5281 = vadd.xlane.f32.xlu0 %v5280
      %v5282 = vpop.xlane.xlu0 %5281
      %v5283 = vsel %vm4072, %v5180, 0.0
      %5284 = vadd.xlane.f32.xlu0 %v5283
      %v5285 = vpop.xlane.xlu0 %5284
      %v5286 = vsel %vm4072, %v5182, 0.0
      %5287 = vadd.xlane.f32.xlu0 %v5286
      %v5288 = vpop.xlane.xlu0 %5287
      %v5289 = vsel %vm4072, %v5184, 0.0
      %5290 = vadd.xlane.f32.xlu0 %v5289
      %v5291 = vpop.xlane.xlu0 %5290
      %v5292 = vsel %vm4072, %v5186, 0.0
      %5293 = vadd.xlane.f32.xlu0 %v5292
      %v5294 = vpop.xlane.xlu0 %5293
      %v5295 = vsel %vm4072, %v5188, 0.0
      %5296 = vadd.xlane.f32.xlu0 %v5295
      %v5297 = vpop.xlane.xlu0 %5296
      %v5298 = vsel %vm4072, %v5190, 0.0
      %5299 = vadd.xlane.f32.xlu0 %v5298
      %v5300 = vpop.xlane.xlu0 %5299
      %v5301 = vsel %vm4072, %v5192, 0.0
      %5302 = vadd.xlane.f32.xlu0 %v5301
      %v5303 = vpop.xlane.xlu0 %5302
      %v5304 = vsel %vm4072, %v5194, 0.0
      %5305 = vadd.xlane.f32.xlu0 %v5304
      %v5306 = vpop.xlane.xlu0 %5305
      %v5307 = vsel %vm4072, %v5196, 0.0
      %5308 = vadd.xlane.f32.xlu0 %v5307
      %v5309 = vpop.xlane.xlu0 %5308
      %v5310 = vsel %vm4072, %v5198, 0.0
      %5311 = vadd.xlane.f32.xlu0 %v5310
      %v5312 = vpop.xlane.xlu0 %5311
      %v5313 = vsel %vm4072, %v5200, 0.0
      %5314 = vadd.xlane.f32.xlu0 %v5313
      %v5315 = vpop.xlane.xlu0 %5314
      %v5316 = vsel %vm4072, %v5202, 0.0
      %5317 = vadd.xlane.f32.xlu0 %v5316
      %v5318 = vpop.xlane.xlu0 %5317
      %v5319 = vsel %vm4072, %v5204, 0.0
      %5320 = vadd.xlane.f32.xlu0 %v5319
      %v5321 = vpop.xlane.xlu0 %5320
      %v5322 = vsel %vm4072, %v5206, 0.0
      %5323 = vadd.xlane.f32.xlu0 %v5322
      %v5324 = vpop.xlane.xlu0 %5323
      %v5325 = vsel %vm4072, %v5208, 0.0
      %5326 = vadd.xlane.f32.xlu0 %v5325
      %v5327 = vpop.xlane.xlu0 %5326
      %v5328 = vsel %vm4072, %v5210, 0.0
      %5329 = vadd.xlane.f32.xlu0 %v5328
      %v5330 = vpop.xlane.xlu0 %5329
      %v5331 = vsel %vm4072, %v5212, 0.0
      %5332 = vadd.xlane.f32.xlu0 %v5331
      %v5333 = vpop.xlane.xlu0 %5332
      %v5334 = vsel %vm4072, %v5214, 0.0
      %5335 = vadd.xlane.f32.xlu0 %v5334
      %v5336 = vpop.xlane.xlu0 %5335
      %v5337 = vsel %vm4072, %v5216, 0.0
      %5338 = vadd.xlane.f32.xlu0 %v5337
      %v5339 = vpop.xlane.xlu0 %5338
      %v5340 = vsel %vm4072, %v5218, 0.0
      %5341 = vadd.xlane.f32.xlu0 %v5340
      %v5342 = vpop.xlane.xlu0 %5341
      %v5343 = vsel %vm4072, %v5220, 0.0
      %5344 = vadd.xlane.f32.xlu0 %v5343
      %v5345 = vpop.xlane.xlu0 %5344
      %v5346 = vsel %vm4072, %v5222, 0.0
      %5347 = vadd.xlane.f32.xlu0 %v5346
      %v5348 = vpop.xlane.xlu0 %5347
      %v5349 = vsel %vm4072, %v5224, 0.0
      %5350 = vadd.xlane.f32.xlu0 %v5349
      %v5351 = vpop.xlane.xlu0 %5350
      %v5352 = vsel %vm4072, %v5226, 0.0
      %5353 = vadd.xlane.f32.xlu0 %v5352
      %v5354 = vpop.xlane.xlu0 %5353
      %v5355 = vadd.f32 %v4973, %v5261
      %v5356 = vadd.f32 %v4976, %v5264
      %v5357 = vadd.f32 %v4979, %v5267
      %v5358 = vadd.f32 %v4982, %v5270
      %v5359 = vadd.f32 %v4985, %v5273
      %v5360 = vadd.f32 %v4988, %v5276
      %v5361 = vadd.f32 %v4991, %v5279
      %v5362 = vadd.f32 %v4994, %v5282
      %v5363 = vadd.f32 %v4997, %v5285
      %v5364 = vadd.f32 %v5000, %v5288
      %v5365 = vadd.f32 %v5003, %v5291
      %v5366 = vadd.f32 %v5006, %v5294
      %v5367 = vadd.f32 %v5009, %v5297
      %v5368 = vadd.f32 %v5012, %v5300
      %v5369 = vadd.f32 %v5015, %v5303
      %v5370 = vadd.f32 %v5018, %v5306
      %v5371 = vadd.f32 %v5021, %v5309
      %v5372 = vadd.f32 %v5024, %v5312
      %v5373 = vadd.f32 %v5027, %v5315
      %v5374 = vadd.f32 %v5030, %v5318
      %v5375 = vadd.f32 %v5033, %v5321
      %v5376 = vadd.f32 %v5036, %v5324
      %v5377 = vadd.f32 %v5039, %v5327
      %v5378 = vadd.f32 %v5042, %v5330
      %v5379 = vadd.f32 %v5045, %v5333
      %v5380 = vadd.f32 %v5048, %v5336
      %v5381 = vadd.f32 %v5051, %v5339
      %v5382 = vadd.f32 %v5054, %v5342
      %v5383 = vadd.f32 %v5057, %v5345
      %v5384 = vadd.f32 %v5060, %v5348
      %v5385 = vadd.f32 %v5063, %v5351
      %v5386 = vadd.f32 %v5066, %v5354
      %vm5387 = vcmp.ne.s32.totalorder %v3996, 0
      %vm5388 = vcmp.ne.s32.totalorder %v3997, 0
      %vm5389 = vcmp.ne.s32.totalorder %v3998, 0
      %vm5390 = vcmp.ne.s32.totalorder %v3999, 0
      %vm5391 = vcmp.ne.s32.totalorder %v4000, 0
      %vm5392 = vcmp.ne.s32.totalorder %v4001, 0
      %vm5393 = vcmp.ne.s32.totalorder %v4002, 0
      %vm5394 = vcmp.ne.s32.totalorder %v4003, 0
      %vm5395 = vcmp.ne.s32.totalorder %v4004, 0
      %vm5396 = vcmp.ne.s32.totalorder %v4005, 0
      %vm5397 = vcmp.ne.s32.totalorder %v4006, 0
      %vm5398 = vcmp.ne.s32.totalorder %v4007, 0
      %vm5399 = vcmp.ne.s32.totalorder %v4008, 0
      %vm5400 = vcmp.ne.s32.totalorder %v4009, 0
      %vm5401 = vcmp.ne.s32.totalorder %v4010, 0
      %vm5402 = vcmp.ne.s32.totalorder %v4011, 0
      %vm5403 = vcmp.ne.s32.totalorder %v4012, 0
      %vm5404 = vcmp.ne.s32.totalorder %v4013, 0
      %vm5405 = vcmp.ne.s32.totalorder %v4014, 0
      %vm5406 = vcmp.ne.s32.totalorder %v4015, 0
      %vm5407 = vcmp.ne.s32.totalorder %v4016, 0
      %vm5408 = vcmp.ne.s32.totalorder %v4017, 0
      %vm5409 = vcmp.ne.s32.totalorder %v4018, 0
      %vm5410 = vcmp.ne.s32.totalorder %v4019, 0
      %vm5411 = vcmp.ne.s32.totalorder %v4020, 0
      %vm5412 = vcmp.ne.s32.totalorder %v4021, 0
      %vm5413 = vcmp.ne.s32.totalorder %v4022, 0
      %vm5414 = vcmp.ne.s32.totalorder %v4023, 0
      %vm5415 = vcmp.ne.s32.totalorder %v4024, 0
      %vm5416 = vcmp.ne.s32.totalorder %v4025, 0
      %vm5417 = vcmp.ne.s32.totalorder %v4026, 0
      %vm5418 = vcmp.ne.s32.totalorder %v4027, 0
      %v5419 = vsel %vm5387, %v5355, 0.0
      %v5420 = vsel %vm5388, %v5356, 0.0
      %v5421 = vsel %vm5389, %v5357, 0.0
      %v5422 = vsel %vm5390, %v5358, 0.0
      %v5423 = vsel %vm5391, %v5359, 0.0
      %v5424 = vsel %vm5392, %v5360, 0.0
      %v5425 = vsel %vm5393, %v5361, 0.0
      %v5426 = vsel %vm5394, %v5362, 0.0
      %v5427 = vsel %vm5395, %v5363, 0.0
      %v5428 = vsel %vm5396, %v5364, 0.0
      %v5429 = vsel %vm5397, %v5365, 0.0
      %v5430 = vsel %vm5398, %v5366, 0.0
      %v5431 = vsel %vm5399, %v5367, 0.0
      %v5432 = vsel %vm5400, %v5368, 0.0
      %v5433 = vsel %vm5401, %v5369, 0.0
      %v5434 = vsel %vm5402, %v5370, 0.0
      %v5435 = vsel %vm5403, %v5371, 0.0
      %v5436 = vsel %vm5404, %v5372, 0.0
      %v5437 = vsel %vm5405, %v5373, 0.0
      %v5438 = vsel %vm5406, %v5374, 0.0
      %v5439 = vsel %vm5407, %v5375, 0.0
      %v5440 = vsel %vm5408, %v5376, 0.0
      %v5441 = vsel %vm5409, %v5377, 0.0
      %v5442 = vsel %vm5410, %v5378, 0.0
      %v5443 = vsel %vm5411, %v5379, 0.0
      %v5444 = vsel %vm5412, %v5380, 0.0
      %v5445 = vsel %vm5413, %v5381, 0.0
      %v5446 = vsel %vm5414, %v5382, 0.0
      %v5447 = vsel %vm5415, %v5383, 0.0
      %v5448 = vsel %vm5416, %v5384, 0.0
      %v5449 = vsel %vm5417, %v5385, 0.0
      %v5450 = vsel %vm5418, %v5386, 0.0
      %5451 = vst.msk [vmem:[%s425] sm:$0xff] %vm4028, %v5419
      %5452 = vst.msk [vmem:[%s425 + $0x8] sm:$0xff] %vm4028, %v5420
      %5453 = vst.msk [vmem:[%s425 + $0x10] sm:$0xff] %vm4028, %v5421
      %5454 = vst.msk [vmem:[%s425 + $0x18] sm:$0xff] %vm4028, %v5422
      %5455 = vst.msk [vmem:[%s425 + $0x20] sm:$0xff] %vm4028, %v5423
      %5456 = vst.msk [vmem:[%s425 + $0x28] sm:$0xff] %vm4028, %v5424
      %5457 = vst.msk [vmem:[%s425 + $0x30] sm:$0xff] %vm4028, %v5425
      %5458 = vst.msk [vmem:[%s425 + $0x38] sm:$0xff] %vm4028, %v5426
      %5459 = vst.msk [vmem:[%s425 + $0x40] sm:$0xff] %vm4028, %v5427
      %5460 = vst.msk [vmem:[%s425 + $0x48] sm:$0xff] %vm4028, %v5428
      %5461 = vst.msk [vmem:[%s425 + $0x50] sm:$0xff] %vm4028, %v5429
      %5462 = vst.msk [vmem:[%s425 + $0x58] sm:$0xff] %vm4028, %v5430
      %5463 = vst.msk [vmem:[%s425 + $0x60] sm:$0xff] %vm4028, %v5431
      %5464 = vst.msk [vmem:[%s425 + $0x68] sm:$0xff] %vm4028, %v5432
      %5465 = vst.msk [vmem:[%s425 + $0x70] sm:$0xff] %vm4028, %v5433
      %5466 = vst.msk [vmem:[%s425 + $0x78] sm:$0xff] %vm4028, %v5434
      %5467 = vst.msk [vmem:[%s425 + $0x80] sm:$0xff] %vm4028, %v5435
      %5468 = vst.msk [vmem:[%s425 + $0x88] sm:$0xff] %vm4028, %v5436
      %5469 = vst.msk [vmem:[%s425 + $0x90] sm:$0xff] %vm4028, %v5437
      %5470 = vst.msk [vmem:[%s425 + $0x98] sm:$0xff] %vm4028, %v5438
      %5471 = vst.msk [vmem:[%s425 + $0xa0] sm:$0xff] %vm4028, %v5439
      %5472 = vst.msk [vmem:[%s425 + $0xa8] sm:$0xff] %vm4028, %v5440
      %5473 = vst.msk [vmem:[%s425 + $0xb0] sm:$0xff] %vm4028, %v5441
      %5474 = vst.msk [vmem:[%s425 + $0xb8] sm:$0xff] %vm4028, %v5442
      %5475 = vst.msk [vmem:[%s425 + $0xc0] sm:$0xff] %vm4028, %v5443
      %5476 = vst.msk [vmem:[%s425 + $0xc8] sm:$0xff] %vm4028, %v5444
      %5477 = vst.msk [vmem:[%s425 + $0xd0] sm:$0xff] %vm4028, %v5445
      %5478 = vst.msk [vmem:[%s425 + $0xd8] sm:$0xff] %vm4028, %v5446
      %5479 = vst.msk [vmem:[%s425 + $0xe0] sm:$0xff] %vm4028, %v5447
      %5480 = vst.msk [vmem:[%s425 + $0xe8] sm:$0xff] %vm4028, %v5448
      %5481 = vst.msk [vmem:[%s425 + $0xf0] sm:$0xff] %vm4028, %v5449
      %5482 = vst.msk [vmem:[%s425 + $0xf8] sm:$0xff] %vm4028, %v5450
      %v5483 = vld [vmem:[%s405] sm:$0xff]
      %v5484 = vld [vmem:[%s405 + $0x8] sm:$0xff]
      %v5485 = vld [vmem:[%s405 + $0x10] sm:$0xff]
      %v5486 = vld [vmem:[%s405 + $0x18] sm:$0xff]
      %v5487 = vld [vmem:[%s405 + $0x20] sm:$0xff]
      %v5488 = vld [vmem:[%s405 + $0x28] sm:$0xff]
      %v5489 = vld [vmem:[%s405 + $0x30] sm:$0xff]
      %v5490 = vld [vmem:[%s405 + $0x38] sm:$0xff]
      %v5491 = vld [vmem:[%s405 + $0x40] sm:$0xff]
      %v5492 = vld [vmem:[%s405 + $0x48] sm:$0xff]
      %v5493 = vld [vmem:[%s405 + $0x50] sm:$0xff]
      %v5494 = vld [vmem:[%s405 + $0x58] sm:$0xff]
      %v5495 = vld [vmem:[%s405 + $0x60] sm:$0xff]
      %v5496 = vld [vmem:[%s405 + $0x68] sm:$0xff]
      %v5497 = vld [vmem:[%s405 + $0x70] sm:$0xff]
      %v5498 = vld [vmem:[%s405 + $0x78] sm:$0xff]
      %v5499 = vld [vmem:[%s405 + $0x80] sm:$0xff]
      %v5500 = vld [vmem:[%s405 + $0x88] sm:$0xff]
      %v5501 = vld [vmem:[%s405 + $0x90] sm:$0xff]
      %v5502 = vld [vmem:[%s405 + $0x98] sm:$0xff]
      %v5503 = vld [vmem:[%s405 + $0xa0] sm:$0xff]
      %v5504 = vld [vmem:[%s405 + $0xa8] sm:$0xff]
      %v5505 = vld [vmem:[%s405 + $0xb0] sm:$0xff]
      %v5506 = vld [vmem:[%s405 + $0xb8] sm:$0xff]
      %v5507 = vld [vmem:[%s405 + $0xc0] sm:$0xff]
      %v5508 = vld [vmem:[%s405 + $0xc8] sm:$0xff]
      %v5509 = vld [vmem:[%s405 + $0xd0] sm:$0xff]
      %v5510 = vld [vmem:[%s405 + $0xd8] sm:$0xff]
      %v5511 = vld [vmem:[%s405 + $0xe0] sm:$0xff]
      %v5512 = vld [vmem:[%s405 + $0xe8] sm:$0xff]
      %v5513 = vld [vmem:[%s405 + $0xf0] sm:$0xff]
      %v5514 = vld [vmem:[%s405 + $0xf8] sm:$0xff]
      %v5515 = vsel %vm1930, %v5483, -inf
      %5516 = vmax.xlane.f32.xlu0 %v5515
      %v5517 = vpop.xlane.xlu0 %5516
      %v5518 = vsel %vm1930, %v5484, -inf
      %5519 = vmax.xlane.f32.xlu0 %v5518
      %v5520 = vpop.xlane.xlu0 %5519
      %v5521 = vsel %vm1930, %v5485, -inf
      %5522 = vmax.xlane.f32.xlu0 %v5521
      %v5523 = vpop.xlane.xlu0 %5522
      %v5524 = vsel %vm1930, %v5486, -inf
      %5525 = vmax.xlane.f32.xlu0 %v5524
      %v5526 = vpop.xlane.xlu0 %5525
      %v5527 = vsel %vm1930, %v5487, -inf
      %5528 = vmax.xlane.f32.xlu0 %v5527
      %v5529 = vpop.xlane.xlu0 %5528
      %v5530 = vsel %vm1930, %v5488, -inf
      %5531 = vmax.xlane.f32.xlu0 %v5530
      %v5532 = vpop.xlane.xlu0 %5531
      %v5533 = vsel %vm1930, %v5489, -inf
      %5534 = vmax.xlane.f32.xlu0 %v5533
      %v5535 = vpop.xlane.xlu0 %5534
      %v5536 = vsel %vm1930, %v5490, -inf
      %5537 = vmax.xlane.f32.xlu0 %v5536
      %v5538 = vpop.xlane.xlu0 %5537
      %v5539 = vsel %vm1930, %v5491, -inf
      %5540 = vmax.xlane.f32.xlu0 %v5539
      %v5541 = vpop.xlane.xlu0 %5540
      %v5542 = vsel %vm1930, %v5492, -inf
      %5543 = vmax.xlane.f32.xlu0 %v5542
      %v5544 = vpop.xlane.xlu0 %5543
      %v5545 = vsel %vm1930, %v5493, -inf
      %5546 = vmax.xlane.f32.xlu0 %v5545
      %v5547 = vpop.xlane.xlu0 %5546
      %v5548 = vsel %vm1930, %v5494, -inf
      %5549 = vmax.xlane.f32.xlu0 %v5548
      %v5550 = vpop.xlane.xlu0 %5549
      %v5551 = vsel %vm1930, %v5495, -inf
      %5552 = vmax.xlane.f32.xlu0 %v5551
      %v5553 = vpop.xlane.xlu0 %5552
      %v5554 = vsel %vm1930, %v5496, -inf
      %5555 = vmax.xlane.f32.xlu0 %v5554
      %v5556 = vpop.xlane.xlu0 %5555
      %v5557 = vsel %vm1930, %v5497, -inf
      %5558 = vmax.xlane.f32.xlu0 %v5557
      %v5559 = vpop.xlane.xlu0 %5558
      %v5560 = vsel %vm1930, %v5498, -inf
      %5561 = vmax.xlane.f32.xlu0 %v5560
      %v5562 = vpop.xlane.xlu0 %5561
      %v5563 = vsel %vm1930, %v5499, -inf
      %5564 = vmax.xlane.f32.xlu0 %v5563
      %v5565 = vpop.xlane.xlu0 %5564
      %v5566 = vsel %vm1930, %v5500, -inf
      %5567 = vmax.xlane.f32.xlu0 %v5566
      %v5568 = vpop.xlane.xlu0 %5567
      %v5569 = vsel %vm1930, %v5501, -inf
      %5570 = vmax.xlane.f32.xlu0 %v5569
      %v5571 = vpop.xlane.xlu0 %5570
      %v5572 = vsel %vm1930, %v5502, -inf
      %5573 = vmax.xlane.f32.xlu0 %v5572
      %v5574 = vpop.xlane.xlu0 %5573
      %v5575 = vsel %vm1930, %v5503, -inf
      %5576 = vmax.xlane.f32.xlu0 %v5575
      %v5577 = vpop.xlane.xlu0 %5576
      %v5578 = vsel %vm1930, %v5504, -inf
      %5579 = vmax.xlane.f32.xlu0 %v5578
      %v5580 = vpop.xlane.xlu0 %5579
      %v5581 = vsel %vm1930, %v5505, -inf
      %5582 = vmax.xlane.f32.xlu0 %v5581
      %v5583 = vpop.xlane.xlu0 %5582
      %v5584 = vsel %vm1930, %v5506, -inf
      %5585 = vmax.xlane.f32.xlu0 %v5584
      %v5586 = vpop.xlane.xlu0 %5585
      %v5587 = vsel %vm1930, %v5507, -inf
      %5588 = vmax.xlane.f32.xlu0 %v5587
      %v5589 = vpop.xlane.xlu0 %5588
      %v5590 = vsel %vm1930, %v5508, -inf
      %5591 = vmax.xlane.f32.xlu0 %v5590
      %v5592 = vpop.xlane.xlu0 %5591
      %v5593 = vsel %vm1930, %v5509, -inf
      %5594 = vmax.xlane.f32.xlu0 %v5593
      %v5595 = vpop.xlane.xlu0 %5594
      %v5596 = vsel %vm1930, %v5510, -inf
      %5597 = vmax.xlane.f32.xlu0 %v5596
      %v5598 = vpop.xlane.xlu0 %5597
      %v5599 = vsel %vm1930, %v5511, -inf
      %5600 = vmax.xlane.f32.xlu0 %v5599
      %v5601 = vpop.xlane.xlu0 %5600
      %v5602 = vsel %vm1930, %v5512, -inf
      %5603 = vmax.xlane.f32.xlu0 %v5602
      %v5604 = vpop.xlane.xlu0 %5603
      %v5605 = vsel %vm1930, %v5513, -inf
      %5606 = vmax.xlane.f32.xlu0 %v5605
      %v5607 = vpop.xlane.xlu0 %5606
      %v5608 = vsel %vm1930, %v5514, -inf
      %5609 = vmax.xlane.f32.xlu0 %v5608
      %v5610 = vpop.xlane.xlu0 %5609
      %v5611 = vsub.f32 %v5483, %v5517
      %v5612 = vsub.f32 %v5484, %v5520
      %v5613 = vsub.f32 %v5485, %v5523
      %v5614 = vsub.f32 %v5486, %v5526
      %v5615 = vsub.f32 %v5487, %v5529
      %v5616 = vsub.f32 %v5488, %v5532
      %v5617 = vsub.f32 %v5489, %v5535
      %v5618 = vsub.f32 %v5490, %v5538
      %v5619 = vsub.f32 %v5491, %v5541
      %v5620 = vsub.f32 %v5492, %v5544
      %v5621 = vsub.f32 %v5493, %v5547
      %v5622 = vsub.f32 %v5494, %v5550
      %v5623 = vsub.f32 %v5495, %v5553
      %v5624 = vsub.f32 %v5496, %v5556
      %v5625 = vsub.f32 %v5497, %v5559
      %v5626 = vsub.f32 %v5498, %v5562
      %v5627 = vsub.f32 %v5499, %v5565
      %v5628 = vsub.f32 %v5500, %v5568
      %v5629 = vsub.f32 %v5501, %v5571
      %v5630 = vsub.f32 %v5502, %v5574
      %v5631 = vsub.f32 %v5503, %v5577
      %v5632 = vsub.f32 %v5504, %v5580
      %v5633 = vsub.f32 %v5505, %v5583
      %v5634 = vsub.f32 %v5506, %v5586
      %v5635 = vsub.f32 %v5507, %v5589
      %v5636 = vsub.f32 %v5508, %v5592
      %v5637 = vsub.f32 %v5509, %v5595
      %v5638 = vsub.f32 %v5510, %v5598
      %v5639 = vsub.f32 %v5511, %v5601
      %v5640 = vsub.f32 %v5512, %v5604
      %v5641 = vsub.f32 %v5513, %v5607
      %v5642 = vsub.f32 %v5514, %v5610
      %v5643 = vmul.f32 %v5611, 1.442695
      %v5644 = vpow.pop %v5643
      %v5645 = vmul.f32 %v5612, 1.442695
      %v5646 = vpow.pop %v5645
      %v5647 = vmul.f32 %v5613, 1.442695
      %v5648 = vpow.pop %v5647
      %v5649 = vmul.f32 %v5614, 1.442695
      %v5650 = vpow.pop %v5649
      %v5651 = vmul.f32 %v5615, 1.442695
      %v5652 = vpow.pop %v5651
      %v5653 = vmul.f32 %v5616, 1.442695
      %v5654 = vpow.pop %v5653
      %v5655 = vmul.f32 %v5617, 1.442695
      %v5656 = vpow.pop %v5655
      %v5657 = vmul.f32 %v5618, 1.442695
      %v5658 = vpow.pop %v5657
      %v5659 = vmul.f32 %v5619, 1.442695
      %v5660 = vpow.pop %v5659
      %v5661 = vmul.f32 %v5620, 1.442695
      %v5662 = vpow.pop %v5661
      %v5663 = vmul.f32 %v5621, 1.442695
      %v5664 = vpow.pop %v5663
      %v5665 = vmul.f32 %v5622, 1.442695
      %v5666 = vpow.pop %v5665
      %v5667 = vmul.f32 %v5623, 1.442695
      %v5668 = vpow.pop %v5667
      %v5669 = vmul.f32 %v5624, 1.442695
      %v5670 = vpow.pop %v5669
      %v5671 = vmul.f32 %v5625, 1.442695
      %v5672 = vpow.pop %v5671
      %v5673 = vmul.f32 %v5626, 1.442695
      %v5674 = vpow.pop %v5673
      %v5675 = vmul.f32 %v5627, 1.442695
      %v5676 = vpow.pop %v5675
      %v5677 = vmul.f32 %v5628, 1.442695
      %v5678 = vpow.pop %v5677
      %v5679 = vmul.f32 %v5629, 1.442695
      %v5680 = vpow.pop %v5679
      %v5681 = vmul.f32 %v5630, 1.442695
      %v5682 = vpow.pop %v5681
      %v5683 = vmul.f32 %v5631, 1.442695
      %v5684 = vpow.pop %v5683
      %v5685 = vmul.f32 %v5632, 1.442695
      %v5686 = vpow.pop %v5685
      %v5687 = vmul.f32 %v5633, 1.442695
      %v5688 = vpow.pop %v5687
      %v5689 = vmul.f32 %v5634, 1.442695
      %v5690 = vpow.pop %v5689
      %v5691 = vmul.f32 %v5635, 1.442695
      %v5692 = vpow.pop %v5691
      %v5693 = vmul.f32 %v5636, 1.442695
      %v5694 = vpow.pop %v5693
      %v5695 = vmul.f32 %v5637, 1.442695
      %v5696 = vpow.pop %v5695
      %v5697 = vmul.f32 %v5638, 1.442695
      %v5698 = vpow.pop %v5697
      %v5699 = vmul.f32 %v5639, 1.442695
      %v5700 = vpow.pop %v5699
      %v5701 = vmul.f32 %v5640, 1.442695
      %v5702 = vpow.pop %v5701
      %v5703 = vmul.f32 %v5641, 1.442695
      %v5704 = vpow.pop %v5703
      %v5705 = vmul.f32 %v5642, 1.442695
      %v5706 = vpow.pop %v5705
      %v5707 = vsel %vm1930, %v5644, 0.0
      %5708 = vadd.xlane.f32.xlu0 %v5707
      %v5709 = vpop.xlane.xlu0 %5708
      %v5710 = vsel %vm1930, %v5646, 0.0
      %5711 = vadd.xlane.f32.xlu0 %v5710
      %v5712 = vpop.xlane.xlu0 %5711
      %v5713 = vsel %vm1930, %v5648, 0.0
      %5714 = vadd.xlane.f32.xlu0 %v5713
      %v5715 = vpop.xlane.xlu0 %5714
      %v5716 = vsel %vm1930, %v5650, 0.0
      %5717 = vadd.xlane.f32.xlu0 %v5716
      %v5718 = vpop.xlane.xlu0 %5717
      %v5719 = vsel %vm1930, %v5652, 0.0
      %5720 = vadd.xlane.f32.xlu0 %v5719
      %v5721 = vpop.xlane.xlu0 %5720
      %v5722 = vsel %vm1930, %v5654, 0.0
      %5723 = vadd.xlane.f32.xlu0 %v5722
      %v5724 = vpop.xlane.xlu0 %5723
      %v5725 = vsel %vm1930, %v5656, 0.0
      %5726 = vadd.xlane.f32.xlu0 %v5725
      %v5727 = vpop.xlane.xlu0 %5726
      %v5728 = vsel %vm1930, %v5658, 0.0
      %5729 = vadd.xlane.f32.xlu0 %v5728
      %v5730 = vpop.xlane.xlu0 %5729
      %v5731 = vsel %vm1930, %v5660, 0.0
      %5732 = vadd.xlane.f32.xlu0 %v5731
      %v5733 = vpop.xlane.xlu0 %5732
      %v5734 = vsel %vm1930, %v5662, 0.0
      %5735 = vadd.xlane.f32.xlu0 %v5734
      %v5736 = vpop.xlane.xlu0 %5735
      %v5737 = vsel %vm1930, %v5664, 0.0
      %5738 = vadd.xlane.f32.xlu0 %v5737
      %v5739 = vpop.xlane.xlu0 %5738
      %v5740 = vsel %vm1930, %v5666, 0.0
      %5741 = vadd.xlane.f32.xlu0 %v5740
      %v5742 = vpop.xlane.xlu0 %5741
      %v5743 = vsel %vm1930, %v5668, 0.0
      %5744 = vadd.xlane.f32.xlu0 %v5743
      %v5745 = vpop.xlane.xlu0 %5744
      %v5746 = vsel %vm1930, %v5670, 0.0
      %5747 = vadd.xlane.f32.xlu0 %v5746
      %v5748 = vpop.xlane.xlu0 %5747
      %v5749 = vsel %vm1930, %v5672, 0.0
      %5750 = vadd.xlane.f32.xlu0 %v5749
      %v5751 = vpop.xlane.xlu0 %5750
      %v5752 = vsel %vm1930, %v5674, 0.0
      %5753 = vadd.xlane.f32.xlu0 %v5752
      %v5754 = vpop.xlane.xlu0 %5753
      %v5755 = vsel %vm1930, %v5676, 0.0
      %5756 = vadd.xlane.f32.xlu0 %v5755
      %v5757 = vpop.xlane.xlu0 %5756
      %v5758 = vsel %vm1930, %v5678, 0.0
      %5759 = vadd.xlane.f32.xlu0 %v5758
      %v5760 = vpop.xlane.xlu0 %5759
      %v5761 = vsel %vm1930, %v5680, 0.0
      %5762 = vadd.xlane.f32.xlu0 %v5761
      %v5763 = vpop.xlane.xlu0 %5762
      %v5764 = vsel %vm1930, %v5682, 0.0
      %5765 = vadd.xlane.f32.xlu0 %v5764
      %v5766 = vpop.xlane.xlu0 %5765
      %v5767 = vsel %vm1930, %v5684, 0.0
      %5768 = vadd.xlane.f32.xlu0 %v5767
      %v5769 = vpop.xlane.xlu0 %5768
      %v5770 = vsel %vm1930, %v5686, 0.0
      %5771 = vadd.xlane.f32.xlu0 %v5770
      %v5772 = vpop.xlane.xlu0 %5771
      %v5773 = vsel %vm1930, %v5688, 0.0
      %5774 = vadd.xlane.f32.xlu0 %v5773
      %v5775 = vpop.xlane.xlu0 %5774
      %v5776 = vsel %vm1930, %v5690, 0.0
      %5777 = vadd.xlane.f32.xlu0 %v5776
      %v5778 = vpop.xlane.xlu0 %5777
      %v5779 = vsel %vm1930, %v5692, 0.0
      %5780 = vadd.xlane.f32.xlu0 %v5779
      %v5781 = vpop.xlane.xlu0 %5780
      %v5782 = vsel %vm1930, %v5694, 0.0
      %5783 = vadd.xlane.f32.xlu0 %v5782
      %v5784 = vpop.xlane.xlu0 %5783
      %v5785 = vsel %vm1930, %v5696, 0.0
      %5786 = vadd.xlane.f32.xlu0 %v5785
      %v5787 = vpop.xlane.xlu0 %5786
      %v5788 = vsel %vm1930, %v5698, 0.0
      %5789 = vadd.xlane.f32.xlu0 %v5788
      %v5790 = vpop.xlane.xlu0 %5789
      %v5791 = vsel %vm1930, %v5700, 0.0
      %5792 = vadd.xlane.f32.xlu0 %v5791
      %v5793 = vpop.xlane.xlu0 %5792
      %v5794 = vsel %vm1930, %v5702, 0.0
      %5795 = vadd.xlane.f32.xlu0 %v5794
      %v5796 = vpop.xlane.xlu0 %5795
      %v5797 = vsel %vm1930, %v5704, 0.0
      %5798 = vadd.xlane.f32.xlu0 %v5797
      %v5799 = vpop.xlane.xlu0 %5798
      %v5800 = vsel %vm1930, %v5706, 0.0
      %5801 = vadd.xlane.f32.xlu0 %v5800
      %v5802 = vpop.xlane.xlu0 %5801
      %v5803 = vlog2.pop %v5709
      %v5804 = vmul.f32 %v5803, 0.6931472
      %v5805 = vlog2.pop %v5712
      %v5806 = vmul.f32 %v5805, 0.6931472
      %v5807 = vlog2.pop %v5715
      %v5808 = vmul.f32 %v5807, 0.6931472
      %v5809 = vlog2.pop %v5718
      %v5810 = vmul.f32 %v5809, 0.6931472
      %v5811 = vlog2.pop %v5721
      %v5812 = vmul.f32 %v5811, 0.6931472
      %v5813 = vlog2.pop %v5724
      %v5814 = vmul.f32 %v5813, 0.6931472
      %v5815 = vlog2.pop %v5727
      %v5816 = vmul.f32 %v5815, 0.6931472
      %v5817 = vlog2.pop %v5730
      %v5818 = vmul.f32 %v5817, 0.6931472
      %v5819 = vlog2.pop %v5733
      %v5820 = vmul.f32 %v5819, 0.6931472
      %v5821 = vlog2.pop %v5736
      %v5822 = vmul.f32 %v5821, 0.6931472
      %v5823 = vlog2.pop %v5739
      %v5824 = vmul.f32 %v5823, 0.6931472
      %v5825 = vlog2.pop %v5742
      %v5826 = vmul.f32 %v5825, 0.6931472
      %v5827 = vlog2.pop %v5745
      %v5828 = vmul.f32 %v5827, 0.6931472
      %v5829 = vlog2.pop %v5748
      %v5830 = vmul.f32 %v5829, 0.6931472
      %v5831 = vlog2.pop %v5751
      %v5832 = vmul.f32 %v5831, 0.6931472
      %v5833 = vlog2.pop %v5754
      %v5834 = vmul.f32 %v5833, 0.6931472
      %v5835 = vlog2.pop %v5757
      %v5836 = vmul.f32 %v5835, 0.6931472
      %v5837 = vlog2.pop %v5760
      %v5838 = vmul.f32 %v5837, 0.6931472
      %v5839 = vlog2.pop %v5763
      %v5840 = vmul.f32 %v5839, 0.6931472
      %v5841 = vlog2.pop %v5766
      %v5842 = vmul.f32 %v5841, 0.6931472
      %v5843 = vlog2.pop %v5769
      %v5844 = vmul.f32 %v5843, 0.6931472
      %v5845 = vlog2.pop %v5772
      %v5846 = vmul.f32 %v5845, 0.6931472
      %v5847 = vlog2.pop %v5775
      %v5848 = vmul.f32 %v5847, 0.6931472
      %v5849 = vlog2.pop %v5778
      %v5850 = vmul.f32 %v5849, 0.6931472
      %v5851 = vlog2.pop %v5781
      %v5852 = vmul.f32 %v5851, 0.6931472
      %v5853 = vlog2.pop %v5784
      %v5854 = vmul.f32 %v5853, 0.6931472
      %v5855 = vlog2.pop %v5787
      %v5856 = vmul.f32 %v5855, 0.6931472
      %v5857 = vlog2.pop %v5790
      %v5858 = vmul.f32 %v5857, 0.6931472
      %v5859 = vlog2.pop %v5793
      %v5860 = vmul.f32 %v5859, 0.6931472
      %v5861 = vlog2.pop %v5796
      %v5862 = vmul.f32 %v5861, 0.6931472
      %v5863 = vlog2.pop %v5799
      %v5864 = vmul.f32 %v5863, 0.6931472
      %v5865 = vlog2.pop %v5802
      %v5866 = vmul.f32 %v5865, 0.6931472
      %v5867 = vadd.f32 %v5517, %v5804
      %v5868 = vadd.f32 %v5520, %v5806
      %v5869 = vadd.f32 %v5523, %v5808
      %v5870 = vadd.f32 %v5526, %v5810
      %v5871 = vadd.f32 %v5529, %v5812
      %v5872 = vadd.f32 %v5532, %v5814
      %v5873 = vadd.f32 %v5535, %v5816
      %v5874 = vadd.f32 %v5538, %v5818
      %v5875 = vadd.f32 %v5541, %v5820
      %v5876 = vadd.f32 %v5544, %v5822
      %v5877 = vadd.f32 %v5547, %v5824
      %v5878 = vadd.f32 %v5550, %v5826
      %v5879 = vadd.f32 %v5553, %v5828
      %v5880 = vadd.f32 %v5556, %v5830
      %v5881 = vadd.f32 %v5559, %v5832
      %v5882 = vadd.f32 %v5562, %v5834
      %v5883 = vadd.f32 %v5565, %v5836
      %v5884 = vadd.f32 %v5568, %v5838
      %v5885 = vadd.f32 %v5571, %v5840
      %v5886 = vadd.f32 %v5574, %v5842
      %v5887 = vadd.f32 %v5577, %v5844
      %v5888 = vadd.f32 %v5580, %v5846
      %v5889 = vadd.f32 %v5583, %v5848
      %v5890 = vadd.f32 %v5586, %v5850
      %v5891 = vadd.f32 %v5589, %v5852
      %v5892 = vadd.f32 %v5592, %v5854
      %v5893 = vadd.f32 %v5595, %v5856
      %v5894 = vadd.f32 %v5598, %v5858
      %v5895 = vadd.f32 %v5601, %v5860
      %v5896 = vadd.f32 %v5604, %v5862
      %v5897 = vadd.f32 %v5607, %v5864
      %v5898 = vadd.f32 %v5610, %v5866
      %vm5899 = vcmp.eq.s32.totalorder %v1896, %v3996
      %vm5900 = vcmp.eq.s32.totalorder %v1896, %v3997
      %vm5901 = vcmp.eq.s32.totalorder %v1896, %v3998
      %vm5902 = vcmp.eq.s32.totalorder %v1896, %v3999
      %vm5903 = vcmp.eq.s32.totalorder %v1896, %v4000
      %vm5904 = vcmp.eq.s32.totalorder %v1896, %v4001
      %vm5905 = vcmp.eq.s32.totalorder %v1896, %v4002
      %vm5906 = vcmp.eq.s32.totalorder %v1896, %v4003
      %vm5907 = vcmp.eq.s32.totalorder %v1896, %v4004
      %vm5908 = vcmp.eq.s32.totalorder %v1896, %v4005
      %vm5909 = vcmp.eq.s32.totalorder %v1896, %v4006
      %vm5910 = vcmp.eq.s32.totalorder %v1896, %v4007
      %vm5911 = vcmp.eq.s32.totalorder %v1896, %v4008
      %vm5912 = vcmp.eq.s32.totalorder %v1896, %v4009
      %vm5913 = vcmp.eq.s32.totalorder %v1896, %v4010
      %vm5914 = vcmp.eq.s32.totalorder %v1896, %v4011
      %vm5915 = vcmp.eq.s32.totalorder %v1896, %v4012
      %vm5916 = vcmp.eq.s32.totalorder %v1896, %v4013
      %vm5917 = vcmp.eq.s32.totalorder %v1896, %v4014
      %vm5918 = vcmp.eq.s32.totalorder %v1896, %v4015
      %vm5919 = vcmp.eq.s32.totalorder %v1896, %v4016
      %vm5920 = vcmp.eq.s32.totalorder %v1896, %v4017
      %vm5921 = vcmp.eq.s32.totalorder %v1896, %v4018
      %vm5922 = vcmp.eq.s32.totalorder %v1896, %v4019
      %vm5923 = vcmp.eq.s32.totalorder %v1896, %v4020
      %vm5924 = vcmp.eq.s32.totalorder %v1896, %v4021
      %vm5925 = vcmp.eq.s32.totalorder %v1896, %v4022
      %vm5926 = vcmp.eq.s32.totalorder %v1896, %v4023
      %vm5927 = vcmp.eq.s32.totalorder %v1896, %v4024
      %vm5928 = vcmp.eq.s32.totalorder %v1896, %v4025
      %vm5929 = vcmp.eq.s32.totalorder %v1896, %v4026
      %vm5930 = vcmp.eq.s32.totalorder %v1896, %v4027
      %v5931 = vsel %vm5899, %v5483, 0.0
      %v5932 = vsel %vm5900, %v5484, 0.0
      %v5933 = vsel %vm5901, %v5485, 0.0
      %v5934 = vsel %vm5902, %v5486, 0.0
      %v5935 = vsel %vm5903, %v5487, 0.0
      %v5936 = vsel %vm5904, %v5488, 0.0
      %v5937 = vsel %vm5905, %v5489, 0.0
      %v5938 = vsel %vm5906, %v5490, 0.0
      %v5939 = vsel %vm5907, %v5491, 0.0
      %v5940 = vsel %vm5908, %v5492, 0.0
      %v5941 = vsel %vm5909, %v5493, 0.0
      %v5942 = vsel %vm5910, %v5494, 0.0
      %v5943 = vsel %vm5911, %v5495, 0.0
      %v5944 = vsel %vm5912, %v5496, 0.0
      %v5945 = vsel %vm5913, %v5497, 0.0
      %v5946 = vsel %vm5914, %v5498, 0.0
      %v5947 = vsel %vm5915, %v5499, 0.0
      %v5948 = vsel %vm5916, %v5500, 0.0
      %v5949 = vsel %vm5917, %v5501, 0.0
      %v5950 = vsel %vm5918, %v5502, 0.0
      %v5951 = vsel %vm5919, %v5503, 0.0
      %v5952 = vsel %vm5920, %v5504, 0.0
      %v5953 = vsel %vm5921, %v5505, 0.0
      %v5954 = vsel %vm5922, %v5506, 0.0
      %v5955 = vsel %vm5923, %v5507, 0.0
      %v5956 = vsel %vm5924, %v5508, 0.0
      %v5957 = vsel %vm5925, %v5509, 0.0
      %v5958 = vsel %vm5926, %v5510, 0.0
      %v5959 = vsel %vm5927, %v5511, 0.0
      %v5960 = vsel %vm5928, %v5512, 0.0
      %v5961 = vsel %vm5929, %v5513, 0.0
      %v5962 = vsel %vm5930, %v5514, 0.0
      %v5963 = vsel %vm1930, %v5931, 0.0
      %5964 = vadd.xlane.f32.xlu0 %v5963
      %v5965 = vpop.xlane.xlu0 %5964
      %v5966 = vsel %vm1930, %v5932, 0.0
      %5967 = vadd.xlane.f32.xlu0 %v5966
      %v5968 = vpop.xlane.xlu0 %5967
      %v5969 = vsel %vm1930, %v5933, 0.0
      %5970 = vadd.xlane.f32.xlu0 %v5969
      %v5971 = vpop.xlane.xlu0 %5970
      %v5972 = vsel %vm1930, %v5934, 0.0
      %5973 = vadd.xlane.f32.xlu0 %v5972
      %v5974 = vpop.xlane.xlu0 %5973
      %v5975 = vsel %vm1930, %v5935, 0.0
      %5976 = vadd.xlane.f32.xlu0 %v5975
      %v5977 = vpop.xlane.xlu0 %5976
      %v5978 = vsel %vm1930, %v5936, 0.0
      %5979 = vadd.xlane.f32.xlu0 %v5978
      %v5980 = vpop.xlane.xlu0 %5979
      %v5981 = vsel %vm1930, %v5937, 0.0
      %5982 = vadd.xlane.f32.xlu0 %v5981
      %v5983 = vpop.xlane.xlu0 %5982
      %v5984 = vsel %vm1930, %v5938, 0.0
      %5985 = vadd.xlane.f32.xlu0 %v5984
      %v5986 = vpop.xlane.xlu0 %5985
      %v5987 = vsel %vm1930, %v5939, 0.0
      %5988 = vadd.xlane.f32.xlu0 %v5987
      %v5989 = vpop.xlane.xlu0 %5988
      %v5990 = vsel %vm1930, %v5940, 0.0
      %5991 = vadd.xlane.f32.xlu0 %v5990
      %v5992 = vpop.xlane.xlu0 %5991
      %v5993 = vsel %vm1930, %v5941, 0.0
      %5994 = vadd.xlane.f32.xlu0 %v5993
      %v5995 = vpop.xlane.xlu0 %5994
      %v5996 = vsel %vm1930, %v5942, 0.0
      %5997 = vadd.xlane.f32.xlu0 %v5996
      %v5998 = vpop.xlane.xlu0 %5997
      %v5999 = vsel %vm1930, %v5943, 0.0
      %6000 = vadd.xlane.f32.xlu0 %v5999
      %v6001 = vpop.xlane.xlu0 %6000
      %v6002 = vsel %vm1930, %v5944, 0.0
      %6003 = vadd.xlane.f32.xlu0 %v6002
      %v6004 = vpop.xlane.xlu0 %6003
      %v6005 = vsel %vm1930, %v5945, 0.0
      %6006 = vadd.xlane.f32.xlu0 %v6005
      %v6007 = vpop.xlane.xlu0 %6006
      %v6008 = vsel %vm1930, %v5946, 0.0
      %6009 = vadd.xlane.f32.xlu0 %v6008
      %v6010 = vpop.xlane.xlu0 %6009
      %v6011 = vsel %vm1930, %v5947, 0.0
      %6012 = vadd.xlane.f32.xlu0 %v6011
      %v6013 = vpop.xlane.xlu0 %6012
      %v6014 = vsel %vm1930, %v5948, 0.0
      %6015 = vadd.xlane.f32.xlu0 %v6014
      %v6016 = vpop.xlane.xlu0 %6015
      %v6017 = vsel %vm1930, %v5949, 0.0
      %6018 = vadd.xlane.f32.xlu0 %v6017
      %v6019 = vpop.xlane.xlu0 %6018
      %v6020 = vsel %vm1930, %v5950, 0.0
      %6021 = vadd.xlane.f32.xlu0 %v6020
      %v6022 = vpop.xlane.xlu0 %6021
      %v6023 = vsel %vm1930, %v5951, 0.0
      %6024 = vadd.xlane.f32.xlu0 %v6023
      %v6025 = vpop.xlane.xlu0 %6024
      %v6026 = vsel %vm1930, %v5952, 0.0
      %6027 = vadd.xlane.f32.xlu0 %v6026
      %v6028 = vpop.xlane.xlu0 %6027
      %v6029 = vsel %vm1930, %v5953, 0.0
      %6030 = vadd.xlane.f32.xlu0 %v6029
      %v6031 = vpop.xlane.xlu0 %6030
      %v6032 = vsel %vm1930, %v5954, 0.0
      %6033 = vadd.xlane.f32.xlu0 %v6032
      %v6034 = vpop.xlane.xlu0 %6033
      %v6035 = vsel %vm1930, %v5955, 0.0
      %6036 = vadd.xlane.f32.xlu0 %v6035
      %v6037 = vpop.xlane.xlu0 %6036
      %v6038 = vsel %vm1930, %v5956, 0.0
      %6039 = vadd.xlane.f32.xlu0 %v6038
      %v6040 = vpop.xlane.xlu0 %6039
      %v6041 = vsel %vm1930, %v5957, 0.0
      %6042 = vadd.xlane.f32.xlu0 %v6041
      %v6043 = vpop.xlane.xlu0 %6042
      %v6044 = vsel %vm1930, %v5958, 0.0
      %6045 = vadd.xlane.f32.xlu0 %v6044
      %v6046 = vpop.xlane.xlu0 %6045
      %v6047 = vsel %vm1930, %v5959, 0.0
      %6048 = vadd.xlane.f32.xlu0 %v6047
      %v6049 = vpop.xlane.xlu0 %6048
      %v6050 = vsel %vm1930, %v5960, 0.0
      %6051 = vadd.xlane.f32.xlu0 %v6050
      %v6052 = vpop.xlane.xlu0 %6051
      %v6053 = vsel %vm1930, %v5961, 0.0
      %6054 = vadd.xlane.f32.xlu0 %v6053
      %v6055 = vpop.xlane.xlu0 %6054
      %v6056 = vsel %vm1930, %v5962, 0.0
      %6057 = vadd.xlane.f32.xlu0 %v6056
      %v6058 = vpop.xlane.xlu0 %6057
      %v6059 = vsub.f32 %v5867, %v5965
      %v6060 = vsub.f32 %v5868, %v5968
      %v6061 = vsub.f32 %v5869, %v5971
      %v6062 = vsub.f32 %v5870, %v5974
      %v6063 = vsub.f32 %v5871, %v5977
      %v6064 = vsub.f32 %v5872, %v5980
      %v6065 = vsub.f32 %v5873, %v5983
      %v6066 = vsub.f32 %v5874, %v5986
      %v6067 = vsub.f32 %v5875, %v5989
      %v6068 = vsub.f32 %v5876, %v5992
      %v6069 = vsub.f32 %v5877, %v5995
      %v6070 = vsub.f32 %v5878, %v5998
      %v6071 = vsub.f32 %v5879, %v6001
      %v6072 = vsub.f32 %v5880, %v6004
      %v6073 = vsub.f32 %v5881, %v6007
      %v6074 = vsub.f32 %v5882, %v6010
      %v6075 = vsub.f32 %v5883, %v6013
      %v6076 = vsub.f32 %v5884, %v6016
      %v6077 = vsub.f32 %v5885, %v6019
      %v6078 = vsub.f32 %v5886, %v6022
      %v6079 = vsub.f32 %v5887, %v6025
      %v6080 = vsub.f32 %v5888, %v6028
      %v6081 = vsub.f32 %v5889, %v6031
      %v6082 = vsub.f32 %v5890, %v6034
      %v6083 = vsub.f32 %v5891, %v6037
      %v6084 = vsub.f32 %v5892, %v6040
      %v6085 = vsub.f32 %v5893, %v6043
      %v6086 = vsub.f32 %v5894, %v6046
      %v6087 = vsub.f32 %v5895, %v6049
      %v6088 = vsub.f32 %v5896, %v6052
      %v6089 = vsub.f32 %v5897, %v6055
      %v6090 = vsub.f32 %v5898, %v6058
      %6091 = vst.msk [vmem:[%s420] sm:$0xff] %vm4028, %v6059
      %6092 = vst.msk [vmem:[%s420 + $0x8] sm:$0xff] %vm4028, %v6060
      %6093 = vst.msk [vmem:[%s420 + $0x10] sm:$0xff] %vm4028, %v6061
      %6094 = vst.msk [vmem:[%s420 + $0x18] sm:$0xff] %vm4028, %v6062
      %6095 = vst.msk [vmem:[%s420 + $0x20] sm:$0xff] %vm4028, %v6063
      %6096 = vst.msk [vmem:[%s420 + $0x28] sm:$0xff] %vm4028, %v6064
      %6097 = vst.msk [vmem:[%s420 + $0x30] sm:$0xff] %vm4028, %v6065
      %6098 = vst.msk [vmem:[%s420 + $0x38] sm:$0xff] %vm4028, %v6066
      %6099 = vst.msk [vmem:[%s420 + $0x40] sm:$0xff] %vm4028, %v6067
      %6100 = vst.msk [vmem:[%s420 + $0x48] sm:$0xff] %vm4028, %v6068
      %6101 = vst.msk [vmem:[%s420 + $0x50] sm:$0xff] %vm4028, %v6069
      %6102 = vst.msk [vmem:[%s420 + $0x58] sm:$0xff] %vm4028, %v6070
      %6103 = vst.msk [vmem:[%s420 + $0x60] sm:$0xff] %vm4028, %v6071
      %6104 = vst.msk [vmem:[%s420 + $0x68] sm:$0xff] %vm4028, %v6072
      %6105 = vst.msk [vmem:[%s420 + $0x70] sm:$0xff] %vm4028, %v6073
      %6106 = vst.msk [vmem:[%s420 + $0x78] sm:$0xff] %vm4028, %v6074
      %6107 = vst.msk [vmem:[%s420 + $0x80] sm:$0xff] %vm4028, %v6075
      %6108 = vst.msk [vmem:[%s420 + $0x88] sm:$0xff] %vm4028, %v6076
      %6109 = vst.msk [vmem:[%s420 + $0x90] sm:$0xff] %vm4028, %v6077
      %6110 = vst.msk [vmem:[%s420 + $0x98] sm:$0xff] %vm4028, %v6078
      %6111 = vst.msk [vmem:[%s420 + $0xa0] sm:$0xff] %vm4028, %v6079
      %6112 = vst.msk [vmem:[%s420 + $0xa8] sm:$0xff] %vm4028, %v6080
      %6113 = vst.msk [vmem:[%s420 + $0xb0] sm:$0xff] %vm4028, %v6081
      %6114 = vst.msk [vmem:[%s420 + $0xb8] sm:$0xff] %vm4028, %v6082
      %6115 = vst.msk [vmem:[%s420 + $0xc0] sm:$0xff] %vm4028, %v6083
      %6116 = vst.msk [vmem:[%s420 + $0xc8] sm:$0xff] %vm4028, %v6084
      %6117 = vst.msk [vmem:[%s420 + $0xd0] sm:$0xff] %vm4028, %v6085
      %6118 = vst.msk [vmem:[%s420 + $0xd8] sm:$0xff] %vm4028, %v6086
      %6119 = vst.msk [vmem:[%s420 + $0xe0] sm:$0xff] %vm4028, %v6087
      %6120 = vst.msk [vmem:[%s420 + $0xe8] sm:$0xff] %vm4028, %v6088
      %6121 = vst.msk [vmem:[%s420 + $0xf0] sm:$0xff] %vm4028, %v6089
      %6122 = vst.msk [vmem:[%s420 + $0xf8] sm:$0xff] %vm4028, %v6090
      %p6123 = scmp.lt.s32.totalorder %s21, 1
      %s6124 = scalar_select %p6123, %s21, 1
      %s6125 = smul.addr %s6124, 32
      %s6126 = smul.addr %s6125, 8
      %s6127 = scalar_lea.vmem %s7, %s6126
      %p6128 = scmp.lt.s32.totalorder %s21, 1
      %s6129 = scalar_select %p6128, %s21, 1
      %s6130 = smul.addr %s6129, 32
      %s6131 = smul.addr %s6130, 8
      %s6132 = scalar_lea.vmem %s8, %s6131
      %p6133 = scmp.lt.s32.totalorder %s21, 1
      %s6134 = scalar_select %p6133, %s21, 1
      %s6135 = smul.addr %s6134, 32
      %s6136 = smul.addr %s6135, 8
      %s6137 = scalar_lea.vmem %s9, %s6136
      // Predicated region
      $region49: #{multibox_loss.1} parent=47 // pred_check
        %p6138 = pneg %p211
      $region50: #{multibox_loss.1} parent=47 // pred_check_branch
        %6140 = sbr.rel (%p6138) target = $region52
      $region51: #{multibox_loss.1} parent=47 // pred_region
        _
      $region52: #{multibox_loss.1} parent=47 // pred_fallthru
        _
      // Predicated region
      $region53: #{multibox_loss.1} parent=47 // pred_check
        %p6141 = pneg %p237
      $region54: #{multibox_loss.1} parent=47 // pred_check_branch
        %6143 = sbr.rel (%p6141) target = $region56
      $region55: #{multibox_loss.1} parent=47 // pred_region
        _
      $region56: #{multibox_loss.1} parent=47 // pred_fallthru
        _
      // Predicated region
      $region57: #{multibox_loss.1} parent=47 // pred_check
        %p6144 = pneg %p263
      $region58: #{multibox_loss.1} parent=47 // pred_check_branch
        %6146 = sbr.rel (%p6144) target = $region60
      $region59: #{multibox_loss.1} parent=47 // pred_region
        _
      $region60: #{multibox_loss.1} parent=47 // pred_fallthru
        _
    $region48: #{multibox_loss.1} parent=5 // pred_fallthru
      _
    %p6147 = scmp.le.s32.totalorder 2, %s16
    // Predicated region
    $region61: #{multibox_loss.1} parent=5 // pred_check
      %p6148 = pneg %p6147
    $region62: #{multibox_loss.1} parent=5 // pred_check_branch
      %6150 = sbr.rel (%p6148) target = $region64
    $region63: #{multibox_loss.1} parent=5 // pred_region
      %s6151 = ssub.s32 %s16, 2
      // Predicated region
      $region65: #{multibox_loss.1} parent=63 // pred_check
        %p6152 = pneg %p217
      $region66: #{multibox_loss.1} parent=63 // pred_check_branch
        %6154 = sbr.rel (%p6152) target = $region68
      $region67: #{multibox_loss.1} parent=63 // pred_region
        %p6155 = scmp.lt.s32.totalorder %s22, 1
        %s6156 = scalar_select %p6155, %s22, 1
        %s6157 = smul.addr %s6156, 32
        %s6158 = smul.addr %s6157, 8
        %s6159 = scalar_lea.vmem %s7, %s6158
      $region68: #{multibox_loss.1} parent=63 // pred_fallthru
        _
      // Predicated region
      $region69: #{multibox_loss.1} parent=63 // pred_check
        %p6160 = pneg %p243
      $region70: #{multibox_loss.1} parent=63 // pred_check_branch
        %6162 = sbr.rel (%p6160) target = $region72
      $region71: #{multibox_loss.1} parent=63 // pred_region
        %p6163 = scmp.lt.s32.totalorder %s22, 1
        %s6164 = scalar_select %p6163, %s22, 1
        %s6165 = smul.addr %s6164, 32
        %s6166 = smul.addr %s6165, 8
        %s6167 = scalar_lea.vmem %s8, %s6166
      $region72: #{multibox_loss.1} parent=63 // pred_fallthru
        _
      // Predicated region
      $region73: #{multibox_loss.1} parent=63 // pred_check
        %p6168 = pneg %p269
      $region74: #{multibox_loss.1} parent=63 // pred_check_branch
        %6170 = sbr.rel (%p6168) target = $region76
      $region75: #{multibox_loss.1} parent=63 // pred_region
        %p6171 = scmp.lt.s32.totalorder %s22, 1
        %s6172 = scalar_select %p6171, %s22, 1
        %s6173 = smul.addr %s6172, 32
        %s6174 = smul.addr %s6173, 8
        %s6175 = scalar_lea.vmem %s9, %s6174
      $region76: #{multibox_loss.1} parent=63 // pred_fallthru
        _
    $region64: #{multibox_loss.1} parent=5 // pred_fallthru
      _
  $region6: #{multibox_loss.1} parent=0 // loop_footer
    %s20 = sadd.s32 1, %s16
  $region7: #{multibox_loss.1} parent=0 // loop_footer_branch
    %15 = sbr.rel target = $region3
  $region8: #{multibox_loss.1} parent=0 // loop_exit
    _

</llo_original>
